<compile_context>
chip_gen: v6e
topology: v6e:2x2x1
jax: 0.10.0
libtpu: 0.0.40
codegen_flags: <defaults>
</compile_context>

<pallas_src>
import functools

import jax
import jax.numpy as jnp
import numpy as np
from jax.experimental import pallas as pl
from jax.experimental.pallas import tpu as pltpu


# -----------------------------------------------------------------------------
# Fused Pallas kernel: whole residual block for one image per grid step.
# -----------------------------------------------------------------------------
def _residual_block_kernel(x_ref, w1_ref, b1_ref, w2_ref, b2_ref,
                           w3_ref, wid_ref, bout_ref, o_ref, x1p_ref,
                           *, H, W):
    HW = H * W
    c1 = w1_ref.shape[1]
    c3 = w2_ref.shape[2]

    x = x_ref[...]                                            # (HW, Cin) bf16

    # ---- conv1 (1x1) + folded BN + ReLU, entirely in VMEM -------------------
    y1 = jnp.dot(x, w1_ref[...], preferred_element_type=jnp.float32)
    y1 = jnp.maximum(y1 + b1_ref[...], 0.0)                   # (HW, c1) f32

    # ---- conv2 (3x3, stride 1, pad 1) as 9 shifted MXU dots ------------------
    # Stage x1 into a zero-padded (1-pixel halo) spatial scratch.  The interior
    # starts at column 8 so the store stays sublane-aligned; the halo columns
    # (7 and 8+W) and halo rows (0 and H+1) stay zero.
    x1p_ref[...] = jnp.zeros_like(x1p_ref)
    x1p_ref[1:H + 1, 8:8 + W, :] = y1.reshape(H, W, c1)

    acc = jnp.zeros((HW, c3), jnp.float32)
    for kh in range(3):                       # static 3x3 loop, unrolled dots
        for kw in range(3):
            win = x1p_ref[kh:kh + H, 7 + kw:7 + kw + W, :]    # (H, W, c1) f32
            win = win.reshape(HW, c1).astype(jnp.bfloat16)
            acc = acc + jnp.dot(win, w2_ref[3 * kh + kw],
                                preferred_element_type=jnp.float32)
    y2 = jnp.maximum(acc + b2_ref[...], 0.0).astype(jnp.bfloat16)   # (HW, c3)

    # ---- conv3 (1x1) + identity 1x1 conv + merged BN shifts + add + ReLU -----
    main = jnp.dot(y2, w3_ref[...], preferred_element_type=jnp.float32)
    res = jnp.dot(x, wid_ref[...], preferred_element_type=jnp.float32)
    o_ref[...] = jnp.maximum(main + res + bout_ref[...], 0.0).astype(o_ref.dtype)


# -----------------------------------------------------------------------------
# Host-side operand preparation (BN fold into weights, bf16 cast, lane padding)
# -----------------------------------------------------------------------------
def _round_up(x, m):
    return ((x + m - 1) // m) * m


def _prep_kernel_operands(params):
    s1, sh1 = params["bn1"]
    s2, sh2 = params["bn2"]
    s3, sh3 = params["bn3"]
    sid, shid = params["bnid"]

    # 1x1 conv a: (c1, Cin, 1, 1) -> (Cin, c1), BN scale folded into columns.
    w1 = (params["w1"][:, :, 0, 0].T * s1[None, :]).astype(jnp.bfloat16)
    b1 = sh1.reshape(1, -1).astype(jnp.float32)

    # 3x3 conv: (c3, c1, 3, 3) -> (kh, kw, c1, c3) -> (9, c1, c3).
    w2 = jnp.transpose(params["w2"], (2, 3, 1, 0)) * s2[None, None, None, :]
    c1, c3 = w2.shape[2], w2.shape[3]
    w2 = w2.reshape(9, c1, c3).astype(jnp.bfloat16)
    b2 = sh2.reshape(1, -1).astype(jnp.float32)

    # Final 1x1 convs; pad output channels to a lane-dense multiple of 128 and
    # merge the two BN shifts into a single bias vector.
    w3 = params["w3"][:, :, 0, 0].T * s3[None, :]
    wid = params["wid"][:, :, 0, 0].T * sid[None, :]
    bout = (sh3 + shid).reshape(1, -1)

    cout = w3.shape[1]
    cout_pad = _round_up(cout, 128)
    pad = cout_pad - cout
    if pad:
        w3 = jnp.pad(w3, ((0, 0), (0, pad)))
        wid = jnp.pad(wid, ((0, 0), (0, pad)))
        bout = jnp.pad(bout, ((0, 0), (0, pad)))

    return (w1, b1, w2, b2, w3.astype(jnp.bfloat16), wid.astype(jnp.bfloat16),
            bout.astype(jnp.float32), cout, cout_pad)


# -----------------------------------------------------------------------------
# Forward wrapper (layout glue in XLA, everything else in the Pallas kernel)
# -----------------------------------------------------------------------------
def residual_block_forward(x_nchw, params):
    N, Cin, H, W = x_nchw.shape
    HW = H * W
    (w1, b1, w2, b2, w3, wid, bout, cout, cout_pad) = _prep_kernel_operands(params)
    c1 = w1.shape[1]
    c3 = w2.shape[2]

    # NCHW -> (N, H*W, Cin), stored bf16 in HBM (halves the activation stream).
    x_act = jnp.transpose(x_nchw, (0, 2, 3, 1)).reshape(N, HW, Cin)
    x_act = x_act.astype(jnp.bfloat16)

    out = pl.pallas_call(
        functools.partial(_residual_block_kernel, H=H, W=W),
        out_shape=jax.ShapeDtypeStruct((N, HW, cout_pad), jnp.float32),
        grid_spec=pltpu.PrefetchScalarGridSpec(
            num_scalar_prefetch=0,
            grid=(N,),
            in_specs=[
                pl.BlockSpec((None, HW, Cin), lambda i: (i, 0, 0)),   # x
                pl.BlockSpec((Cin, c1), lambda i: (0, 0)),            # w1 * s1
                pl.BlockSpec((1, c1), lambda i: (0, 0)),              # shift1
                pl.BlockSpec((9, c1, c3), lambda i: (0, 0, 0)),       # w2 * s2
                pl.BlockSpec((1, c3), lambda i: (0, 0)),              # shift2
                pl.BlockSpec((c3, cout_pad), lambda i: (0, 0)),       # w3 * s3
                pl.BlockSpec((Cin, cout_pad), lambda i: (0, 0)),      # wid * sid
                pl.BlockSpec((1, cout_pad), lambda i: (0, 0)),        # shift3+id
            ],
            out_specs=pl.BlockSpec((None, HW, cout_pad), lambda i: (i, 0, 0)),
            scratch_shapes=[pltpu.VMEM((H + 2, W + 9, c1), jnp.float32)],
        ),
        compiler_params=pltpu.CompilerParams(
            dimension_semantics=("parallel",),
            vmem_limit_bytes=48 * 1024 * 1024),
    )(x_act, w1, b1, w2, b2, w3, wid, bout)

    out = out[:, :, :cout].reshape(N, H, W, cout)
    return jnp.transpose(out, (0, 3, 1, 2))                   # NHWC -> NCHW


# -----------------------------------------------------------------------------
# Parameter construction (deterministic, matches the module's __init__)
# -----------------------------------------------------------------------------
def _he_conv_weight(key, out_ch, in_ch, k):
    # nn.init.normal_(w, mean=0, std=sqrt(2 / (k^2 * out_channels)))
    std = np.sqrt(2.0 / (k * k * out_ch))
    w = jax.random.normal(key, (out_ch, in_ch, k, k), dtype=jnp.float32) * std
    b = jnp.zeros((out_ch,), dtype=jnp.float32)
    return w, b


def _fold_bn(bias, out_ch, eps=1e-5):
    # eval-mode BN with default params: gamma=1, beta=0, mean=0, var=1.
    gamma = jnp.ones((out_ch,), jnp.float32)
    beta = jnp.zeros((out_ch,), jnp.float32)
    mean = jnp.zeros((out_ch,), jnp.float32)
    var = jnp.ones((out_ch,), jnp.float32)
    scale = gamma / jnp.sqrt(var + eps)
    shift = beta + scale * (bias - mean)
    return scale, shift


def make_residual_block_params(key, in_ch, c1, c3, cout):
    k0, k1, k2, k3 = jax.random.split(key, 4)
    w1, b1 = _he_conv_weight(k0, c1, in_ch, 1)
    w2, b2 = _he_conv_weight(k1, c3, c1, 3)
    w3, b3 = _he_conv_weight(k2, cout, c3, 1)
    wid, bid = _he_conv_weight(k3, cout, in_ch, 1)
    return {
        "w1": w1, "bn1": _fold_bn(b1, c1),
        "w2": w2, "bn2": _fold_bn(b2, c3),
        "w3": w3, "bn3": _fold_bn(b3, cout),
        "wid": wid, "bnid": _fold_bn(bid, cout),
    }


# -----------------------------------------------------------------------------
# Pure-JAX reference (lax.conv in f32) with the same bf16 quantization points
# as the kernel, so the comparison is tight and robust.
# -----------------------------------------------------------------------------
def residual_block_reference(x_nchw, params):
    f32 = jnp.float32

    def q(a):  # bf16 round trip (matches the kernel's cast points)
        return a.astype(jnp.bfloat16).astype(f32)

    def conv(x, w):  # NCHW, OIHW
        return jax.lax.conv_general_dilated(
            x, w, window_strides=(1, 1),
            padding=[(w.shape[2] // 2,) * 2, (w.shape[3] // 2,) * 2],
            dimension_numbers=("NCHW", "OIHW", "NCHW"))

    def fold(w, bn):
        s, sh = bn
        return q(w * s[:, None, None, None]), sh

    x = q(x_nchw.astype(f32))
    w1, sh1 = fold(params["w1"], params["bn1"])
    w2, sh2 = fold(params["w2"], params["bn2"])
    w3, sh3 = fold(params["w3"], params["bn3"])
    wid, shid = fold(params["wid"], params["bnid"])

    x1 = q(jax.nn.relu(conv(x, w1) + sh1[None, :, None, None]))
    x2 = q(jax.nn.relu(conv(x1, w2) + sh2[None, :, None, None]))
    x3 = conv(x2, w3) + sh3[None, :, None, None]
    res = conv(x, wid) + shid[None, :, None, None]
    return jax.nn.relu(x3 + res)


# -----------------------------------------------------------------------------
if __name__ == "__main__":
    key = jax.random.PRNGKey(0)
    k_x, k_p = jax.random.split(key)

    N, Cin, H, W = 2, 4, 16, 16
    c1, c3, cout = 8, 8, 16

    x = jax.random.normal(k_x, (N, Cin, H, W), dtype=jnp.float32)
    params = make_residual_block_params(k_p, Cin, c1, c3, cout)

    out = jax.block_until_ready(residual_block_forward(x, params))
    ref = jax.block_until_ready(residual_block_reference(x, params))

    np.testing.assert_allclose(np.asarray(out), np.asarray(ref),
                               rtol=1e-2, atol=1e-2)
    print("KERNEL_OK")
</pallas_src>

<mosaic_0001>
module attributes {stable_mosaic.version = 11 : i64} {
  func.func @_residual_block_kernel(%arg0: i32, %arg1: memref<1x256x4xbf16, #tpu.memory_space<vmem>>, %arg2: memref<4x8xbf16, #tpu.memory_space<vmem>>, %arg3: memref<1x8xf32, #tpu.memory_space<vmem>>, %arg4: memref<9x8x8xbf16, #tpu.memory_space<vmem>>, %arg5: memref<1x8xf32, #tpu.memory_space<vmem>>, %arg6: memref<8x128xbf16, #tpu.memory_space<vmem>>, %arg7: memref<4x128xbf16, #tpu.memory_space<vmem>>, %arg8: memref<1x128xf32, #tpu.memory_space<vmem>>, %arg9: memref<1x256x128xf32, #tpu.memory_space<vmem>>, %arg10: memref<18x25x8xf32, #tpu.memory_space<vmem>>) attributes {dimension_semantics = [#tpu.dimension_semantics<parallel>], iteration_bounds = array<i64: 2>, scalar_prefetch = 0 : i64, scratch_operands = 1 : i64, tpu.core_type = #tpu.core_type<tc>, window_params = [{transform_indices = @transform_0, window_bounds = array<i64: 1, 256, 4>}, {pipeline_mode = #tpu.pipeline_mode<synchronous>, transform_indices = @transform_1, window_bounds = array<i64: 4, 8>}, {pipeline_mode = #tpu.pipeline_mode<synchronous>, transform_indices = @transform_2, window_bounds = array<i64: 1, 8>}, {pipeline_mode = #tpu.pipeline_mode<synchronous>, transform_indices = @transform_3, window_bounds = array<i64: 9, 8, 8>}, {pipeline_mode = #tpu.pipeline_mode<synchronous>, transform_indices = @transform_4, window_bounds = array<i64: 1, 8>}, {pipeline_mode = #tpu.pipeline_mode<synchronous>, transform_indices = @transform_5, window_bounds = array<i64: 8, 128>}, {pipeline_mode = #tpu.pipeline_mode<synchronous>, transform_indices = @transform_6, window_bounds = array<i64: 4, 128>}, {pipeline_mode = #tpu.pipeline_mode<synchronous>, transform_indices = @transform_7, window_bounds = array<i64: 1, 128>}, {transform_indices = @transform_8, window_bounds = array<i64: 1, 256, 128>}]} {
    %c0 = arith.constant 0 : index
    %c0_0 = arith.constant 0 : index
    %c0_1 = arith.constant 0 : index
    %0 = vector.load %arg1[%c0, %c0_0, %c0_1] : memref<1x256x4xbf16, #tpu.memory_space<vmem>>, vector<1x256x4xbf16>
    %1 = vector.shape_cast %0 : vector<1x256x4xbf16> to vector<256x4xbf16>
    %c0_2 = arith.constant 0 : index
    %c0_3 = arith.constant 0 : index
    %2 = vector.load %arg2[%c0_2, %c0_3] : memref<4x8xbf16, #tpu.memory_space<vmem>>, vector<4x8xbf16>
    %cst = arith.constant dense<0.000000e+00> : vector<256x8xf32>
    %3 = tpu.matmul %1, %2, %cst {dimension_numbers = #tpu.dot_dimension_numbers<[1], [0], [0], [1], [0, 0, 1, 1], [], []>} : vector<256x4xbf16>, vector<4x8xbf16>, vector<256x8xf32> -> vector<256x8xf32>
    %c0_4 = arith.constant 0 : index
    %c0_5 = arith.constant 0 : index
    %4 = vector.load %arg3[%c0_4, %c0_5] : memref<1x8xf32, #tpu.memory_space<vmem>>, vector<1x8xf32>
    %5 = vector.broadcast %4 : vector<1x8xf32> to vector<256x8xf32>
    %6 = arith.addf %3, %5 : vector<256x8xf32>
    %cst_6 = arith.constant 0.000000e+00 : f32
    %7 = vector.broadcast %cst_6 : f32 to vector<256x8xf32>
    %8 = arith.maximumf %6, %7 : vector<256x8xf32>
    %cst_7 = arith.constant 0.000000e+00 : f32
    %9 = vector.broadcast %cst_7 : f32 to vector<18x25x8xf32>
    %c0_8 = arith.constant 0 : index
    %c0_9 = arith.constant 0 : index
    %c0_10 = arith.constant 0 : index
    %10 = vector.load %arg10[%c0_8, %c0_9, %c0_10] : memref<18x25x8xf32, #tpu.memory_space<vmem>>, vector<18x25x8xf32>
    tpu.vector_store %arg10[%c0_8, %c0_9, %c0_10], %9 {strides = array<i32>} : memref<18x25x8xf32, #tpu.memory_space<vmem>>, vector<18x25x8xf32>,
    %11 = vector.shape_cast %8 : vector<256x8xf32> to vector<16x16x8xf32>
    %c1 = arith.constant 1 : index
    %c8 = arith.constant 8 : index
    %c0_11 = arith.constant 0 : index
    %12 = vector.load %arg10[%c1, %c8, %c0_11] : memref<18x25x8xf32, #tpu.memory_space<vmem>>, vector<16x16x8xf32>
    tpu.vector_store %arg10[%c1, %c8, %c0_11], %11 {strides = array<i32>} : memref<18x25x8xf32, #tpu.memory_space<vmem>>, vector<16x16x8xf32>,
    %cst_12 = arith.constant 0.000000e+00 : f32
    %13 = vector.broadcast %cst_12 : f32 to vector<256x8xf32>
    %c0_13 = arith.constant 0 : index
    %c7 = arith.constant 7 : index
    %c0_14 = arith.constant 0 : index
    %14 = vector.load %arg10[%c0_13, %c7, %c0_14] : memref<18x25x8xf32, #tpu.memory_space<vmem>>, vector<16x16x8xf32>
    %15 = vector.shape_cast %14 : vector<16x16x8xf32> to vector<256x8xf32>
    %16 = arith.truncf %15 : vector<256x8xf32> to vector<256x8xbf16>
    %c0_15 = arith.constant 0 : index
    %c0_16 = arith.constant 0 : index
    %c0_17 = arith.constant 0 : index
    %17 = vector.load %arg4[%c0_15, %c0_16, %c0_17] : memref<9x8x8xbf16, #tpu.memory_space<vmem>>, vector<1x8x8xbf16>
    %18 = vector.shape_cast %17 : vector<1x8x8xbf16> to vector<8x8xbf16>
    %cst_18 = arith.constant dense<0.000000e+00> : vector<256x8xf32>
    %19 = tpu.matmul %16, %18, %cst_18 {dimension_numbers = #tpu.dot_dimension_numbers<[1], [0], [0], [1], [0, 0, 1, 1], [], []>} : vector<256x8xbf16>, vector<8x8xbf16>, vector<256x8xf32> -> vector<256x8xf32>
    %20 = arith.addf %13, %19 : vector<256x8xf32>
    %c0_19 = arith.constant 0 : index
    %c8_20 = arith.constant 8 : index
    %c0_21 = arith.constant 0 : index
    %21 = vector.load %arg10[%c0_19, %c8_20, %c0_21] : memref<18x25x8xf32, #tpu.memory_space<vmem>>, vector<16x16x8xf32>
    %22 = vector.shape_cast %21 : vector<16x16x8xf32> to vector<256x8xf32>
    %23 = arith.truncf %22 : vector<256x8xf32> to vector<256x8xbf16>
    %c1_22 = arith.constant 1 : index
    %c0_23 = arith.constant 0 : index
    %c0_24 = arith.constant 0 : index
    %24 = vector.load %arg4[%c1_22, %c0_23, %c0_24] : memref<9x8x8xbf16, #tpu.memory_space<vmem>>, vector<1x8x8xbf16>
    %25 = vector.shape_cast %24 : vector<1x8x8xbf16> to vector<8x8xbf16>
    %cst_25 = arith.constant dense<0.000000e+00> : vector<256x8xf32>
    %26 = tpu.matmul %23, %25, %cst_25 {dimension_numbers = #tpu.dot_dimension_numbers<[1], [0], [0], [1], [0, 0, 1, 1], [], []>} : vector<256x8xbf16>, vector<8x8xbf16>, vector<256x8xf32> -> vector<256x8xf32>
    %27 = arith.addf %20, %26 : vector<256x8xf32>
    %c0_26 = arith.constant 0 : index
    %c9 = arith.constant 9 : index
    %c0_27 = arith.constant 0 : index
    %28 = vector.load %arg10[%c0_26, %c9, %c0_27] : memref<18x25x8xf32, #tpu.memory_space<vmem>>, vector<16x16x8xf32>
    %29 = vector.shape_cast %28 : vector<16x16x8xf32> to vector<256x8xf32>
    %30 = arith.truncf %29 : vector<256x8xf32> to vector<256x8xbf16>
    %c2 = arith.constant 2 : index
    %c0_28 = arith.constant 0 : index
    %c0_29 = arith.constant 0 : index
    %31 = vector.load %arg4[%c2, %c0_28, %c0_29] : memref<9x8x8xbf16, #tpu.memory_space<vmem>>, vector<1x8x8xbf16>
    %32 = vector.shape_cast %31 : vector<1x8x8xbf16> to vector<8x8xbf16>
    %cst_30 = arith.constant dense<0.000000e+00> : vector<256x8xf32>
    %33 = tpu.matmul %30, %32, %cst_30 {dimension_numbers = #tpu.dot_dimension_numbers<[1], [0], [0], [1], [0, 0, 1, 1], [], []>} : vector<256x8xbf16>, vector<8x8xbf16>, vector<256x8xf32> -> vector<256x8xf32>
    %34 = arith.addf %27, %33 : vector<256x8xf32>
    %c1_31 = arith.constant 1 : index
    %c7_32 = arith.constant 7 : index
    %c0_33 = arith.constant 0 : index
    %35 = vector.load %arg10[%c1_31, %c7_32, %c0_33] : memref<18x25x8xf32, #tpu.memory_space<vmem>>, vector<16x16x8xf32>
    %36 = vector.shape_cast %35 : vector<16x16x8xf32> to vector<256x8xf32>
    %37 = arith.truncf %36 : vector<256x8xf32> to vector<256x8xbf16>
    %c3 = arith.constant 3 : index
    %c0_34 = arith.constant 0 : index
    %c0_35 = arith.constant 0 : index
    %38 = vector.load %arg4[%c3, %c0_34, %c0_35] : memref<9x8x8xbf16, #tpu.memory_space<vmem>>, vector<1x8x8xbf16>
    %39 = vector.shape_cast %38 : vector<1x8x8xbf16> to vector<8x8xbf16>
    %cst_36 = arith.constant dense<0.000000e+00> : vector<256x8xf32>
    %40 = tpu.matmul %37, %39, %cst_36 {dimension_numbers = #tpu.dot_dimension_numbers<[1], [0], [0], [1], [0, 0, 1, 1], [], []>} : vector<256x8xbf16>, vector<8x8xbf16>, vector<256x8xf32> -> vector<256x8xf32>
    %41 = arith.addf %34, %40 : vector<256x8xf32>
    %c1_37 = arith.constant 1 : index
    %c8_38 = arith.constant 8 : index
    %c0_39 = arith.constant 0 : index
    %42 = vector.load %arg10[%c1_37, %c8_38, %c0_39] : memref<18x25x8xf32, #tpu.memory_space<vmem>>, vector<16x16x8xf32>
    %43 = vector.shape_cast %42 : vector<16x16x8xf32> to vector<256x8xf32>
    %44 = arith.truncf %43 : vector<256x8xf32> to vector<256x8xbf16>
    %c4 = arith.constant 4 : index
    %c0_40 = arith.constant 0 : index
    %c0_41 = arith.constant 0 : index
    %45 = vector.load %arg4[%c4, %c0_40, %c0_41] : memref<9x8x8xbf16, #tpu.memory_space<vmem>>, vector<1x8x8xbf16>
    %46 = vector.shape_cast %45 : vector<1x8x8xbf16> to vector<8x8xbf16>
    %cst_42 = arith.constant dense<0.000000e+00> : vector<256x8xf32>
    %47 = tpu.matmul %44, %46, %cst_42 {dimension_numbers = #tpu.dot_dimension_numbers<[1], [0], [0], [1], [0, 0, 1, 1], [], []>} : vector<256x8xbf16>, vector<8x8xbf16>, vector<256x8xf32> -> vector<256x8xf32>
    %48 = arith.addf %41, %47 : vector<256x8xf32>
    %c1_43 = arith.constant 1 : index
    %c9_44 = arith.constant 9 : index
    %c0_45 = arith.constant 0 : index
    %49 = vector.load %arg10[%c1_43, %c9_44, %c0_45] : memref<18x25x8xf32, #tpu.memory_space<vmem>>, vector<16x16x8xf32>
    %50 = vector.shape_cast %49 : vector<16x16x8xf32> to vector<256x8xf32>
    %51 = arith.truncf %50 : vector<256x8xf32> to vector<256x8xbf16>
    %c5 = arith.constant 5 : index
    %c0_46 = arith.constant 0 : index
    %c0_47 = arith.constant 0 : index
    %52 = vector.load %arg4[%c5, %c0_46, %c0_47] : memref<9x8x8xbf16, #tpu.memory_space<vmem>>, vector<1x8x8xbf16>
    %53 = vector.shape_cast %52 : vector<1x8x8xbf16> to vector<8x8xbf16>
    %cst_48 = arith.constant dense<0.000000e+00> : vector<256x8xf32>
    %54 = tpu.matmul %51, %53, %cst_48 {dimension_numbers = #tpu.dot_dimension_numbers<[1], [0], [0], [1], [0, 0, 1, 1], [], []>} : vector<256x8xbf16>, vector<8x8xbf16>, vector<256x8xf32> -> vector<256x8xf32>
    %55 = arith.addf %48, %54 : vector<256x8xf32>
    %c2_49 = arith.constant 2 : index
    %c7_50 = arith.constant 7 : index
    %c0_51 = arith.constant 0 : index
    %56 = vector.load %arg10[%c2_49, %c7_50, %c0_51] : memref<18x25x8xf32, #tpu.memory_space<vmem>>, vector<16x16x8xf32>
    %57 = vector.shape_cast %56 : vector<16x16x8xf32> to vector<256x8xf32>
    %58 = arith.truncf %57 : vector<256x8xf32> to vector<256x8xbf16>
    %c6 = arith.constant 6 : index
    %c0_52 = arith.constant 0 : index
    %c0_53 = arith.constant 0 : index
    %59 = vector.load %arg4[%c6, %c0_52, %c0_53] : memref<9x8x8xbf16, #tpu.memory_space<vmem>>, vector<1x8x8xbf16>
    %60 = vector.shape_cast %59 : vector<1x8x8xbf16> to vector<8x8xbf16>
    %cst_54 = arith.constant dense<0.000000e+00> : vector<256x8xf32>
    %61 = tpu.matmul %58, %60, %cst_54 {dimension_numbers = #tpu.dot_dimension_numbers<[1], [0], [0], [1], [0, 0, 1, 1], [], []>} : vector<256x8xbf16>, vector<8x8xbf16>, vector<256x8xf32> -> vector<256x8xf32>
    %62 = arith.addf %55, %61 : vector<256x8xf32>
    %c2_55 = arith.constant 2 : index
    %c8_56 = arith.constant 8 : index
    %c0_57 = arith.constant 0 : index
    %63 = vector.load %arg10[%c2_55, %c8_56, %c0_57] : memref<18x25x8xf32, #tpu.memory_space<vmem>>, vector<16x16x8xf32>
    %64 = vector.shape_cast %63 : vector<16x16x8xf32> to vector<256x8xf32>
    %65 = arith.truncf %64 : vector<256x8xf32> to vector<256x8xbf16>
    %c7_58 = arith.constant 7 : index
    %c0_59 = arith.constant 0 : index
    %c0_60 = arith.constant 0 : index
    %66 = vector.load %arg4[%c7_58, %c0_59, %c0_60] : memref<9x8x8xbf16, #tpu.memory_space<vmem>>, vector<1x8x8xbf16>
    %67 = vector.shape_cast %66 : vector<1x8x8xbf16> to vector<8x8xbf16>
    %cst_61 = arith.constant dense<0.000000e+00> : vector<256x8xf32>
    %68 = tpu.matmul %65, %67, %cst_61 {dimension_numbers = #tpu.dot_dimension_numbers<[1], [0], [0], [1], [0, 0, 1, 1], [], []>} : vector<256x8xbf16>, vector<8x8xbf16>, vector<256x8xf32> -> vector<256x8xf32>
    %69 = arith.addf %62, %68 : vector<256x8xf32>
    %c2_62 = arith.constant 2 : index
    %c9_63 = arith.constant 9 : index
    %c0_64 = arith.constant 0 : index
    %70 = vector.load %arg10[%c2_62, %c9_63, %c0_64] : memref<18x25x8xf32, #tpu.memory_space<vmem>>, vector<16x16x8xf32>
    %71 = vector.shape_cast %70 : vector<16x16x8xf32> to vector<256x8xf32>
    %72 = arith.truncf %71 : vector<256x8xf32> to vector<256x8xbf16>
    %c8_65 = arith.constant 8 : index
    %c0_66 = arith.constant 0 : index
    %c0_67 = arith.constant 0 : index
    %73 = vector.load %arg4[%c8_65, %c0_66, %c0_67] : memref<9x8x8xbf16, #tpu.memory_space<vmem>>, vector<1x8x8xbf16>
    %74 = vector.shape_cast %73 : vector<1x8x8xbf16> to vector<8x8xbf16>
    %cst_68 = arith.constant dense<0.000000e+00> : vector<256x8xf32>
    %75 = tpu.matmul %72, %74, %cst_68 {dimension_numbers = #tpu.dot_dimension_numbers<[1], [0], [0], [1], [0, 0, 1, 1], [], []>} : vector<256x8xbf16>, vector<8x8xbf16>, vector<256x8xf32> -> vector<256x8xf32>
    %76 = arith.addf %69, %75 : vector<256x8xf32>
    %c0_69 = arith.constant 0 : index
    %c0_70 = arith.constant 0 : index
    %77 = vector.load %arg5[%c0_69, %c0_70] : memref<1x8xf32, #tpu.memory_space<vmem>>, vector<1x8xf32>
    %78 = vector.broadcast %77 : vector<1x8xf32> to vector<256x8xf32>
    %79 = arith.addf %76, %78 : vector<256x8xf32>
    %cst_71 = arith.constant 0.000000e+00 : f32
    %80 = vector.broadcast %cst_71 : f32 to vector<256x8xf32>
    %81 = arith.maximumf %79, %80 : vector<256x8xf32>
    %82 = arith.truncf %81 : vector<256x8xf32> to vector<256x8xbf16>
    %c0_72 = arith.constant 0 : index
    %c0_73 = arith.constant 0 : index
    %83 = vector.load %arg6[%c0_72, %c0_73] : memref<8x128xbf16, #tpu.memory_space<vmem>>, vector<8x128xbf16>
    %cst_74 = arith.constant dense<0.000000e+00> : vector<256x128xf32>
    %84 = tpu.matmul %82, %83, %cst_74 {dimension_numbers = #tpu.dot_dimension_numbers<[1], [0], [0], [1], [0, 0, 1, 1], [], []>} : vector<256x8xbf16>, vector<8x128xbf16>, vector<256x128xf32> -> vector<256x128xf32>
    %c0_75 = arith.constant 0 : index
    %c0_76 = arith.constant 0 : index
    %85 = vector.load %arg7[%c0_75, %c0_76] : memref<4x128xbf16, #tpu.memory_space<vmem>>, vector<4x128xbf16>
    %cst_77 = arith.constant dense<0.000000e+00> : vector<256x128xf32>
    %86 = tpu.matmul %1, %85, %cst_77 {dimension_numbers = #tpu.dot_dimension_numbers<[1], [0], [0], [1], [0, 0, 1, 1], [], []>} : vector<256x4xbf16>, vector<4x128xbf16>, vector<256x128xf32> -> vector<256x128xf32>
    %87 = arith.addf %84, %86 : vector<256x128xf32>
    %c0_78 = arith.constant 0 : index
    %c0_79 = arith.constant 0 : index
    %88 = vector.load %arg8[%c0_78, %c0_79] : memref<1x128xf32, #tpu.memory_space<vmem>>, vector<1x128xf32>
    %89 = vector.broadcast %88 : vector<1x128xf32> to vector<256x128xf32>
    %90 = arith.addf %87, %89 : vector<256x128xf32>
    %cst_80 = arith.constant 0.000000e+00 : f32
    %91 = vector.broadcast %cst_80 : f32 to vector<256x128xf32>
    %92 = arith.maximumf %90, %91 : vector<256x128xf32>
    %c0_81 = arith.constant 0 : index
    %c0_82 = arith.constant 0 : index
    %c0_83 = arith.constant 0 : index
    %93 = vector.load %arg9[%c0_81, %c0_82, %c0_83] : memref<1x256x128xf32, #tpu.memory_space<vmem>>, vector<1x256x128xf32>
    %94 = vector.shape_cast %93 : vector<1x256x128xf32> to vector<256x128xf32>
    %95 = vector.shape_cast %92 : vector<256x128xf32> to vector<1x256x128xf32>
    tpu.vector_store %arg9[%c0_81, %c0_82, %c0_83], %95 {strides = array<i32>} : memref<1x256x128xf32, #tpu.memory_space<vmem>>, vector<1x256x128xf32>,
    return
  }
  func.func @transform_0(%arg0: i32) -> (i32, i32, i32) {
    %c0_i32 = arith.constant 0 : i32
    %c0_i32_0 = arith.constant 0 : i32
    %c0_i32_1 = arith.constant 0 : i32
    return %arg0, %c0_i32, %c0_i32_0 : i32, i32, i32
  }
  func.func @transform_1(%arg0: i32) -> (i32, i32) {
    %c0_i32 = arith.constant 0 : i32
    %c0_i32_0 = arith.constant 0 : i32
    %c0_i32_1 = arith.constant 0 : i32
    return %c0_i32, %c0_i32_0 : i32, i32
  }
  func.func @transform_2(%arg0: i32) -> (i32, i32) {
    %c0_i32 = arith.constant 0 : i32
    %c0_i32_0 = arith.constant 0 : i32
    %c0_i32_1 = arith.constant 0 : i32
    return %c0_i32, %c0_i32_0 : i32, i32
  }
  func.func @transform_3(%arg0: i32) -> (i32, i32, i32) {
    %c0_i32 = arith.constant 0 : i32
    %c0_i32_0 = arith.constant 0 : i32
    %c0_i32_1 = arith.constant 0 : i32
    %c0_i32_2 = arith.constant 0 : i32
    return %c0_i32, %c0_i32_0, %c0_i32_1 : i32, i32, i32
  }
  func.func @transform_4(%arg0: i32) -> (i32, i32) {
    %c0_i32 = arith.constant 0 : i32
    %c0_i32_0 = arith.constant 0 : i32
    %c0_i32_1 = arith.constant 0 : i32
    return %c0_i32, %c0_i32_0 : i32, i32
  }
  func.func @transform_5(%arg0: i32) -> (i32, i32) {
    %c0_i32 = arith.constant 0 : i32
    %c0_i32_0 = arith.constant 0 : i32
    %c0_i32_1 = arith.constant 0 : i32
    return %c0_i32, %c0_i32_0 : i32, i32
  }
  func.func @transform_6(%arg0: i32) -> (i32, i32) {
    %c0_i32 = arith.constant 0 : i32
    %c0_i32_0 = arith.constant 0 : i32
    %c0_i32_1 = arith.constant 0 : i32
    return %c0_i32, %c0_i32_0 : i32, i32
  }
  func.func @transform_7(%arg0: i32) -> (i32, i32) {
    %c0_i32 = arith.constant 0 : i32
    %c0_i32_0 = arith.constant 0 : i32
    %c0_i32_1 = arith.constant 0 : i32
    return %c0_i32, %c0_i32_0 : i32, i32
  }
  func.func @transform_8(%arg0: i32) -> (i32, i32, i32) {
    %c0_i32 = arith.constant 0 : i32
    %c0_i32_0 = arith.constant 0 : i32
    %c0_i32_1 = arith.constant 0 : i32
    return %arg0, %c0_i32, %c0_i32_0 : i32, i32, i32
  }
}

</mosaic_0001>

<llo_original>
// kernel: tpu_custom_call.1
$region0: #{tpu_custom_call.1}
  #allocation0 [shape = 'u32[]', space=smem, size = 0x4, offset = 0x4, fixed_abs, tag = 'smem constant byte address 0x4 - core index']
  #allocation1 [shape = 'u32[144,128]{1,0:T(1,128)}', space=vmem, size = 0x12000, scoped, tag = 'internal scratch']
  #allocation2 [shape = 'f32[18,25,8]{2,1,0:T(8,128)}', space=vmem, size = 0x48000, scoped, tag = 'scratch operand']
  %s0 = inlined_call_operand.vmem [shape: bf16[2,256,4], index: 0, kind: input, shape index: {}]
  %s1 = inlined_call_operand.vmem [shape: bf16[4,8], index: 1, kind: input, shape index: {}]
  %s2 = inlined_call_operand.vmem [shape: f32[1,8], index: 2, kind: input, shape index: {}]
  %s3 = inlined_call_operand.vmem [shape: bf16[9,8,8], index: 3, kind: input, shape index: {}]
  %s4 = inlined_call_operand.vmem [shape: f32[1,8], index: 4, kind: input, shape index: {}]
  %s5 = inlined_call_operand.vmem [shape: bf16[8,128], index: 5, kind: input, shape index: {}]
  %s6 = inlined_call_operand.vmem [shape: bf16[4,128], index: 6, kind: input, shape index: {}]
  %s7 = inlined_call_operand.vmem [shape: f32[1,128], index: 7, kind: input, shape index: {}]
  %s8 = inlined_call_operand.hbm [shape: f32[2,256,128], index: 8, kind: output, shape index: {}]
  %s9 = sld [smem:[#allocation0]]
  $region65: #{tpu_custom_call.1} parent=0
    _
  %s11 = ssub.s32 1, %s9
  %s12 = scalar_select 0, %s11, %s9
  $region1: #{tpu_custom_call.1} parent=0
    #allocation3 [shape = 'u8[262144]{0}', space=vmem, size = 0x40000, scoped, tag = 'output window, operand 0']
    #allocation4 [shape = 's32[2]{0}', space=sflag, size = 0x8, scoped, tag = 'scoped memory for tpu_custom_call.1']
    %13 = vsyncpa [#allocation4], 0
    %s14 = scalar_lea.sflag [#allocation4], 1
    %15 = vsyncpa %s14, 0
    loop: start=0, step=1, limit=4
    $region2: #{tpu_custom_call.1} parent=1 // loop_pre_header
      _
    $region3: #{tpu_custom_call.1} parent=1 // loop_header
      %s17 = sphi 0, %s21
      %p18 = scmp.ge.s32.totalorder %s17, 4
      %s27 = sphi 0, %s29
      %s30 = sphi 0, %s27
      %s31 = sphi 0, %s30
      %s47 = sphi 0, %s31
      %s51 = sphi 0, %s51
      %s53 = sphi 0, %s51
      %s54 = sphi 0, %s53
      %s68 = sphi 0, %s54
      %s72 = sphi 0, %s72
      %s74 = sphi 0, %s72
      %s75 = sphi 0, %s74
      %s89 = sphi 0, %s75
      %s93 = sphi 0, %s93
      %s95 = sphi 0, %s93
      %s96 = sphi 0, %s95
      %s110 = sphi 0, %s96
      %s114 = sphi 0, %s114
      %s116 = sphi 0, %s114
      %s117 = sphi 0, %s116
      %s131 = sphi 0, %s117
      %s135 = sphi 0, %s135
      %s137 = sphi 0, %s135
      %s138 = sphi 0, %s137
      %s152 = sphi 0, %s138
      %s156 = sphi 0, %s156
      %s158 = sphi 0, %s156
      %s159 = sphi 0, %s158
      %s173 = sphi 0, %s159
      %s177 = sphi 0, %s177
      %s179 = sphi 0, %s177
      %s180 = sphi 0, %s179
      %s194 = sphi 0, %s180
      %s200 = sphi 0, %s202
      %s203 = sphi 0, %s200
      %s204 = sphi 0, %s203
      %s220 = sphi 0, %s204
    $region4: #{tpu_custom_call.1} parent=1 // loop_header_branch
      %20 = sbr.rel (%p18) target = $region8
    $region5: #{tpu_custom_call.1} parent=1 // loop_body
      %s22 = ssub.s32 %s17, 1
      %s23 = ssub.s32 %s17, 2
      %s24 = sadd.s32 %s17, 1
      %s25 = ssub.s32 %s17, %s24
      %p26 = scmp.eq.s32.totalorder %s25, 0
      %s28 = sadd.s32 %s27, 1
      %s29 = scalar_select %p26, %s27, %s28
      %p32 = pneg %p26
      %p33 = scmp.eq.s32.totalorder %s17, 1
      %p34 = por %p32, %p33
      %p35 = scmp.ne.s32.totalorder %s27, %s30
      %p36 = scmp.eq.s32.totalorder %s17, 0
      %p37 = por %p35, %p36
      %p38 = scmp.ne.s32.totalorder %s27, %s30
      %p39 = scmp.eq.s32.totalorder %s22, 1
      %p40 = por %p38, %p39
      %p41 = scmp.ne.s32.totalorder %s30, %s31
      %p42 = scmp.eq.s32.totalorder %s22, 0
      %p43 = por %p41, %p42
      %p44 = scmp.ne.s32.totalorder %s30, %s31
      %p45 = scmp.eq.s32.totalorder %s23, 1
      %p46 = por %p44, %p45
      %p48 = scmp.ne.s32.totalorder %s31, %s47
      %p49 = scmp.eq.s32.totalorder %s23, 0
      %p50 = por %p48, %p49
      %s52 = sadd.s32 %s51, 1
      %p55 = scmp.eq.s32.totalorder %s17, 1
      %p56 = scmp.ne.s32.totalorder %s51, %s53
      %p57 = scmp.eq.s32.totalorder %s17, 0
      %p58 = por %p56, %p57
      %p59 = scmp.ne.s32.totalorder %s51, %s53
      %p60 = scmp.eq.s32.totalorder %s22, 1
      %p61 = por %p59, %p60
      %p62 = scmp.ne.s32.totalorder %s53, %s54
      %p63 = scmp.eq.s32.totalorder %s22, 0
      %p64 = por %p62, %p63
      %p65 = scmp.ne.s32.totalorder %s53, %s54
      %p66 = scmp.eq.s32.totalorder %s23, 1
      %p67 = por %p65, %p66
      %p69 = scmp.ne.s32.totalorder %s54, %s68
      %p70 = scmp.eq.s32.totalorder %s23, 0
      %p71 = por %p69, %p70
      %s73 = sadd.s32 %s72, 1
      %p76 = scmp.eq.s32.totalorder %s17, 1
      %p77 = scmp.ne.s32.totalorder %s72, %s74
      %p78 = scmp.eq.s32.totalorder %s17, 0
      %p79 = por %p77, %p78
      %p80 = scmp.ne.s32.totalorder %s72, %s74
      %p81 = scmp.eq.s32.totalorder %s22, 1
      %p82 = por %p80, %p81
      %p83 = scmp.ne.s32.totalorder %s74, %s75
      %p84 = scmp.eq.s32.totalorder %s22, 0
      %p85 = por %p83, %p84
      %p86 = scmp.ne.s32.totalorder %s74, %s75
      %p87 = scmp.eq.s32.totalorder %s23, 1
      %p88 = por %p86, %p87
      %p90 = scmp.ne.s32.totalorder %s75, %s89
      %p91 = scmp.eq.s32.totalorder %s23, 0
      %p92 = por %p90, %p91
      %s94 = sadd.s32 %s93, 1
      %p97 = scmp.eq.s32.totalorder %s17, 1
      %p98 = scmp.ne.s32.totalorder %s93, %s95
      %p99 = scmp.eq.s32.totalorder %s17, 0
      %p100 = por %p98, %p99
      %p101 = scmp.ne.s32.totalorder %s93, %s95
      %p102 = scmp.eq.s32.totalorder %s22, 1
      %p103 = por %p101, %p102
      %p104 = scmp.ne.s32.totalorder %s95, %s96
      %p105 = scmp.eq.s32.totalorder %s22, 0
      %p106 = por %p104, %p105
      %p107 = scmp.ne.s32.totalorder %s95, %s96
      %p108 = scmp.eq.s32.totalorder %s23, 1
      %p109 = por %p107, %p108
      %p111 = scmp.ne.s32.totalorder %s96, %s110
      %p112 = scmp.eq.s32.totalorder %s23, 0
      %p113 = por %p111, %p112
      %s115 = sadd.s32 %s114, 1
      %p118 = scmp.eq.s32.totalorder %s17, 1
      %p119 = scmp.ne.s32.totalorder %s114, %s116
      %p120 = scmp.eq.s32.totalorder %s17, 0
      %p121 = por %p119, %p120
      %p122 = scmp.ne.s32.totalorder %s114, %s116
      %p123 = scmp.eq.s32.totalorder %s22, 1
      %p124 = por %p122, %p123
      %p125 = scmp.ne.s32.totalorder %s116, %s117
      %p126 = scmp.eq.s32.totalorder %s22, 0
      %p127 = por %p125, %p126
      %p128 = scmp.ne.s32.totalorder %s116, %s117
      %p129 = scmp.eq.s32.totalorder %s23, 1
      %p130 = por %p128, %p129
      %p132 = scmp.ne.s32.totalorder %s117, %s131
      %p133 = scmp.eq.s32.totalorder %s23, 0
      %p134 = por %p132, %p133
      %s136 = sadd.s32 %s135, 1
      %p139 = scmp.eq.s32.totalorder %s17, 1
      %p140 = scmp.ne.s32.totalorder %s135, %s137
      %p141 = scmp.eq.s32.totalorder %s17, 0
      %p142 = por %p140, %p141
      %p143 = scmp.ne.s32.totalorder %s135, %s137
      %p144 = scmp.eq.s32.totalorder %s22, 1
      %p145 = por %p143, %p144
      %p146 = scmp.ne.s32.totalorder %s137, %s138
      %p147 = scmp.eq.s32.totalorder %s22, 0
      %p148 = por %p146, %p147
      %p149 = scmp.ne.s32.totalorder %s137, %s138
      %p150 = scmp.eq.s32.totalorder %s23, 1
      %p151 = por %p149, %p150
      %p153 = scmp.ne.s32.totalorder %s138, %s152
      %p154 = scmp.eq.s32.totalorder %s23, 0
      %p155 = por %p153, %p154
      %s157 = sadd.s32 %s156, 1
      %p160 = scmp.eq.s32.totalorder %s17, 1
      %p161 = scmp.ne.s32.totalorder %s156, %s158
      %p162 = scmp.eq.s32.totalorder %s17, 0
      %p163 = por %p161, %p162
      %p164 = scmp.ne.s32.totalorder %s156, %s158
      %p165 = scmp.eq.s32.totalorder %s22, 1
      %p166 = por %p164, %p165
      %p167 = scmp.ne.s32.totalorder %s158, %s159
      %p168 = scmp.eq.s32.totalorder %s22, 0
      %p169 = por %p167, %p168
      %p170 = scmp.ne.s32.totalorder %s158, %s159
      %p171 = scmp.eq.s32.totalorder %s23, 1
      %p172 = por %p170, %p171
      %p174 = scmp.ne.s32.totalorder %s159, %s173
      %p175 = scmp.eq.s32.totalorder %s23, 0
      %p176 = por %p174, %p175
      %s178 = sadd.s32 %s177, 1
      %p181 = scmp.eq.s32.totalorder %s17, 1
      %p182 = scmp.ne.s32.totalorder %s177, %s179
      %p183 = scmp.eq.s32.totalorder %s17, 0
      %p184 = por %p182, %p183
      %p185 = scmp.ne.s32.totalorder %s177, %s179
      %p186 = scmp.eq.s32.totalorder %s22, 1
      %p187 = por %p185, %p186
      %p188 = scmp.ne.s32.totalorder %s179, %s180
      %p189 = scmp.eq.s32.totalorder %s22, 0
      %p190 = por %p188, %p189
      %p191 = scmp.ne.s32.totalorder %s179, %s180
      %p192 = scmp.eq.s32.totalorder %s23, 1
      %p193 = por %p191, %p192
      %p195 = scmp.ne.s32.totalorder %s180, %s194
      %p196 = scmp.eq.s32.totalorder %s23, 0
      %p197 = por %p195, %p196
      %s198 = ssub.s32 %s17, %s24
      %p199 = scmp.eq.s32.totalorder %s198, 0
      %s201 = sadd.s32 %s200, 1
      %s202 = scalar_select %p199, %s200, %s201
      %p205 = pneg %p199
      %p206 = scmp.eq.s32.totalorder %s17, 1
      %p207 = por %p205, %p206
      %p208 = scmp.ne.s32.totalorder %s200, %s203
      %p209 = scmp.eq.s32.totalorder %s17, 0
      %p210 = por %p208, %p209
      %p211 = scmp.ne.s32.totalorder %s200, %s203
      %p212 = scmp.eq.s32.totalorder %s22, 1
      %p213 = por %p211, %p212
      %p214 = scmp.ne.s32.totalorder %s203, %s204
      %p215 = scmp.eq.s32.totalorder %s22, 0
      %p216 = por %p214, %p215
      %p217 = scmp.ne.s32.totalorder %s203, %s204
      %p218 = scmp.eq.s32.totalorder %s23, 1
      %p219 = por %p217, %p218
      %p221 = scmp.ne.s32.totalorder %s204, %s220
      %p222 = scmp.eq.s32.totalorder %s23, 0
      %p223 = por %p221, %p222
      %p224 = scmp.le.s32.totalorder 1, %s17
      %p225 = scmp.lt.s32.totalorder %s17, 3
      %p226 = pnand %p224, %p225
      %p227 = pneg %p226
      // Predicated region
      $region9: #{tpu_custom_call.1} parent=5 // pred_check
        _
      $region10: #{tpu_custom_call.1} parent=5 // pred_check_branch
        %229 = sbr.rel (%p226) target = $region12
      $region11: #{tpu_custom_call.1} parent=5 // pred_region
        %s230 = ssub.s32 %s17, 1
        // Predicated region
        $region13: #{tpu_custom_call.1} parent=11 // pred_check
          %p231 = pneg %p64
        $region14: #{tpu_custom_call.1} parent=11 // pred_check_branch
          %233 = sbr.rel (%p231) target = $region16
        $region15: #{tpu_custom_call.1} parent=11 // pred_region
          _
        $region16: #{tpu_custom_call.1} parent=11 // pred_fallthru
          _
        // Predicated region
        $region17: #{tpu_custom_call.1} parent=11 // pred_check
          %p234 = pneg %p85
        $region18: #{tpu_custom_call.1} parent=11 // pred_check_branch
          %236 = sbr.rel (%p234) target = $region20
        $region19: #{tpu_custom_call.1} parent=11 // pred_region
          _
        $region20: #{tpu_custom_call.1} parent=11 // pred_fallthru
          _
        // Predicated region
        $region21: #{tpu_custom_call.1} parent=11 // pred_check
          %p237 = pneg %p106
        $region22: #{tpu_custom_call.1} parent=11 // pred_check_branch
          %239 = sbr.rel (%p237) target = $region24
        $region23: #{tpu_custom_call.1} parent=11 // pred_region
          _
        $region24: #{tpu_custom_call.1} parent=11 // pred_fallthru
          _
        // Predicated region
        $region25: #{tpu_custom_call.1} parent=11 // pred_check
          %p240 = pneg %p127
        $region26: #{tpu_custom_call.1} parent=11 // pred_check_branch
          %242 = sbr.rel (%p240) target = $region28
        $region27: #{tpu_custom_call.1} parent=11 // pred_region
          _
        $region28: #{tpu_custom_call.1} parent=11 // pred_fallthru
          _
        // Predicated region
        $region29: #{tpu_custom_call.1} parent=11 // pred_check
          %p243 = pneg %p148
        $region30: #{tpu_custom_call.1} parent=11 // pred_check_branch
          %245 = sbr.rel (%p243) target = $region32
        $region31: #{tpu_custom_call.1} parent=11 // pred_region
          _
        $region32: #{tpu_custom_call.1} parent=11 // pred_fallthru
          _
        // Predicated region
        $region33: #{tpu_custom_call.1} parent=11 // pred_check
          %p246 = pneg %p169
        $region34: #{tpu_custom_call.1} parent=11 // pred_check_branch
          %248 = sbr.rel (%p246) target = $region36
        $region35: #{tpu_custom_call.1} parent=11 // pred_region
          _
        $region36: #{tpu_custom_call.1} parent=11 // pred_fallthru
          _
        // Predicated region
        $region37: #{tpu_custom_call.1} parent=11 // pred_check
          %p249 = pneg %p190
        $region38: #{tpu_custom_call.1} parent=11 // pred_check_branch
          %251 = sbr.rel (%p249) target = $region40
        $region39: #{tpu_custom_call.1} parent=11 // pred_region
          _
        $region40: #{tpu_custom_call.1} parent=11 // pred_fallthru
          _
      $region12: #{tpu_custom_call.1} parent=5 // pred_fallthru
        _
      %p252 = scmp.lt.s32.totalorder %s17, 2
      // Predicated region
      $region41: #{tpu_custom_call.1} parent=5 // pred_check
        %p253 = pneg %p252
      $region42: #{tpu_custom_call.1} parent=5 // pred_check_branch
        %255 = sbr.rel (%p253) target = $region44
      $region43: #{tpu_custom_call.1} parent=5 // pred_region
        // Predicated region
        $region45: #{tpu_custom_call.1} parent=43 // pred_check
          %p256 = pneg %p37
        $region46: #{tpu_custom_call.1} parent=43 // pred_check_branch
          %258 = sbr.rel (%p256) target = $region48
        $region47: #{tpu_custom_call.1} parent=43 // pred_region
          %p259 = scmp.lt.s32.totalorder %s17, 1
          %s260 = scalar_select %p259, %s17, 1
          %s261 = smul.addr %s260, 32
          %s262 = smul.addr %s261, 4
          %s263 = scalar_lea.vmem %s0, %s262
        $region48: #{tpu_custom_call.1} parent=43 // pred_fallthru
          _
      $region44: #{tpu_custom_call.1} parent=5 // pred_fallthru
        _
      %p264 = scmp.le.s32.totalorder 1, %s17
      %p265 = scmp.lt.s32.totalorder %s17, 3
      %p266 = pnand %p264, %p265
      %p267 = pneg %p266
      // Predicated region
      $region49: #{tpu_custom_call.1} parent=5 // pred_check
        _
      $region50: #{tpu_custom_call.1} parent=5 // pred_check_branch
        %269 = sbr.rel (%p266) target = $region52
      $region51: #{tpu_custom_call.1} parent=5 // pred_region
        %s270 = ssub.s32 %s17, 1
        %p271 = scmp.lt.s32.totalorder %s22, 1
        %s272 = scalar_select %p271, %s22, 1
        %s273 = smul.addr %s272, 32
        %s274 = smul.addr %s273, 4
        %s275 = scalar_lea.vmem %s0, %s274
        %p276 = pneg %p43
        %p277 = pneg %p40
        %p278 = pneg %p64
        %p279 = pneg %p61
        %p280 = pneg %p85
        %p281 = pneg %p82
        %p282 = pneg %p106
        %p283 = pneg %p103
        %p284 = pneg %p127
        %p285 = pneg %p124
        %p286 = pneg %p148
        %p287 = pneg %p145
        %p288 = pneg %p169
        %p289 = pneg %p166
        %p290 = pneg %p190
        %p291 = pneg %p187
        %p292 = pneg %p216
        %p293 = pneg %p213
        %s294 = sand.u32 %s203, 1
        %s295 = scalar_lea.sflag [#allocation4], %s294
        %s296 = sand.u32 %s203, 1
        %s297 = smul.addr %s296, 256
        %s298 = scalar_lea.vmem [#allocation3], %s297
        %p299 = scmp.lt.s32.totalorder %s22, 1
        %s300 = scalar_select %p299, %s22, 1
        %s301 = smul.addr %s300, 32
        %s302 = smul.addr %s301, 4
        %s303 = scalar_lea.vmem %s0, %s302
        %v305 = vld [vmem:[%s303] sm:$0xf]
        %v306 = vld [vmem:[%s303 + $0x4] sm:$0xf]
        %v307 = vld [vmem:[%s303 + $0x8] sm:$0xf]
        %v308 = vld [vmem:[%s303 + $0xc] sm:$0xf]
        %v309 = vld [vmem:[%s303 + $0x10] sm:$0xf]
        %v310 = vld [vmem:[%s303 + $0x14] sm:$0xf]
        %v311 = vld [vmem:[%s303 + $0x18] sm:$0xf]
        %v312 = vld [vmem:[%s303 + $0x1c] sm:$0xf]
        %v313 = vld [vmem:[%s303 + $0x20] sm:$0xf]
        %v314 = vld [vmem:[%s303 + $0x24] sm:$0xf]
        %v315 = vld [vmem:[%s303 + $0x28] sm:$0xf]
        %v316 = vld [vmem:[%s303 + $0x2c] sm:$0xf]
        %v317 = vld [vmem:[%s303 + $0x30] sm:$0xf]
        %v318 = vld [vmem:[%s303 + $0x34] sm:$0xf]
        %v319 = vld [vmem:[%s303 + $0x38] sm:$0xf]
        %v320 = vld [vmem:[%s303 + $0x3c] sm:$0xf]
        %v321 = vld [vmem:[%s303 + $0x40] sm:$0xf]
        %v322 = vld [vmem:[%s303 + $0x44] sm:$0xf]
        %v323 = vld [vmem:[%s303 + $0x48] sm:$0xf]
        %v324 = vld [vmem:[%s303 + $0x4c] sm:$0xf]
        %v325 = vld [vmem:[%s303 + $0x50] sm:$0xf]
        %v326 = vld [vmem:[%s303 + $0x54] sm:$0xf]
        %v327 = vld [vmem:[%s303 + $0x58] sm:$0xf]
        %v328 = vld [vmem:[%s303 + $0x5c] sm:$0xf]
        %v329 = vld [vmem:[%s303 + $0x60] sm:$0xf]
        %v330 = vld [vmem:[%s303 + $0x64] sm:$0xf]
        %v331 = vld [vmem:[%s303 + $0x68] sm:$0xf]
        %v332 = vld [vmem:[%s303 + $0x6c] sm:$0xf]
        %v333 = vld [vmem:[%s303 + $0x70] sm:$0xf]
        %v334 = vld [vmem:[%s303 + $0x74] sm:$0xf]
        %v335 = vld [vmem:[%s303 + $0x78] sm:$0xf]
        %v336 = vld [vmem:[%s303 + $0x7c] sm:$0xf]
        %v337 = vld [vmem:[%s1] sm:$0x3]
        %v338 = vld [vmem:[%s2] sm:$0x1]
        %v340 = vlaneseq
        %v341 = vshrl.u32 %v340, 7
        %v342 = vsub.s32 0, %v341
        %v343 = vrot.slane %v338, %v342
        %v377 = vunpack.c.l.b16 %v305
        %v378 = vunpack.c.l.b16 %v306
        %v379 = vunpack.c.l.b16 %v307
        %v380 = vunpack.c.l.b16 %v308
        %v381 = vunpack.c.l.b16 %v309
        %v382 = vunpack.c.l.b16 %v310
        %v383 = vunpack.c.l.b16 %v311
        %v384 = vunpack.c.l.b16 %v312
        %v385 = vunpack.c.l.b16 %v313
        %v386 = vunpack.c.l.b16 %v314
        %v387 = vunpack.c.l.b16 %v315
        %v388 = vunpack.c.l.b16 %v316
        %v389 = vunpack.c.l.b16 %v317
        %v390 = vunpack.c.l.b16 %v318
        %v391 = vunpack.c.l.b16 %v319
        %v392 = vunpack.c.l.b16 %v320
        %v393 = vunpack.c.l.b16 %v321
        %v394 = vunpack.c.l.b16 %v322
        %v395 = vunpack.c.l.b16 %v323
        %v396 = vunpack.c.l.b16 %v324
        %v397 = vunpack.c.l.b16 %v325
        %v398 = vunpack.c.l.b16 %v326
        %v399 = vunpack.c.l.b16 %v327
        %v400 = vunpack.c.l.b16 %v328
        %v401 = vunpack.c.l.b16 %v329
        %v402 = vunpack.c.l.b16 %v330
        %v403 = vunpack.c.l.b16 %v331
        %v404 = vunpack.c.l.b16 %v332
        %v405 = vunpack.c.l.b16 %v333
        %v406 = vunpack.c.l.b16 %v334
        %v407 = vunpack.c.l.b16 %v335
        %v408 = vunpack.c.l.b16 %v336
        %v409 = vpack.c.b16 %v378, %v377
        %v410 = vpack.c.b16 %v380, %v379
        %v411 = vpack.c.b16 %v382, %v381
        %v412 = vpack.c.b16 %v384, %v383
        %v413 = vpack.c.b16 %v386, %v385
        %v414 = vpack.c.b16 %v388, %v387
        %v415 = vpack.c.b16 %v390, %v389
        %v416 = vpack.c.b16 %v392, %v391
        %v417 = vpack.c.b16 %v394, %v393
        %v418 = vpack.c.b16 %v396, %v395
        %v419 = vpack.c.b16 %v398, %v397
        %v420 = vpack.c.b16 %v400, %v399
        %v421 = vpack.c.b16 %v402, %v401
        %v422 = vpack.c.b16 %v404, %v403
        %v423 = vpack.c.b16 %v406, %v405
        %v424 = vpack.c.b16 %v408, %v407
        %vm425 = vcmask 31744
        %v427 = vsel %vm425, %v409, 0
        %v430 = vsel %vm425, %v410, 0
        %v433 = vsel %vm425, %v411, 0
        %v436 = vsel %vm425, %v412, 0
        %v439 = vsel %vm425, %v413, 0
        %v442 = vsel %vm425, %v414, 0
        %v445 = vsel %vm425, %v415, 0
        %v448 = vsel %vm425, %v416, 0
        %v451 = vsel %vm425, %v417, 0
        %v454 = vsel %vm425, %v418, 0
        %v457 = vsel %vm425, %v419, 0
        %v460 = vsel %vm425, %v420, 0
        %v463 = vsel %vm425, %v421, 0
        %v466 = vsel %vm425, %v422, 0
        %v469 = vsel %vm425, %v423, 0
        %v472 = vsel %vm425, %v424, 0
        %vm474 = vcmask 1041408
        %v476 = vsel %vm474, %v337, 0
        %478 = vmatprep.subr.bf16.mxu0 0
        %479 = vmatpush1.bf16.msra.mxu0 0
        %480 = vmatprep.subr.bf16.mxu0 0
        %481 = vmatpush1.bf16.msra.mxu0 0
        %482 = vmatprep.subr.bf16.mxu0 0
        %483 = vmatpush1.bf16.msra.mxu0 0
        %484 = vmatprep.subr.bf16.mxu0 0
        %485 = vmatpush1.bf16.msra.mxu0 0
        %486 = vmatprep.subr.bf16.mxu0 0
        %487 = vmatpush1.bf16.msra.mxu0 0
        %488 = vmatprep.subr.bf16.mxu0 0
        %489 = vmatpush1.bf16.msra.mxu0 0
        %490 = vmatprep.subr.bf16.mxu0 0
        %491 = vmatpush1.bf16.msra.mxu0 0
        %492 = vmatprep.subr.bf16.mxu0 0
        %493 = vmatpush1.bf16.msra.mxu0 %v476
        %494 = vmatprep.subr.bf16.mxu0 0
        %495 = vmatpush2.bf16.msra.mxu0 0
        %496 = vmatprep.subr.bf16.mxu0 0
        %497 = vmatpush2.bf16.msra.mxu0 0
        %498 = vmatprep.subr.bf16.mxu0 0
        %499 = vmatpush2.bf16.msra.mxu0 0
        %500 = vmatprep.subr.bf16.mxu0 0
        %501 = vmatpush2.bf16.msra.mxu0 0
        %502 = vmatprep.subr.bf16.mxu0 0
        %503 = vmatpush2.bf16.msra.mxu0 0
        %504 = vmatprep.subr.bf16.mxu0 0
        %505 = vmatpush2.bf16.msra.mxu0 0
        %506 = vmatprep.subr.bf16.mxu0 0
        %507 = vmatpush2.bf16.msra.mxu0 0
        %508 = vmatprep.subr.bf16.mxu0 0
        %509 = vmatpush2.bf16.msra.mxu0 0
        %510 = vmatprep.mubr.bf16.mxu0 0
        %511 = vmatmul.mubr.bf16.gmra.mxu0 %v427
        %v512 = vpop.f32.mrf.mxu0
        %v513 = vadd.f32 %v343, %v512
        %v514 = vpop.f32.mrf.mxu0
        %v515 = vpop.f32.mrf.mxu0
        %v516 = vadd.f32 %v343, %v515
        %v517 = vpop.f32.mrf.mxu0
        %518 = vmatprep.mubr.bf16.mxu0 0
        %519 = vmatmul.mubr.bf16.gmra.mxu0 %v430
        %v520 = vpop.f32.mrf.mxu0
        %v521 = vadd.f32 %v343, %v520
        %v522 = vpop.f32.mrf.mxu0
        %v523 = vpop.f32.mrf.mxu0
        %v524 = vadd.f32 %v343, %v523
        %v525 = vpop.f32.mrf.mxu0
        %526 = vmatprep.mubr.bf16.mxu0 0
        %527 = vmatmul.mubr.bf16.gmra.mxu0 %v433
        %v528 = vpop.f32.mrf.mxu0
        %v529 = vadd.f32 %v343, %v528
        %v530 = vpop.f32.mrf.mxu0
        %v531 = vpop.f32.mrf.mxu0
        %v532 = vadd.f32 %v343, %v531
        %v533 = vpop.f32.mrf.mxu0
        %534 = vmatprep.mubr.bf16.mxu0 0
        %535 = vmatmul.mubr.bf16.gmra.mxu0 %v436
        %v536 = vpop.f32.mrf.mxu0
        %v537 = vadd.f32 %v343, %v536
        %v538 = vpop.f32.mrf.mxu0
        %v539 = vpop.f32.mrf.mxu0
        %v540 = vadd.f32 %v343, %v539
        %v541 = vpop.f32.mrf.mxu0
        %542 = vmatprep.mubr.bf16.mxu0 0
        %543 = vmatmul.mubr.bf16.gmra.mxu0 %v439
        %v544 = vpop.f32.mrf.mxu0
        %v545 = vadd.f32 %v343, %v544
        %v546 = vpop.f32.mrf.mxu0
        %v547 = vpop.f32.mrf.mxu0
        %v548 = vadd.f32 %v343, %v547
        %v549 = vpop.f32.mrf.mxu0
        %550 = vmatprep.mubr.bf16.mxu0 0
        %551 = vmatmul.mubr.bf16.gmra.mxu0 %v442
        %v552 = vpop.f32.mrf.mxu0
        %v553 = vadd.f32 %v343, %v552
        %v554 = vpop.f32.mrf.mxu0
        %v555 = vpop.f32.mrf.mxu0
        %v556 = vadd.f32 %v343, %v555
        %v557 = vpop.f32.mrf.mxu0
        %558 = vmatprep.mubr.bf16.mxu0 0
        %559 = vmatmul.mubr.bf16.gmra.mxu0 %v445
        %v560 = vpop.f32.mrf.mxu0
        %v561 = vadd.f32 %v343, %v560
        %v562 = vpop.f32.mrf.mxu0
        %v563 = vpop.f32.mrf.mxu0
        %v564 = vadd.f32 %v343, %v563
        %v565 = vpop.f32.mrf.mxu0
        %566 = vmatprep.mubr.bf16.mxu0 0
        %567 = vmatmul.mubr.bf16.gmra.mxu0 %v448
        %v568 = vpop.f32.mrf.mxu0
        %v569 = vadd.f32 %v343, %v568
        %v570 = vpop.f32.mrf.mxu0
        %v571 = vpop.f32.mrf.mxu0
        %v572 = vadd.f32 %v343, %v571
        %v573 = vpop.f32.mrf.mxu0
        %574 = vmatprep.mubr.bf16.mxu0 0
        %575 = vmatmul.mubr.bf16.gmra.mxu0 %v451
        %v576 = vpop.f32.mrf.mxu0
        %v577 = vadd.f32 %v343, %v576
        %v578 = vpop.f32.mrf.mxu0
        %v579 = vpop.f32.mrf.mxu0
        %v580 = vadd.f32 %v343, %v579
        %v581 = vpop.f32.mrf.mxu0
        %582 = vmatprep.mubr.bf16.mxu0 0
        %583 = vmatmul.mubr.bf16.gmra.mxu0 %v454
        %v584 = vpop.f32.mrf.mxu0
        %v585 = vadd.f32 %v343, %v584
        %v586 = vpop.f32.mrf.mxu0
        %v587 = vpop.f32.mrf.mxu0
        %v588 = vadd.f32 %v343, %v587
        %v589 = vpop.f32.mrf.mxu0
        %590 = vmatprep.mubr.bf16.mxu0 0
        %591 = vmatmul.mubr.bf16.gmra.mxu0 %v457
        %v592 = vpop.f32.mrf.mxu0
        %v593 = vadd.f32 %v343, %v592
        %v594 = vpop.f32.mrf.mxu0
        %v595 = vpop.f32.mrf.mxu0
        %v596 = vadd.f32 %v343, %v595
        %v597 = vpop.f32.mrf.mxu0
        %598 = vmatprep.mubr.bf16.mxu0 0
        %599 = vmatmul.mubr.bf16.gmra.mxu0 %v460
        %v600 = vpop.f32.mrf.mxu0
        %v601 = vadd.f32 %v343, %v600
        %v602 = vpop.f32.mrf.mxu0
        %v603 = vpop.f32.mrf.mxu0
        %v604 = vadd.f32 %v343, %v603
        %v605 = vpop.f32.mrf.mxu0
        %606 = vmatprep.mubr.bf16.mxu0 0
        %607 = vmatmul.mubr.bf16.gmra.mxu0 %v463
        %v608 = vpop.f32.mrf.mxu0
        %v609 = vadd.f32 %v343, %v608
        %v610 = vpop.f32.mrf.mxu0
        %v611 = vpop.f32.mrf.mxu0
        %v612 = vadd.f32 %v343, %v611
        %v613 = vpop.f32.mrf.mxu0
        %614 = vmatprep.mubr.bf16.mxu0 0
        %615 = vmatmul.mubr.bf16.gmra.mxu0 %v466
        %v616 = vpop.f32.mrf.mxu0
        %v617 = vadd.f32 %v343, %v616
        %v618 = vpop.f32.mrf.mxu0
        %v619 = vpop.f32.mrf.mxu0
        %v620 = vadd.f32 %v343, %v619
        %v621 = vpop.f32.mrf.mxu0
        %622 = vmatprep.mubr.bf16.mxu0 0
        %623 = vmatmul.mubr.bf16.gmra.mxu0 %v469
        %v624 = vpop.f32.mrf.mxu0
        %v625 = vadd.f32 %v343, %v624
        %v626 = vpop.f32.mrf.mxu0
        %v627 = vpop.f32.mrf.mxu0
        %v628 = vadd.f32 %v343, %v627
        %v629 = vpop.f32.mrf.mxu0
        %630 = vmatprep.mubr.bf16.mxu0 0
        %631 = vmatmul.mubr.bf16.gmra.mxu0 %v472
        %v632 = vpop.f32.mrf.mxu0
        %v633 = vadd.f32 %v343, %v632
        %v634 = vpop.f32.mrf.mxu0
        %v635 = vpop.f32.mrf.mxu0
        %v636 = vadd.f32 %v343, %v635
        %v637 = vpop.f32.mrf.mxu0
        %638 = vdwg.mxu0
        %v639 = vmax.f32 %v513, 0.0
        %v640 = vmax.f32 %v516, 0.0
        %v641 = vmax.f32 %v521, 0.0
        %v642 = vmax.f32 %v524, 0.0
        %v643 = vmax.f32 %v529, 0.0
        %v644 = vmax.f32 %v532, 0.0
        %v645 = vmax.f32 %v537, 0.0
        %v646 = vmax.f32 %v540, 0.0
        %v647 = vmax.f32 %v545, 0.0
        %v648 = vmax.f32 %v548, 0.0
        %v649 = vmax.f32 %v553, 0.0
        %v650 = vmax.f32 %v556, 0.0
        %v651 = vmax.f32 %v561, 0.0
        %v652 = vmax.f32 %v564, 0.0
        %v653 = vmax.f32 %v569, 0.0
        %v654 = vmax.f32 %v572, 0.0
        %v655 = vmax.f32 %v577, 0.0
        %v656 = vmax.f32 %v580, 0.0
        %v657 = vmax.f32 %v585, 0.0
        %v658 = vmax.f32 %v588, 0.0
        %v659 = vmax.f32 %v593, 0.0
        %v660 = vmax.f32 %v596, 0.0
        %v661 = vmax.f32 %v601, 0.0
        %v662 = vmax.f32 %v604, 0.0
        %v663 = vmax.f32 %v609, 0.0
        %v664 = vmax.f32 %v612, 0.0
        %v665 = vmax.f32 %v617, 0.0
        %v666 = vmax.f32 %v620, 0.0
        %v667 = vmax.f32 %v625, 0.0
        %v668 = vmax.f32 %v628, 0.0
        %v669 = vmax.f32 %v633, 0.0
        %v670 = vmax.f32 %v636, 0.0
        %vm671 = vcmask 64512
        %672 = vst.msk [vmem:[#allocation2] sm:$0xff] %vm671, 0.0
        %673 = vst.msk [vmem:[#allocation2 + $0x8] sm:$0xff] %vm671, 0.0
        %674 = vst.msk [vmem:[#allocation2 + $0x10] sm:$0xff] %vm671, 0.0
        %vm675 = vcmask 57344
        %676 = vst.msk [vmem:[#allocation2 + $0x18] sm:$0x1] %vm675, 0.0
        %677 = vst.msk [vmem:[#allocation2 + $0x20] sm:$0xff] %vm671, 0.0
        %678 = vst.msk [vmem:[#allocation2 + $0x28] sm:$0xff] %vm671, 0.0
        %679 = vst.msk [vmem:[#allocation2 + $0x30] sm:$0xff] %vm671, 0.0
        %680 = vst.msk [vmem:[#allocation2 + $0x38] sm:$0x1] %vm675, 0.0
        %681 = vst.msk [vmem:[#allocation2 + $0x40] sm:$0xff] %vm671, 0.0
        %682 = vst.msk [vmem:[#allocation2 + $0x48] sm:$0xff] %vm671, 0.0
        %683 = vst.msk [vmem:[#allocation2 + $0x50] sm:$0xff] %vm671, 0.0
        %684 = vst.msk [vmem:[#allocation2 + $0x58] sm:$0x1] %vm675, 0.0
        %685 = vst.msk [vmem:[#allocation2 + $0x60] sm:$0xff] %vm671, 0.0
        %686 = vst.msk [vmem:[#allocation2 + $0x68] sm:$0xff] %vm671, 0.0
        %687 = vst.msk [vmem:[#allocation2 + $0x70] sm:$0xff] %vm671, 0.0
        %688 = vst.msk [vmem:[#allocation2 + $0x78] sm:$0x1] %vm675, 0.0
        %689 = vst.msk [vmem:[#allocation2 + $0x80] sm:$0xff] %vm671, 0.0
        %690 = vst.msk [vmem:[#allocation2 + $0x88] sm:$0xff] %vm671, 0.0
        %691 = vst.msk [vmem:[#allocation2 + $0x90] sm:$0xff] %vm671, 0.0
        %692 = vst.msk [vmem:[#allocation2 + $0x98] sm:$0x1] %vm675, 0.0
        %693 = vst.msk [vmem:[#allocation2 + $0xa0] sm:$0xff] %vm671, 0.0
        %694 = vst.msk [vmem:[#allocation2 + $0xa8] sm:$0xff] %vm671, 0.0
        %695 = vst.msk [vmem:[#allocation2 + $0xb0] sm:$0xff] %vm671, 0.0
        %696 = vst.msk [vmem:[#allocation2 + $0xb8] sm:$0x1] %vm675, 0.0
        %697 = vst.msk [vmem:[#allocation2 + $0xc0] sm:$0xff] %vm671, 0.0
        %698 = vst.msk [vmem:[#allocation2 + $0xc8] sm:$0xff] %vm671, 0.0
        %699 = vst.msk [vmem:[#allocation2 + $0xd0] sm:$0xff] %vm671, 0.0
        %700 = vst.msk [vmem:[#allocation2 + $0xd8] sm:$0x1] %vm675, 0.0
        %701 = vst.msk [vmem:[#allocation2 + $0xe0] sm:$0xff] %vm671, 0.0
        %702 = vst.msk [vmem:[#allocation2 + $0xe8] sm:$0xff] %vm671, 0.0
        %703 = vst.msk [vmem:[#allocation2 + $0xf0] sm:$0xff] %vm671, 0.0
        %704 = vst.msk [vmem:[#allocation2 + $0xf8] sm:$0x1] %vm675, 0.0
        %705 = vst.msk [vmem:[#allocation2 + $0x100] sm:$0xff] %vm671, 0.0
        %706 = vst.msk [vmem:[#allocation2 + $0x108] sm:$0xff] %vm671, 0.0
        %707 = vst.msk [vmem:[#allocation2 + $0x110] sm:$0xff] %vm671, 0.0
        %708 = vst.msk [vmem:[#allocation2 + $0x118] sm:$0x1] %vm675, 0.0
        %709 = vst.msk [vmem:[#allocation2 + $0x120] sm:$0xff] %vm671, 0.0
        %710 = vst.msk [vmem:[#allocation2 + $0x128] sm:$0xff] %vm671, 0.0
        %711 = vst.msk [vmem:[#allocation2 + $0x130] sm:$0xff] %vm671, 0.0
        %712 = vst.msk [vmem:[#allocation2 + $0x138] sm:$0x1] %vm675, 0.0
        %713 = vst.msk [vmem:[#allocation2 + $0x140] sm:$0xff] %vm671, 0.0
        %714 = vst.msk [vmem:[#allocation2 + $0x148] sm:$0xff] %vm671, 0.0
        %715 = vst.msk [vmem:[#allocation2 + $0x150] sm:$0xff] %vm671, 0.0
        %716 = vst.msk [vmem:[#allocation2 + $0x158] sm:$0x1] %vm675, 0.0
        %717 = vst.msk [vmem:[#allocation2 + $0x160] sm:$0xff] %vm671, 0.0
        %718 = vst.msk [vmem:[#allocation2 + $0x168] sm:$0xff] %vm671, 0.0
        %719 = vst.msk [vmem:[#allocation2 + $0x170] sm:$0xff] %vm671, 0.0
        %720 = vst.msk [vmem:[#allocation2 + $0x178] sm:$0x1] %vm675, 0.0
        %721 = vst.msk [vmem:[#allocation2 + $0x180] sm:$0xff] %vm671, 0.0
        %722 = vst.msk [vmem:[#allocation2 + $0x188] sm:$0xff] %vm671, 0.0
        %723 = vst.msk [vmem:[#allocation2 + $0x190] sm:$0xff] %vm671, 0.0
        %724 = vst.msk [vmem:[#allocation2 + $0x198] sm:$0x1] %vm675, 0.0
        %725 = vst.msk [vmem:[#allocation2 + $0x1a0] sm:$0xff] %vm671, 0.0
        %726 = vst.msk [vmem:[#allocation2 + $0x1a8] sm:$0xff] %vm671, 0.0
        %727 = vst.msk [vmem:[#allocation2 + $0x1b0] sm:$0xff] %vm671, 0.0
        %728 = vst.msk [vmem:[#allocation2 + $0x1b8] sm:$0x1] %vm675, 0.0
        %729 = vst.msk [vmem:[#allocation2 + $0x1c0] sm:$0xff] %vm671, 0.0
        %730 = vst.msk [vmem:[#allocation2 + $0x1c8] sm:$0xff] %vm671, 0.0
        %731 = vst.msk [vmem:[#allocation2 + $0x1d0] sm:$0xff] %vm671, 0.0
        %732 = vst.msk [vmem:[#allocation2 + $0x1d8] sm:$0x1] %vm675, 0.0
        %733 = vst.msk [vmem:[#allocation2 + $0x1e0] sm:$0xff] %vm671, 0.0
        %734 = vst.msk [vmem:[#allocation2 + $0x1e8] sm:$0xff] %vm671, 0.0
        %735 = vst.msk [vmem:[#allocation2 + $0x1f0] sm:$0xff] %vm671, 0.0
        %736 = vst.msk [vmem:[#allocation2 + $0x1f8] sm:$0x1] %vm675, 0.0
        %737 = vst.msk [vmem:[#allocation2 + $0x200] sm:$0xff] %vm671, 0.0
        %738 = vst.msk [vmem:[#allocation2 + $0x208] sm:$0xff] %vm671, 0.0
        %739 = vst.msk [vmem:[#allocation2 + $0x210] sm:$0xff] %vm671, 0.0
        %740 = vst.msk [vmem:[#allocation2 + $0x218] sm:$0x1] %vm675, 0.0
        %741 = vst.msk [vmem:[#allocation2 + $0x220] sm:$0xff] %vm671, 0.0
        %742 = vst.msk [vmem:[#allocation2 + $0x228] sm:$0xff] %vm671, 0.0
        %743 = vst.msk [vmem:[#allocation2 + $0x230] sm:$0xff] %vm671, 0.0
        %744 = vst.msk [vmem:[#allocation2 + $0x238] sm:$0x1] %vm675, 0.0
        %s745 = scalar_lea.vmem [#allocation2], 32
        %746 = vst.msk [vmem:[%s745 + $0x8] sm:$0xff] %vm671, %v639
        %747 = vst.msk [vmem:[%s745 + $0x10] sm:$0xff] %vm671, %v640
        %748 = vst.msk [vmem:[%s745 + $0x28] sm:$0xff] %vm671, %v641
        %749 = vst.msk [vmem:[%s745 + $0x30] sm:$0xff] %vm671, %v642
        %750 = vst.msk [vmem:[%s745 + $0x48] sm:$0xff] %vm671, %v643
        %751 = vst.msk [vmem:[%s745 + $0x50] sm:$0xff] %vm671, %v644
        %752 = vst.msk [vmem:[%s745 + $0x68] sm:$0xff] %vm671, %v645
        %753 = vst.msk [vmem:[%s745 + $0x70] sm:$0xff] %vm671, %v646
        %754 = vst.msk [vmem:[%s745 + $0x88] sm:$0xff] %vm671, %v647
        %755 = vst.msk [vmem:[%s745 + $0x90] sm:$0xff] %vm671, %v648
        %756 = vst.msk [vmem:[%s745 + $0xa8] sm:$0xff] %vm671, %v649
        %757 = vst.msk [vmem:[%s745 + $0xb0] sm:$0xff] %vm671, %v650
        %758 = vst.msk [vmem:[%s745 + $0xc8] sm:$0xff] %vm671, %v651
        %759 = vst.msk [vmem:[%s745 + $0xd0] sm:$0xff] %vm671, %v652
        %760 = vst.msk [vmem:[%s745 + $0xe8] sm:$0xff] %vm671, %v653
        %761 = vst.msk [vmem:[%s745 + $0xf0] sm:$0xff] %vm671, %v654
        %762 = vst.msk [vmem:[%s745 + $0x108] sm:$0xff] %vm671, %v655
        %763 = vst.msk [vmem:[%s745 + $0x110] sm:$0xff] %vm671, %v656
        %764 = vst.msk [vmem:[%s745 + $0x128] sm:$0xff] %vm671, %v657
        %765 = vst.msk [vmem:[%s745 + $0x130] sm:$0xff] %vm671, %v658
        %766 = vst.msk [vmem:[%s745 + $0x148] sm:$0xff] %vm671, %v659
        %767 = vst.msk [vmem:[%s745 + $0x150] sm:$0xff] %vm671, %v660
        %768 = vst.msk [vmem:[%s745 + $0x168] sm:$0xff] %vm671, %v661
        %769 = vst.msk [vmem:[%s745 + $0x170] sm:$0xff] %vm671, %v662
        %770 = vst.msk [vmem:[%s745 + $0x188] sm:$0xff] %vm671, %v663
        %771 = vst.msk [vmem:[%s745 + $0x190] sm:$0xff] %vm671, %v664
        %772 = vst.msk [vmem:[%s745 + $0x1a8] sm:$0xff] %vm671, %v665
        %773 = vst.msk [vmem:[%s745 + $0x1b0] sm:$0xff] %vm671, %v666
        %774 = vst.msk [vmem:[%s745 + $0x1c8] sm:$0xff] %vm671, %v667
        %775 = vst.msk [vmem:[%s745 + $0x1d0] sm:$0xff] %vm671, %v668
        %776 = vst.msk [vmem:[%s745 + $0x1e8] sm:$0xff] %vm671, %v669
        %777 = vst.msk [vmem:[%s745 + $0x1f0] sm:$0xff] %vm671, %v670
        %v778 = vld [vmem:[#allocation2 + $0x7] sm:$0xff]
        %v779 = vld [vmem:[#allocation2 + $0xf] sm:$0xff]
        %v780 = vld [vmem:[#allocation2 + $0x27] sm:$0xff]
        %v781 = vld [vmem:[#allocation2 + $0x2f] sm:$0xff]
        %v782 = vld [vmem:[#allocation2 + $0x47] sm:$0xff]
        %v783 = vld [vmem:[#allocation2 + $0x4f] sm:$0xff]
        %v784 = vld [vmem:[#allocation2 + $0x67] sm:$0xff]
        %v785 = vld [vmem:[#allocation2 + $0x6f] sm:$0xff]
        %v786 = vld [vmem:[#allocation2 + $0x87] sm:$0xff]
        %v787 = vld [vmem:[#allocation2 + $0x8f] sm:$0xff]
        %v788 = vld [vmem:[#allocation2 + $0xa7] sm:$0xff]
        %v789 = vld [vmem:[#allocation2 + $0xaf] sm:$0xff]
        %v790 = vld [vmem:[#allocation2 + $0xc7] sm:$0xff]
        %v791 = vld [vmem:[#allocation2 + $0xcf] sm:$0xff]
        %v792 = vld [vmem:[#allocation2 + $0xe7] sm:$0xff]
        %v793 = vld [vmem:[#allocation2 + $0xef] sm:$0xff]
        %v794 = vld [vmem:[#allocation2 + $0x107] sm:$0xff]
        %v795 = vld [vmem:[#allocation2 + $0x10f] sm:$0xff]
        %v796 = vld [vmem:[#allocation2 + $0x127] sm:$0xff]
        %v797 = vld [vmem:[#allocation2 + $0x12f] sm:$0xff]
        %v798 = vld [vmem:[#allocation2 + $0x147] sm:$0xff]
        %v799 = vld [vmem:[#allocation2 + $0x14f] sm:$0xff]
        %v800 = vld [vmem:[#allocation2 + $0x167] sm:$0xff]
        %v801 = vld [vmem:[#allocation2 + $0x16f] sm:$0xff]
        %v802 = vld [vmem:[#allocation2 + $0x187] sm:$0xff]
        %v803 = vld [vmem:[#allocation2 + $0x18f] sm:$0xff]
        %v804 = vld [vmem:[#allocation2 + $0x1a7] sm:$0xff]
        %v805 = vld [vmem:[#allocation2 + $0x1af] sm:$0xff]
        %v806 = vld [vmem:[#allocation2 + $0x1c7] sm:$0xff]
        %v807 = vld [vmem:[#allocation2 + $0x1cf] sm:$0xff]
        %v808 = vld [vmem:[#allocation2 + $0x1e7] sm:$0xff]
        %v809 = vld [vmem:[#allocation2 + $0x1ef] sm:$0xff]
        %v810 = vpack.c.bf16 %v779, %v778
        %v811 = vpack.c.bf16 %v781, %v780
        %v812 = vpack.c.bf16 %v783, %v782
        %v813 = vpack.c.bf16 %v785, %v784
        %v814 = vpack.c.bf16 %v787, %v786
        %v815 = vpack.c.bf16 %v789, %v788
        %v816 = vpack.c.bf16 %v791, %v790
        %v817 = vpack.c.bf16 %v793, %v792
        %v818 = vpack.c.bf16 %v795, %v794
        %v819 = vpack.c.bf16 %v797, %v796
        %v820 = vpack.c.bf16 %v799, %v798
        %v821 = vpack.c.bf16 %v801, %v800
        %v822 = vpack.c.bf16 %v803, %v802
        %v823 = vpack.c.bf16 %v805, %v804
        %v824 = vpack.c.bf16 %v807, %v806
        %v825 = vpack.c.bf16 %v809, %v808
        %v826 = vld [vmem:[%s3] sm:$0xf]
        %v827 = vld [vmem:[#allocation2 + $0x8] sm:$0xff]
        %v828 = vld [vmem:[#allocation2 + $0x10] sm:$0xff]
        %v829 = vld [vmem:[#allocation2 + $0x28] sm:$0xff]
        %v830 = vld [vmem:[#allocation2 + $0x30] sm:$0xff]
        %v831 = vld [vmem:[#allocation2 + $0x48] sm:$0xff]
        %v832 = vld [vmem:[#allocation2 + $0x50] sm:$0xff]
        %v833 = vld [vmem:[#allocation2 + $0x68] sm:$0xff]
        %v834 = vld [vmem:[#allocation2 + $0x70] sm:$0xff]
        %v835 = vld [vmem:[#allocation2 + $0x88] sm:$0xff]
        %v836 = vld [vmem:[#allocation2 + $0x90] sm:$0xff]
        %v837 = vld [vmem:[#allocation2 + $0xa8] sm:$0xff]
        %v838 = vld [vmem:[#allocation2 + $0xb0] sm:$0xff]
        %v839 = vld [vmem:[#allocation2 + $0xc8] sm:$0xff]
        %v840 = vld [vmem:[#allocation2 + $0xd0] sm:$0xff]
        %v841 = vld [vmem:[#allocation2 + $0xe8] sm:$0xff]
        %v842 = vld [vmem:[#allocation2 + $0xf0] sm:$0xff]
        %v843 = vld [vmem:[#allocation2 + $0x108] sm:$0xff]
        %v844 = vld [vmem:[#allocation2 + $0x110] sm:$0xff]
        %v845 = vld [vmem:[#allocation2 + $0x128] sm:$0xff]
        %v846 = vld [vmem:[#allocation2 + $0x130] sm:$0xff]
        %v847 = vld [vmem:[#allocation2 + $0x148] sm:$0xff]
        %v848 = vld [vmem:[#allocation2 + $0x150] sm:$0xff]
        %v849 = vld [vmem:[#allocation2 + $0x168] sm:$0xff]
        %v850 = vld [vmem:[#allocation2 + $0x170] sm:$0xff]
        %v851 = vld [vmem:[#allocation2 + $0x188] sm:$0xff]
        %v852 = vld [vmem:[#allocation2 + $0x190] sm:$0xff]
        %v853 = vld [vmem:[#allocation2 + $0x1a8] sm:$0xff]
        %v854 = vld [vmem:[#allocation2 + $0x1b0] sm:$0xff]
        %v855 = vld [vmem:[#allocation2 + $0x1c8] sm:$0xff]
        %v856 = vld [vmem:[#allocation2 + $0x1d0] sm:$0xff]
        %v857 = vld [vmem:[#allocation2 + $0x1e8] sm:$0xff]
        %v858 = vld [vmem:[#allocation2 + $0x1f0] sm:$0xff]
        %v859 = vpack.c.bf16 %v828, %v827
        %v860 = vpack.c.bf16 %v830, %v829
        %v861 = vpack.c.bf16 %v832, %v831
        %v862 = vpack.c.bf16 %v834, %v833
        %v863 = vpack.c.bf16 %v836, %v835
        %v864 = vpack.c.bf16 %v838, %v837
        %v865 = vpack.c.bf16 %v840, %v839
        %v866 = vpack.c.bf16 %v842, %v841
        %v867 = vpack.c.bf16 %v844, %v843
        %v868 = vpack.c.bf16 %v846, %v845
        %v869 = vpack.c.bf16 %v848, %v847
        %v870 = vpack.c.bf16 %v850, %v849
        %v871 = vpack.c.bf16 %v852, %v851
        %v872 = vpack.c.bf16 %v854, %v853
        %v873 = vpack.c.bf16 %v856, %v855
        %v874 = vpack.c.bf16 %v858, %v857
        %s875 = scalar_lea.vmem %s3, 4
        %v876 = vld [vmem:[%s875] sm:$0xf]
        %v878 = vsel %vm671, %v859, 0
        %v881 = vsel %vm671, %v860, 0
        %v884 = vsel %vm671, %v861, 0
        %v887 = vsel %vm671, %v862, 0
        %v890 = vsel %vm671, %v863, 0
        %v893 = vsel %vm671, %v864, 0
        %v896 = vsel %vm671, %v865, 0
        %v899 = vsel %vm671, %v866, 0
        %v902 = vsel %vm671, %v867, 0
        %v905 = vsel %vm671, %v868, 0
        %v908 = vsel %vm671, %v869, 0
        %v911 = vsel %vm671, %v870, 0
        %v914 = vsel %vm671, %v871, 0
        %v917 = vsel %vm671, %v872, 0
        %v920 = vsel %vm671, %v873, 0
        %v923 = vsel %vm671, %v874, 0
        %vm925 = vcmask 1043456
        %v927 = vsel %vm925, %v876, 0
        %929 = vmatprep.subr.bf16.mxu0 0
        %930 = vmatpush1.bf16.msra.mxu0 0
        %931 = vmatprep.subr.bf16.mxu0 0
        %932 = vmatpush1.bf16.msra.mxu0 0
        %933 = vmatprep.subr.bf16.mxu0 0
        %934 = vmatpush1.bf16.msra.mxu0 0
        %935 = vmatprep.subr.bf16.mxu0 0
        %936 = vmatpush1.bf16.msra.mxu0 0
        %937 = vmatprep.subr.bf16.mxu0 0
        %938 = vmatpush1.bf16.msra.mxu0 0
        %939 = vmatprep.subr.bf16.mxu0 0
        %940 = vmatpush1.bf16.msra.mxu0 0
        %941 = vmatprep.subr.bf16.mxu0 0
        %942 = vmatpush1.bf16.msra.mxu0 0
        %943 = vmatprep.subr.bf16.mxu0 0
        %944 = vmatpush1.bf16.msra.mxu0 %v927
        %945 = vmatprep.subr.bf16.mxu0 0
        %946 = vmatpush2.bf16.msra.mxu0 0
        %947 = vmatprep.subr.bf16.mxu0 0
        %948 = vmatpush2.bf16.msra.mxu0 0
        %949 = vmatprep.subr.bf16.mxu0 0
        %950 = vmatpush2.bf16.msra.mxu0 0
        %951 = vmatprep.subr.bf16.mxu0 0
        %952 = vmatpush2.bf16.msra.mxu0 0
        %953 = vmatprep.subr.bf16.mxu0 0
        %954 = vmatpush2.bf16.msra.mxu0 0
        %955 = vmatprep.subr.bf16.mxu0 0
        %956 = vmatpush2.bf16.msra.mxu0 0
        %957 = vmatprep.subr.bf16.mxu0 0
        %958 = vmatpush2.bf16.msra.mxu0 0
        %959 = vmatprep.subr.bf16.mxu0 0
        %960 = vmatpush2.bf16.msra.mxu0 0
        %961 = vmatprep.mubr.bf16.mxu0 0
        %962 = vmatmul.mubr.bf16.gmra.mxu0 %v878
        %v963 = vpop.f32.mrf.mxu0
        %v964 = vadd.f32 0.0, %v963
        %v965 = vpop.f32.mrf.mxu0
        %v966 = vpop.f32.mrf.mxu0
        %v967 = vadd.f32 0.0, %v966
        %v968 = vpop.f32.mrf.mxu0
        %969 = vmatprep.mubr.bf16.mxu0 0
        %970 = vmatmul.mubr.bf16.gmra.mxu0 %v881
        %v971 = vpop.f32.mrf.mxu0
        %v972 = vadd.f32 0.0, %v971
        %v973 = vpop.f32.mrf.mxu0
        %v974 = vpop.f32.mrf.mxu0
        %v975 = vadd.f32 0.0, %v974
        %v976 = vpop.f32.mrf.mxu0
        %977 = vmatprep.mubr.bf16.mxu0 0
        %978 = vmatmul.mubr.bf16.gmra.mxu0 %v884
        %v979 = vpop.f32.mrf.mxu0
        %v980 = vadd.f32 0.0, %v979
        %v981 = vpop.f32.mrf.mxu0
        %v982 = vpop.f32.mrf.mxu0
        %v983 = vadd.f32 0.0, %v982
        %v984 = vpop.f32.mrf.mxu0
        %985 = vmatprep.mubr.bf16.mxu0 0
        %986 = vmatmul.mubr.bf16.gmra.mxu0 %v887
        %v987 = vpop.f32.mrf.mxu0
        %v988 = vadd.f32 0.0, %v987
        %v989 = vpop.f32.mrf.mxu0
        %v990 = vpop.f32.mrf.mxu0
        %v991 = vadd.f32 0.0, %v990
        %v992 = vpop.f32.mrf.mxu0
        %993 = vmatprep.mubr.bf16.mxu0 0
        %994 = vmatmul.mubr.bf16.gmra.mxu0 %v890
        %v995 = vpop.f32.mrf.mxu0
        %v996 = vadd.f32 0.0, %v995
        %v997 = vpop.f32.mrf.mxu0
        %v998 = vpop.f32.mrf.mxu0
        %v999 = vadd.f32 0.0, %v998
        %v1000 = vpop.f32.mrf.mxu0
        %1001 = vmatprep.mubr.bf16.mxu0 0
        %1002 = vmatmul.mubr.bf16.gmra.mxu0 %v893
        %v1003 = vpop.f32.mrf.mxu0
        %v1004 = vadd.f32 0.0, %v1003
        %v1005 = vpop.f32.mrf.mxu0
        %v1006 = vpop.f32.mrf.mxu0
        %v1007 = vadd.f32 0.0, %v1006
        %v1008 = vpop.f32.mrf.mxu0
        %1009 = vmatprep.mubr.bf16.mxu0 0
        %1010 = vmatmul.mubr.bf16.gmra.mxu0 %v896
        %v1011 = vpop.f32.mrf.mxu0
        %v1012 = vadd.f32 0.0, %v1011
        %v1013 = vpop.f32.mrf.mxu0
        %v1014 = vpop.f32.mrf.mxu0
        %v1015 = vadd.f32 0.0, %v1014
        %v1016 = vpop.f32.mrf.mxu0
        %1017 = vmatprep.mubr.bf16.mxu0 0
        %1018 = vmatmul.mubr.bf16.gmra.mxu0 %v899
        %v1019 = vpop.f32.mrf.mxu0
        %v1020 = vadd.f32 0.0, %v1019
        %v1021 = vpop.f32.mrf.mxu0
        %v1022 = vpop.f32.mrf.mxu0
        %v1023 = vadd.f32 0.0, %v1022
        %v1024 = vpop.f32.mrf.mxu0
        %1025 = vmatprep.mubr.bf16.mxu0 0
        %1026 = vmatmul.mubr.bf16.gmra.mxu0 %v902
        %v1027 = vpop.f32.mrf.mxu0
        %v1028 = vadd.f32 0.0, %v1027
        %v1029 = vpop.f32.mrf.mxu0
        %v1030 = vpop.f32.mrf.mxu0
        %v1031 = vadd.f32 0.0, %v1030
        %v1032 = vpop.f32.mrf.mxu0
        %1033 = vmatprep.mubr.bf16.mxu0 0
        %1034 = vmatmul.mubr.bf16.gmra.mxu0 %v905
        %v1035 = vpop.f32.mrf.mxu0
        %v1036 = vadd.f32 0.0, %v1035
        %v1037 = vpop.f32.mrf.mxu0
        %v1038 = vpop.f32.mrf.mxu0
        %v1039 = vadd.f32 0.0, %v1038
        %v1040 = vpop.f32.mrf.mxu0
        %1041 = vmatprep.mubr.bf16.mxu0 0
        %1042 = vmatmul.mubr.bf16.gmra.mxu0 %v908
        %v1043 = vpop.f32.mrf.mxu0
        %v1044 = vadd.f32 0.0, %v1043
        %v1045 = vpop.f32.mrf.mxu0
        %v1046 = vpop.f32.mrf.mxu0
        %v1047 = vadd.f32 0.0, %v1046
        %v1048 = vpop.f32.mrf.mxu0
        %1049 = vmatprep.mubr.bf16.mxu0 0
        %1050 = vmatmul.mubr.bf16.gmra.mxu0 %v911
        %v1051 = vpop.f32.mrf.mxu0
        %v1052 = vadd.f32 0.0, %v1051
        %v1053 = vpop.f32.mrf.mxu0
        %v1054 = vpop.f32.mrf.mxu0
        %v1055 = vadd.f32 0.0, %v1054
        %v1056 = vpop.f32.mrf.mxu0
        %1057 = vmatprep.mubr.bf16.mxu0 0
        %1058 = vmatmul.mubr.bf16.gmra.mxu0 %v914
        %v1059 = vpop.f32.mrf.mxu0
        %v1060 = vadd.f32 0.0, %v1059
        %v1061 = vpop.f32.mrf.mxu0
        %v1062 = vpop.f32.mrf.mxu0
        %v1063 = vadd.f32 0.0, %v1062
        %v1064 = vpop.f32.mrf.mxu0
        %1065 = vmatprep.mubr.bf16.mxu0 0
        %1066 = vmatmul.mubr.bf16.gmra.mxu0 %v917
        %v1067 = vpop.f32.mrf.mxu0
        %v1068 = vadd.f32 0.0, %v1067
        %v1069 = vpop.f32.mrf.mxu0
        %v1070 = vpop.f32.mrf.mxu0
        %v1071 = vadd.f32 0.0, %v1070
        %v1072 = vpop.f32.mrf.mxu0
        %1073 = vmatprep.mubr.bf16.mxu0 0
        %1074 = vmatmul.mubr.bf16.gmra.mxu0 %v920
        %v1075 = vpop.f32.mrf.mxu0
        %v1076 = vadd.f32 0.0, %v1075
        %v1077 = vpop.f32.mrf.mxu0
        %v1078 = vpop.f32.mrf.mxu0
        %v1079 = vadd.f32 0.0, %v1078
        %v1080 = vpop.f32.mrf.mxu0
        %1081 = vmatprep.mubr.bf16.mxu0 0
        %1082 = vmatmul.mubr.bf16.gmra.mxu0 %v923
        %v1083 = vpop.f32.mrf.mxu0
        %v1084 = vadd.f32 0.0, %v1083
        %v1085 = vpop.f32.mrf.mxu0
        %v1086 = vpop.f32.mrf.mxu0
        %v1087 = vadd.f32 0.0, %v1086
        %v1088 = vpop.f32.mrf.mxu0
        %1089 = vdwg.mxu0
        %v1091 = vsel %vm671, %v810, 0
        %v1094 = vsel %vm671, %v811, 0
        %v1097 = vsel %vm671, %v812, 0
        %v1100 = vsel %vm671, %v813, 0
        %v1103 = vsel %vm671, %v814, 0
        %v1106 = vsel %vm671, %v815, 0
        %v1109 = vsel %vm671, %v816, 0
        %v1112 = vsel %vm671, %v817, 0
        %v1115 = vsel %vm671, %v818, 0
        %v1118 = vsel %vm671, %v819, 0
        %v1121 = vsel %vm671, %v820, 0
        %v1124 = vsel %vm671, %v821, 0
        %v1127 = vsel %vm671, %v822, 0
        %v1130 = vsel %vm671, %v823, 0
        %v1133 = vsel %vm671, %v824, 0
        %v1136 = vsel %vm671, %v825, 0
        %v1139 = vsel %vm925, %v826, 0
        %1141 = vmatprep.subr.bf16.mxu0 0
        %1142 = vmatpush1.bf16.msra.mxu0 0
        %1143 = vmatprep.subr.bf16.mxu0 0
        %1144 = vmatpush1.bf16.msra.mxu0 0
        %1145 = vmatprep.subr.bf16.mxu0 0
        %1146 = vmatpush1.bf16.msra.mxu0 0
        %1147 = vmatprep.subr.bf16.mxu0 0
        %1148 = vmatpush1.bf16.msra.mxu0 0
        %1149 = vmatprep.subr.bf16.mxu0 0
        %1150 = vmatpush1.bf16.msra.mxu0 0
        %1151 = vmatprep.subr.bf16.mxu0 0
        %1152 = vmatpush1.bf16.msra.mxu0 0
        %1153 = vmatprep.subr.bf16.mxu0 0
        %1154 = vmatpush1.bf16.msra.mxu0 0
        %1155 = vmatprep.subr.bf16.mxu0 0
        %1156 = vmatpush1.bf16.msra.mxu0 %v1139
        %1157 = vmatprep.subr.bf16.mxu0 0
        %1158 = vmatpush2.bf16.msra.mxu0 0
        %1159 = vmatprep.subr.bf16.mxu0 0
        %1160 = vmatpush2.bf16.msra.mxu0 0
        %1161 = vmatprep.subr.bf16.mxu0 0
        %1162 = vmatpush2.bf16.msra.mxu0 0
        %1163 = vmatprep.subr.bf16.mxu0 0
        %1164 = vmatpush2.bf16.msra.mxu0 0
        %1165 = vmatprep.subr.bf16.mxu0 0
        %1166 = vmatpush2.bf16.msra.mxu0 0
        %1167 = vmatprep.subr.bf16.mxu0 0
        %1168 = vmatpush2.bf16.msra.mxu0 0
        %1169 = vmatprep.subr.bf16.mxu0 0
        %1170 = vmatpush2.bf16.msra.mxu0 0
        %1171 = vmatprep.subr.bf16.mxu0 0
        %1172 = vmatpush2.bf16.msra.mxu0 0
        %1173 = vmatprep.mubr.bf16.mxu0 0
        %1174 = vmatmul.mubr.bf16.gmra.mxu0 %v1091
        %v1175 = vpop.f32.mrf.mxu0
        %v1176 = vadd.f32 %v964, %v1175
        %v1177 = vpop.f32.mrf.mxu0
        %v1178 = vpop.f32.mrf.mxu0
        %v1179 = vadd.f32 %v967, %v1178
        %v1180 = vpop.f32.mrf.mxu0
        %1181 = vmatprep.mubr.bf16.mxu0 0
        %1182 = vmatmul.mubr.bf16.gmra.mxu0 %v1094
        %v1183 = vpop.f32.mrf.mxu0
        %v1184 = vadd.f32 %v972, %v1183
        %v1185 = vpop.f32.mrf.mxu0
        %v1186 = vpop.f32.mrf.mxu0
        %v1187 = vadd.f32 %v975, %v1186
        %v1188 = vpop.f32.mrf.mxu0
        %1189 = vmatprep.mubr.bf16.mxu0 0
        %1190 = vmatmul.mubr.bf16.gmra.mxu0 %v1097
        %v1191 = vpop.f32.mrf.mxu0
        %v1192 = vadd.f32 %v980, %v1191
        %v1193 = vpop.f32.mrf.mxu0
        %v1194 = vpop.f32.mrf.mxu0
        %v1195 = vadd.f32 %v983, %v1194
        %v1196 = vpop.f32.mrf.mxu0
        %1197 = vmatprep.mubr.bf16.mxu0 0
        %1198 = vmatmul.mubr.bf16.gmra.mxu0 %v1100
        %v1199 = vpop.f32.mrf.mxu0
        %v1200 = vadd.f32 %v988, %v1199
        %v1201 = vpop.f32.mrf.mxu0
        %v1202 = vpop.f32.mrf.mxu0
        %v1203 = vadd.f32 %v991, %v1202
        %v1204 = vpop.f32.mrf.mxu0
        %1205 = vmatprep.mubr.bf16.mxu0 0
        %1206 = vmatmul.mubr.bf16.gmra.mxu0 %v1103
        %v1207 = vpop.f32.mrf.mxu0
        %v1208 = vadd.f32 %v996, %v1207
        %v1209 = vpop.f32.mrf.mxu0
        %v1210 = vpop.f32.mrf.mxu0
        %v1211 = vadd.f32 %v999, %v1210
        %v1212 = vpop.f32.mrf.mxu0
        %1213 = vmatprep.mubr.bf16.mxu0 0
        %1214 = vmatmul.mubr.bf16.gmra.mxu0 %v1106
        %v1215 = vpop.f32.mrf.mxu0
        %v1216 = vadd.f32 %v1004, %v1215
        %v1217 = vpop.f32.mrf.mxu0
        %v1218 = vpop.f32.mrf.mxu0
        %v1219 = vadd.f32 %v1007, %v1218
        %v1220 = vpop.f32.mrf.mxu0
        %1221 = vmatprep.mubr.bf16.mxu0 0
        %1222 = vmatmul.mubr.bf16.gmra.mxu0 %v1109
        %v1223 = vpop.f32.mrf.mxu0
        %v1224 = vadd.f32 %v1012, %v1223
        %v1225 = vpop.f32.mrf.mxu0
        %v1226 = vpop.f32.mrf.mxu0
        %v1227 = vadd.f32 %v1015, %v1226
        %v1228 = vpop.f32.mrf.mxu0
        %1229 = vmatprep.mubr.bf16.mxu0 0
        %1230 = vmatmul.mubr.bf16.gmra.mxu0 %v1112
        %v1231 = vpop.f32.mrf.mxu0
        %v1232 = vadd.f32 %v1020, %v1231
        %v1233 = vpop.f32.mrf.mxu0
        %v1234 = vpop.f32.mrf.mxu0
        %v1235 = vadd.f32 %v1023, %v1234
        %v1236 = vpop.f32.mrf.mxu0
        %1237 = vmatprep.mubr.bf16.mxu0 0
        %1238 = vmatmul.mubr.bf16.gmra.mxu0 %v1115
        %v1239 = vpop.f32.mrf.mxu0
        %v1240 = vadd.f32 %v1028, %v1239
        %v1241 = vpop.f32.mrf.mxu0
        %v1242 = vpop.f32.mrf.mxu0
        %v1243 = vadd.f32 %v1031, %v1242
        %v1244 = vpop.f32.mrf.mxu0
        %1245 = vmatprep.mubr.bf16.mxu0 0
        %1246 = vmatmul.mubr.bf16.gmra.mxu0 %v1118
        %v1247 = vpop.f32.mrf.mxu0
        %v1248 = vadd.f32 %v1036, %v1247
        %v1249 = vpop.f32.mrf.mxu0
        %v1250 = vpop.f32.mrf.mxu0
        %v1251 = vadd.f32 %v1039, %v1250
        %v1252 = vpop.f32.mrf.mxu0
        %1253 = vmatprep.mubr.bf16.mxu0 0
        %1254 = vmatmul.mubr.bf16.gmra.mxu0 %v1121
        %v1255 = vpop.f32.mrf.mxu0
        %v1256 = vadd.f32 %v1044, %v1255
        %v1257 = vpop.f32.mrf.mxu0
        %v1258 = vpop.f32.mrf.mxu0
        %v1259 = vadd.f32 %v1047, %v1258
        %v1260 = vpop.f32.mrf.mxu0
        %1261 = vmatprep.mubr.bf16.mxu0 0
        %1262 = vmatmul.mubr.bf16.gmra.mxu0 %v1124
        %v1263 = vpop.f32.mrf.mxu0
        %v1264 = vadd.f32 %v1052, %v1263
        %v1265 = vpop.f32.mrf.mxu0
        %v1266 = vpop.f32.mrf.mxu0
        %v1267 = vadd.f32 %v1055, %v1266
        %v1268 = vpop.f32.mrf.mxu0
        %1269 = vmatprep.mubr.bf16.mxu0 0
        %1270 = vmatmul.mubr.bf16.gmra.mxu0 %v1127
        %v1271 = vpop.f32.mrf.mxu0
        %v1272 = vadd.f32 %v1060, %v1271
        %v1273 = vpop.f32.mrf.mxu0
        %v1274 = vpop.f32.mrf.mxu0
        %v1275 = vadd.f32 %v1063, %v1274
        %v1276 = vpop.f32.mrf.mxu0
        %1277 = vmatprep.mubr.bf16.mxu0 0
        %1278 = vmatmul.mubr.bf16.gmra.mxu0 %v1130
        %v1279 = vpop.f32.mrf.mxu0
        %v1280 = vadd.f32 %v1068, %v1279
        %v1281 = vpop.f32.mrf.mxu0
        %v1282 = vpop.f32.mrf.mxu0
        %v1283 = vadd.f32 %v1071, %v1282
        %v1284 = vpop.f32.mrf.mxu0
        %1285 = vmatprep.mubr.bf16.mxu0 0
        %1286 = vmatmul.mubr.bf16.gmra.mxu0 %v1133
        %v1287 = vpop.f32.mrf.mxu0
        %v1288 = vadd.f32 %v1076, %v1287
        %v1289 = vpop.f32.mrf.mxu0
        %v1290 = vpop.f32.mrf.mxu0
        %v1291 = vadd.f32 %v1079, %v1290
        %v1292 = vpop.f32.mrf.mxu0
        %1293 = vmatprep.mubr.bf16.mxu0 0
        %1294 = vmatmul.mubr.bf16.gmra.mxu0 %v1136
        %v1295 = vpop.f32.mrf.mxu0
        %v1296 = vadd.f32 %v1084, %v1295
        %v1297 = vpop.f32.mrf.mxu0
        %v1298 = vpop.f32.mrf.mxu0
        %v1299 = vadd.f32 %v1087, %v1298
        %v1300 = vpop.f32.mrf.mxu0
        %1301 = vdwg.mxu0
        %v1302 = vld [vmem:[#allocation2 + $0x9] sm:$0xff]
        %v1303 = vld [vmem:[#allocation2 + $0x11] sm:$0xff]
        %v1304 = vld [vmem:[#allocation2 + $0x29] sm:$0xff]
        %v1305 = vld [vmem:[#allocation2 + $0x31] sm:$0xff]
        %v1306 = vld [vmem:[#allocation2 + $0x49] sm:$0xff]
        %v1307 = vld [vmem:[#allocation2 + $0x51] sm:$0xff]
        %v1308 = vld [vmem:[#allocation2 + $0x69] sm:$0xff]
        %v1309 = vld [vmem:[#allocation2 + $0x71] sm:$0xff]
        %v1310 = vld [vmem:[#allocation2 + $0x89] sm:$0xff]
        %v1311 = vld [vmem:[#allocation2 + $0x91] sm:$0xff]
        %v1312 = vld [vmem:[#allocation2 + $0xa9] sm:$0xff]
        %v1313 = vld [vmem:[#allocation2 + $0xb1] sm:$0xff]
        %v1314 = vld [vmem:[#allocation2 + $0xc9] sm:$0xff]
        %v1315 = vld [vmem:[#allocation2 + $0xd1] sm:$0xff]
        %v1316 = vld [vmem:[#allocation2 + $0xe9] sm:$0xff]
        %v1317 = vld [vmem:[#allocation2 + $0xf1] sm:$0xff]
        %v1318 = vld [vmem:[#allocation2 + $0x109] sm:$0xff]
        %v1319 = vld [vmem:[#allocation2 + $0x111] sm:$0xff]
        %v1320 = vld [vmem:[#allocation2 + $0x129] sm:$0xff]
        %v1321 = vld [vmem:[#allocation2 + $0x131] sm:$0xff]
        %v1322 = vld [vmem:[#allocation2 + $0x149] sm:$0xff]
        %v1323 = vld [vmem:[#allocation2 + $0x151] sm:$0xff]
        %v1324 = vld [vmem:[#allocation2 + $0x169] sm:$0xff]
        %v1325 = vld [vmem:[#allocation2 + $0x171] sm:$0xff]
        %v1326 = vld [vmem:[#allocation2 + $0x189] sm:$0xff]
        %v1327 = vld [vmem:[#allocation2 + $0x191] sm:$0xff]
        %v1328 = vld [vmem:[#allocation2 + $0x1a9] sm:$0xff]
        %v1329 = vld [vmem:[#allocation2 + $0x1b1] sm:$0xff]
        %v1330 = vld [vmem:[#allocation2 + $0x1c9] sm:$0xff]
        %v1331 = vld [vmem:[#allocation2 + $0x1d1] sm:$0xff]
        %v1332 = vld [vmem:[#allocation2 + $0x1e9] sm:$0xff]
        %v1333 = vld [vmem:[#allocation2 + $0x1f1] sm:$0xff]
        %v1334 = vpack.c.bf16 %v1303, %v1302
        %v1335 = vpack.c.bf16 %v1305, %v1304
        %v1336 = vpack.c.bf16 %v1307, %v1306
        %v1337 = vpack.c.bf16 %v1309, %v1308
        %v1338 = vpack.c.bf16 %v1311, %v1310
        %v1339 = vpack.c.bf16 %v1313, %v1312
        %v1340 = vpack.c.bf16 %v1315, %v1314
        %v1341 = vpack.c.bf16 %v1317, %v1316
        %v1342 = vpack.c.bf16 %v1319, %v1318
        %v1343 = vpack.c.bf16 %v1321, %v1320
        %v1344 = vpack.c.bf16 %v1323, %v1322
        %v1345 = vpack.c.bf16 %v1325, %v1324
        %v1346 = vpack.c.bf16 %v1327, %v1326
        %v1347 = vpack.c.bf16 %v1329, %v1328
        %v1348 = vpack.c.bf16 %v1331, %v1330
        %v1349 = vpack.c.bf16 %v1333, %v1332
        %s1350 = scalar_lea.vmem %s3, 8
        %v1351 = vld [vmem:[%s1350] sm:$0xf]
        %v1353 = vsel %vm671, %v1334, 0
        %v1356 = vsel %vm671, %v1335, 0
        %v1359 = vsel %vm671, %v1336, 0
        %v1362 = vsel %vm671, %v1337, 0
        %v1365 = vsel %vm671, %v1338, 0
        %v1368 = vsel %vm671, %v1339, 0
        %v1371 = vsel %vm671, %v1340, 0
        %v1374 = vsel %vm671, %v1341, 0
        %v1377 = vsel %vm671, %v1342, 0
        %v1380 = vsel %vm671, %v1343, 0
        %v1383 = vsel %vm671, %v1344, 0
        %v1386 = vsel %vm671, %v1345, 0
        %v1389 = vsel %vm671, %v1346, 0
        %v1392 = vsel %vm671, %v1347, 0
        %v1395 = vsel %vm671, %v1348, 0
        %v1398 = vsel %vm671, %v1349, 0
        %v1401 = vsel %vm925, %v1351, 0
        %1403 = vmatprep.subr.bf16.mxu0 0
        %1404 = vmatpush1.bf16.msra.mxu0 0
        %1405 = vmatprep.subr.bf16.mxu0 0
        %1406 = vmatpush1.bf16.msra.mxu0 0
        %1407 = vmatprep.subr.bf16.mxu0 0
        %1408 = vmatpush1.bf16.msra.mxu0 0
        %1409 = vmatprep.subr.bf16.mxu0 0
        %1410 = vmatpush1.bf16.msra.mxu0 0
        %1411 = vmatprep.subr.bf16.mxu0 0
        %1412 = vmatpush1.bf16.msra.mxu0 0
        %1413 = vmatprep.subr.bf16.mxu0 0
        %1414 = vmatpush1.bf16.msra.mxu0 0
        %1415 = vmatprep.subr.bf16.mxu0 0
        %1416 = vmatpush1.bf16.msra.mxu0 0
        %1417 = vmatprep.subr.bf16.mxu0 0
        %1418 = vmatpush1.bf16.msra.mxu0 %v1401
        %1419 = vmatprep.subr.bf16.mxu0 0
        %1420 = vmatpush2.bf16.msra.mxu0 0
        %1421 = vmatprep.subr.bf16.mxu0 0
        %1422 = vmatpush2.bf16.msra.mxu0 0
        %1423 = vmatprep.subr.bf16.mxu0 0
        %1424 = vmatpush2.bf16.msra.mxu0 0
        %1425 = vmatprep.subr.bf16.mxu0 0
        %1426 = vmatpush2.bf16.msra.mxu0 0
        %1427 = vmatprep.subr.bf16.mxu0 0
        %1428 = vmatpush2.bf16.msra.mxu0 0
        %1429 = vmatprep.subr.bf16.mxu0 0
        %1430 = vmatpush2.bf16.msra.mxu0 0
        %1431 = vmatprep.subr.bf16.mxu0 0
        %1432 = vmatpush2.bf16.msra.mxu0 0
        %1433 = vmatprep.subr.bf16.mxu0 0
        %1434 = vmatpush2.bf16.msra.mxu0 0
        %1435 = vmatprep.mubr.bf16.mxu0 0
        %1436 = vmatmul.mubr.bf16.gmra.mxu0 %v1353
        %v1437 = vpop.f32.mrf.mxu0
        %v1438 = vadd.f32 0.0, %v1437
        %v1439 = vpop.f32.mrf.mxu0
        %v1440 = vpop.f32.mrf.mxu0
        %v1441 = vadd.f32 0.0, %v1440
        %v1442 = vpop.f32.mrf.mxu0
        %1443 = vmatprep.mubr.bf16.mxu0 0
        %1444 = vmatmul.mubr.bf16.gmra.mxu0 %v1356
        %v1445 = vpop.f32.mrf.mxu0
        %v1446 = vadd.f32 0.0, %v1445
        %v1447 = vpop.f32.mrf.mxu0
        %v1448 = vpop.f32.mrf.mxu0
        %v1449 = vadd.f32 0.0, %v1448
        %v1450 = vpop.f32.mrf.mxu0
        %1451 = vmatprep.mubr.bf16.mxu0 0
        %1452 = vmatmul.mubr.bf16.gmra.mxu0 %v1359
        %v1453 = vpop.f32.mrf.mxu0
        %v1454 = vadd.f32 0.0, %v1453
        %v1455 = vpop.f32.mrf.mxu0
        %v1456 = vpop.f32.mrf.mxu0
        %v1457 = vadd.f32 0.0, %v1456
        %v1458 = vpop.f32.mrf.mxu0
        %1459 = vmatprep.mubr.bf16.mxu0 0
        %1460 = vmatmul.mubr.bf16.gmra.mxu0 %v1362
        %v1461 = vpop.f32.mrf.mxu0
        %v1462 = vadd.f32 0.0, %v1461
        %v1463 = vpop.f32.mrf.mxu0
        %v1464 = vpop.f32.mrf.mxu0
        %v1465 = vadd.f32 0.0, %v1464
        %v1466 = vpop.f32.mrf.mxu0
        %1467 = vmatprep.mubr.bf16.mxu0 0
        %1468 = vmatmul.mubr.bf16.gmra.mxu0 %v1365
        %v1469 = vpop.f32.mrf.mxu0
        %v1470 = vadd.f32 0.0, %v1469
        %v1471 = vpop.f32.mrf.mxu0
        %v1472 = vpop.f32.mrf.mxu0
        %v1473 = vadd.f32 0.0, %v1472
        %v1474 = vpop.f32.mrf.mxu0
        %1475 = vmatprep.mubr.bf16.mxu0 0
        %1476 = vmatmul.mubr.bf16.gmra.mxu0 %v1368
        %v1477 = vpop.f32.mrf.mxu0
        %v1478 = vadd.f32 0.0, %v1477
        %v1479 = vpop.f32.mrf.mxu0
        %v1480 = vpop.f32.mrf.mxu0
        %v1481 = vadd.f32 0.0, %v1480
        %v1482 = vpop.f32.mrf.mxu0
        %1483 = vmatprep.mubr.bf16.mxu0 0
        %1484 = vmatmul.mubr.bf16.gmra.mxu0 %v1371
        %v1485 = vpop.f32.mrf.mxu0
        %v1486 = vadd.f32 0.0, %v1485
        %v1487 = vpop.f32.mrf.mxu0
        %v1488 = vpop.f32.mrf.mxu0
        %v1489 = vadd.f32 0.0, %v1488
        %v1490 = vpop.f32.mrf.mxu0
        %1491 = vmatprep.mubr.bf16.mxu0 0
        %1492 = vmatmul.mubr.bf16.gmra.mxu0 %v1374
        %v1493 = vpop.f32.mrf.mxu0
        %v1494 = vadd.f32 0.0, %v1493
        %v1495 = vpop.f32.mrf.mxu0
        %v1496 = vpop.f32.mrf.mxu0
        %v1497 = vadd.f32 0.0, %v1496
        %v1498 = vpop.f32.mrf.mxu0
        %1499 = vmatprep.mubr.bf16.mxu0 0
        %1500 = vmatmul.mubr.bf16.gmra.mxu0 %v1377
        %v1501 = vpop.f32.mrf.mxu0
        %v1502 = vadd.f32 0.0, %v1501
        %v1503 = vpop.f32.mrf.mxu0
        %v1504 = vpop.f32.mrf.mxu0
        %v1505 = vadd.f32 0.0, %v1504
        %v1506 = vpop.f32.mrf.mxu0
        %1507 = vmatprep.mubr.bf16.mxu0 0
        %1508 = vmatmul.mubr.bf16.gmra.mxu0 %v1380
        %v1509 = vpop.f32.mrf.mxu0
        %v1510 = vadd.f32 0.0, %v1509
        %v1511 = vpop.f32.mrf.mxu0
        %v1512 = vpop.f32.mrf.mxu0
        %v1513 = vadd.f32 0.0, %v1512
        %v1514 = vpop.f32.mrf.mxu0
        %1515 = vmatprep.mubr.bf16.mxu0 0
        %1516 = vmatmul.mubr.bf16.gmra.mxu0 %v1383
        %v1517 = vpop.f32.mrf.mxu0
        %v1518 = vadd.f32 0.0, %v1517
        %v1519 = vpop.f32.mrf.mxu0
        %v1520 = vpop.f32.mrf.mxu0
        %v1521 = vadd.f32 0.0, %v1520
        %v1522 = vpop.f32.mrf.mxu0
        %1523 = vmatprep.mubr.bf16.mxu0 0
        %1524 = vmatmul.mubr.bf16.gmra.mxu0 %v1386
        %v1525 = vpop.f32.mrf.mxu0
        %v1526 = vadd.f32 0.0, %v1525
        %v1527 = vpop.f32.mrf.mxu0
        %v1528 = vpop.f32.mrf.mxu0
        %v1529 = vadd.f32 0.0, %v1528
        %v1530 = vpop.f32.mrf.mxu0
        %1531 = vmatprep.mubr.bf16.mxu0 0
        %1532 = vmatmul.mubr.bf16.gmra.mxu0 %v1389
        %v1533 = vpop.f32.mrf.mxu0
        %v1534 = vadd.f32 0.0, %v1533
        %v1535 = vpop.f32.mrf.mxu0
        %v1536 = vpop.f32.mrf.mxu0
        %v1537 = vadd.f32 0.0, %v1536
        %v1538 = vpop.f32.mrf.mxu0
        %1539 = vmatprep.mubr.bf16.mxu0 0
        %1540 = vmatmul.mubr.bf16.gmra.mxu0 %v1392
        %v1541 = vpop.f32.mrf.mxu0
        %v1542 = vadd.f32 0.0, %v1541
        %v1543 = vpop.f32.mrf.mxu0
        %v1544 = vpop.f32.mrf.mxu0
        %v1545 = vadd.f32 0.0, %v1544
        %v1546 = vpop.f32.mrf.mxu0
        %1547 = vmatprep.mubr.bf16.mxu0 0
        %1548 = vmatmul.mubr.bf16.gmra.mxu0 %v1395
        %v1549 = vpop.f32.mrf.mxu0
        %v1550 = vadd.f32 0.0, %v1549
        %v1551 = vpop.f32.mrf.mxu0
        %v1552 = vpop.f32.mrf.mxu0
        %v1553 = vadd.f32 0.0, %v1552
        %v1554 = vpop.f32.mrf.mxu0
        %1555 = vmatprep.mubr.bf16.mxu0 0
        %1556 = vmatmul.mubr.bf16.gmra.mxu0 %v1398
        %v1557 = vpop.f32.mrf.mxu0
        %v1558 = vadd.f32 0.0, %v1557
        %v1559 = vpop.f32.mrf.mxu0
        %v1560 = vpop.f32.mrf.mxu0
        %v1561 = vadd.f32 0.0, %v1560
        %v1562 = vpop.f32.mrf.mxu0
        %1563 = vdwg.mxu0
        %v1564 = vadd.f32 %v1176, %v1438
        %v1565 = vadd.f32 %v1179, %v1441
        %v1566 = vadd.f32 %v1184, %v1446
        %v1567 = vadd.f32 %v1187, %v1449
        %v1568 = vadd.f32 %v1192, %v1454
        %v1569 = vadd.f32 %v1195, %v1457
        %v1570 = vadd.f32 %v1200, %v1462
        %v1571 = vadd.f32 %v1203, %v1465
        %v1572 = vadd.f32 %v1208, %v1470
        %v1573 = vadd.f32 %v1211, %v1473
        %v1574 = vadd.f32 %v1216, %v1478
        %v1575 = vadd.f32 %v1219, %v1481
        %v1576 = vadd.f32 %v1224, %v1486
        %v1577 = vadd.f32 %v1227, %v1489
        %v1578 = vadd.f32 %v1232, %v1494
        %v1579 = vadd.f32 %v1235, %v1497
        %v1580 = vadd.f32 %v1240, %v1502
        %v1581 = vadd.f32 %v1243, %v1505
        %v1582 = vadd.f32 %v1248, %v1510
        %v1583 = vadd.f32 %v1251, %v1513
        %v1584 = vadd.f32 %v1256, %v1518
        %v1585 = vadd.f32 %v1259, %v1521
        %v1586 = vadd.f32 %v1264, %v1526
        %v1587 = vadd.f32 %v1267, %v1529
        %v1588 = vadd.f32 %v1272, %v1534
        %v1589 = vadd.f32 %v1275, %v1537
        %v1590 = vadd.f32 %v1280, %v1542
        %v1591 = vadd.f32 %v1283, %v1545
        %v1592 = vadd.f32 %v1288, %v1550
        %v1593 = vadd.f32 %v1291, %v1553
        %v1594 = vadd.f32 %v1296, %v1558
        %v1595 = vadd.f32 %v1299, %v1561
        %v1596 = vld [vmem:[%s745 + $0x7] sm:$0xff]
        %v1597 = vld [vmem:[%s745 + $0xf] sm:$0xff]
        %v1598 = vld [vmem:[%s745 + $0x27] sm:$0xff]
        %v1599 = vld [vmem:[%s745 + $0x2f] sm:$0xff]
        %v1600 = vld [vmem:[%s745 + $0x47] sm:$0xff]
        %v1601 = vld [vmem:[%s745 + $0x4f] sm:$0xff]
        %v1602 = vld [vmem:[%s745 + $0x67] sm:$0xff]
        %v1603 = vld [vmem:[%s745 + $0x6f] sm:$0xff]
        %v1604 = vld [vmem:[%s745 + $0x87] sm:$0xff]
        %v1605 = vld [vmem:[%s745 + $0x8f] sm:$0xff]
        %v1606 = vld [vmem:[%s745 + $0xa7] sm:$0xff]
        %v1607 = vld [vmem:[%s745 + $0xaf] sm:$0xff]
        %v1608 = vld [vmem:[%s745 + $0xc7] sm:$0xff]
        %v1609 = vld [vmem:[%s745 + $0xcf] sm:$0xff]
        %v1610 = vld [vmem:[%s745 + $0xe7] sm:$0xff]
        %v1611 = vld [vmem:[%s745 + $0xef] sm:$0xff]
        %v1612 = vld [vmem:[%s745 + $0x107] sm:$0xff]
        %v1613 = vld [vmem:[%s745 + $0x10f] sm:$0xff]
        %v1614 = vld [vmem:[%s745 + $0x127] sm:$0xff]
        %v1615 = vld [vmem:[%s745 + $0x12f] sm:$0xff]
        %v1616 = vld [vmem:[%s745 + $0x147] sm:$0xff]
        %v1617 = vld [vmem:[%s745 + $0x14f] sm:$0xff]
        %v1618 = vld [vmem:[%s745 + $0x167] sm:$0xff]
        %v1619 = vld [vmem:[%s745 + $0x16f] sm:$0xff]
        %v1620 = vld [vmem:[%s745 + $0x187] sm:$0xff]
        %v1621 = vld [vmem:[%s745 + $0x18f] sm:$0xff]
        %v1622 = vld [vmem:[%s745 + $0x1a7] sm:$0xff]
        %v1623 = vld [vmem:[%s745 + $0x1af] sm:$0xff]
        %v1624 = vld [vmem:[%s745 + $0x1c7] sm:$0xff]
        %v1625 = vld [vmem:[%s745 + $0x1cf] sm:$0xff]
        %v1626 = vld [vmem:[%s745 + $0x1e7] sm:$0xff]
        %v1627 = vld [vmem:[%s745 + $0x1ef] sm:$0xff]
        %v1628 = vpack.c.bf16 %v1597, %v1596
        %v1629 = vpack.c.bf16 %v1599, %v1598
        %v1630 = vpack.c.bf16 %v1601, %v1600
        %v1631 = vpack.c.bf16 %v1603, %v1602
        %v1632 = vpack.c.bf16 %v1605, %v1604
        %v1633 = vpack.c.bf16 %v1607, %v1606
        %v1634 = vpack.c.bf16 %v1609, %v1608
        %v1635 = vpack.c.bf16 %v1611, %v1610
        %v1636 = vpack.c.bf16 %v1613, %v1612
        %v1637 = vpack.c.bf16 %v1615, %v1614
        %v1638 = vpack.c.bf16 %v1617, %v1616
        %v1639 = vpack.c.bf16 %v1619, %v1618
        %v1640 = vpack.c.bf16 %v1621, %v1620
        %v1641 = vpack.c.bf16 %v1623, %v1622
        %v1642 = vpack.c.bf16 %v1625, %v1624
        %v1643 = vpack.c.bf16 %v1627, %v1626
        %s1644 = scalar_lea.vmem %s3, 12
        %v1645 = vld [vmem:[%s1644] sm:$0xf]
        %v1647 = vsel %vm671, %v1628, 0
        %v1650 = vsel %vm671, %v1629, 0
        %v1653 = vsel %vm671, %v1630, 0
        %v1656 = vsel %vm671, %v1631, 0
        %v1659 = vsel %vm671, %v1632, 0
        %v1662 = vsel %vm671, %v1633, 0
        %v1665 = vsel %vm671, %v1634, 0
        %v1668 = vsel %vm671, %v1635, 0
        %v1671 = vsel %vm671, %v1636, 0
        %v1674 = vsel %vm671, %v1637, 0
        %v1677 = vsel %vm671, %v1638, 0
        %v1680 = vsel %vm671, %v1639, 0
        %v1683 = vsel %vm671, %v1640, 0
        %v1686 = vsel %vm671, %v1641, 0
        %v1689 = vsel %vm671, %v1642, 0
        %v1692 = vsel %vm671, %v1643, 0
        %v1695 = vsel %vm925, %v1645, 0
        %1697 = vmatprep.subr.bf16.mxu0 0
        %1698 = vmatpush1.bf16.msra.mxu0 0
        %1699 = vmatprep.subr.bf16.mxu0 0
        %1700 = vmatpush1.bf16.msra.mxu0 0
        %1701 = vmatprep.subr.bf16.mxu0 0
        %1702 = vmatpush1.bf16.msra.mxu0 0
        %1703 = vmatprep.subr.bf16.mxu0 0
        %1704 = vmatpush1.bf16.msra.mxu0 0
        %1705 = vmatprep.subr.bf16.mxu0 0
        %1706 = vmatpush1.bf16.msra.mxu0 0
        %1707 = vmatprep.subr.bf16.mxu0 0
        %1708 = vmatpush1.bf16.msra.mxu0 0
        %1709 = vmatprep.subr.bf16.mxu0 0
        %1710 = vmatpush1.bf16.msra.mxu0 0
        %1711 = vmatprep.subr.bf16.mxu0 0
        %1712 = vmatpush1.bf16.msra.mxu0 %v1695
        %1713 = vmatprep.subr.bf16.mxu0 0
        %1714 = vmatpush2.bf16.msra.mxu0 0
        %1715 = vmatprep.subr.bf16.mxu0 0
        %1716 = vmatpush2.bf16.msra.mxu0 0
        %1717 = vmatprep.subr.bf16.mxu0 0
        %1718 = vmatpush2.bf16.msra.mxu0 0
        %1719 = vmatprep.subr.bf16.mxu0 0
        %1720 = vmatpush2.bf16.msra.mxu0 0
        %1721 = vmatprep.subr.bf16.mxu0 0
        %1722 = vmatpush2.bf16.msra.mxu0 0
        %1723 = vmatprep.subr.bf16.mxu0 0
        %1724 = vmatpush2.bf16.msra.mxu0 0
        %1725 = vmatprep.subr.bf16.mxu0 0
        %1726 = vmatpush2.bf16.msra.mxu0 0
        %1727 = vmatprep.subr.bf16.mxu0 0
        %1728 = vmatpush2.bf16.msra.mxu0 0
        %1729 = vmatprep.mubr.bf16.mxu0 0
        %1730 = vmatmul.mubr.bf16.gmra.mxu0 %v1647
        %v1731 = vpop.f32.mrf.mxu0
        %v1732 = vadd.f32 0.0, %v1731
        %v1733 = vpop.f32.mrf.mxu0
        %v1734 = vpop.f32.mrf.mxu0
        %v1735 = vadd.f32 0.0, %v1734
        %v1736 = vpop.f32.mrf.mxu0
        %1737 = vmatprep.mubr.bf16.mxu0 0
        %1738 = vmatmul.mubr.bf16.gmra.mxu0 %v1650
        %v1739 = vpop.f32.mrf.mxu0
        %v1740 = vadd.f32 0.0, %v1739
        %v1741 = vpop.f32.mrf.mxu0
        %v1742 = vpop.f32.mrf.mxu0
        %v1743 = vadd.f32 0.0, %v1742
        %v1744 = vpop.f32.mrf.mxu0
        %1745 = vmatprep.mubr.bf16.mxu0 0
        %1746 = vmatmul.mubr.bf16.gmra.mxu0 %v1653
        %v1747 = vpop.f32.mrf.mxu0
        %v1748 = vadd.f32 0.0, %v1747
        %v1749 = vpop.f32.mrf.mxu0
        %v1750 = vpop.f32.mrf.mxu0
        %v1751 = vadd.f32 0.0, %v1750
        %v1752 = vpop.f32.mrf.mxu0
        %1753 = vmatprep.mubr.bf16.mxu0 0
        %1754 = vmatmul.mubr.bf16.gmra.mxu0 %v1656
        %v1755 = vpop.f32.mrf.mxu0
        %v1756 = vadd.f32 0.0, %v1755
        %v1757 = vpop.f32.mrf.mxu0
        %v1758 = vpop.f32.mrf.mxu0
        %v1759 = vadd.f32 0.0, %v1758
        %v1760 = vpop.f32.mrf.mxu0
        %1761 = vmatprep.mubr.bf16.mxu0 0
        %1762 = vmatmul.mubr.bf16.gmra.mxu0 %v1659
        %v1763 = vpop.f32.mrf.mxu0
        %v1764 = vadd.f32 0.0, %v1763
        %v1765 = vpop.f32.mrf.mxu0
        %v1766 = vpop.f32.mrf.mxu0
        %v1767 = vadd.f32 0.0, %v1766
        %v1768 = vpop.f32.mrf.mxu0
        %1769 = vmatprep.mubr.bf16.mxu0 0
        %1770 = vmatmul.mubr.bf16.gmra.mxu0 %v1662
        %v1771 = vpop.f32.mrf.mxu0
        %v1772 = vadd.f32 0.0, %v1771
        %v1773 = vpop.f32.mrf.mxu0
        %v1774 = vpop.f32.mrf.mxu0
        %v1775 = vadd.f32 0.0, %v1774
        %v1776 = vpop.f32.mrf.mxu0
        %1777 = vmatprep.mubr.bf16.mxu0 0
        %1778 = vmatmul.mubr.bf16.gmra.mxu0 %v1665
        %v1779 = vpop.f32.mrf.mxu0
        %v1780 = vadd.f32 0.0, %v1779
        %v1781 = vpop.f32.mrf.mxu0
        %v1782 = vpop.f32.mrf.mxu0
        %v1783 = vadd.f32 0.0, %v1782
        %v1784 = vpop.f32.mrf.mxu0
        %1785 = vmatprep.mubr.bf16.mxu0 0
        %1786 = vmatmul.mubr.bf16.gmra.mxu0 %v1668
        %v1787 = vpop.f32.mrf.mxu0
        %v1788 = vadd.f32 0.0, %v1787
        %v1789 = vpop.f32.mrf.mxu0
        %v1790 = vpop.f32.mrf.mxu0
        %v1791 = vadd.f32 0.0, %v1790
        %v1792 = vpop.f32.mrf.mxu0
        %1793 = vmatprep.mubr.bf16.mxu0 0
        %1794 = vmatmul.mubr.bf16.gmra.mxu0 %v1671
        %v1795 = vpop.f32.mrf.mxu0
        %v1796 = vadd.f32 0.0, %v1795
        %v1797 = vpop.f32.mrf.mxu0
        %v1798 = vpop.f32.mrf.mxu0
        %v1799 = vadd.f32 0.0, %v1798
        %v1800 = vpop.f32.mrf.mxu0
        %1801 = vmatprep.mubr.bf16.mxu0 0
        %1802 = vmatmul.mubr.bf16.gmra.mxu0 %v1674
        %v1803 = vpop.f32.mrf.mxu0
        %v1804 = vadd.f32 0.0, %v1803
        %v1805 = vpop.f32.mrf.mxu0
        %v1806 = vpop.f32.mrf.mxu0
        %v1807 = vadd.f32 0.0, %v1806
        %v1808 = vpop.f32.mrf.mxu0
        %1809 = vmatprep.mubr.bf16.mxu0 0
        %1810 = vmatmul.mubr.bf16.gmra.mxu0 %v1677
        %v1811 = vpop.f32.mrf.mxu0
        %v1812 = vadd.f32 0.0, %v1811
        %v1813 = vpop.f32.mrf.mxu0
        %v1814 = vpop.f32.mrf.mxu0
        %v1815 = vadd.f32 0.0, %v1814
        %v1816 = vpop.f32.mrf.mxu0
        %1817 = vmatprep.mubr.bf16.mxu0 0
        %1818 = vmatmul.mubr.bf16.gmra.mxu0 %v1680
        %v1819 = vpop.f32.mrf.mxu0
        %v1820 = vadd.f32 0.0, %v1819
        %v1821 = vpop.f32.mrf.mxu0
        %v1822 = vpop.f32.mrf.mxu0
        %v1823 = vadd.f32 0.0, %v1822
        %v1824 = vpop.f32.mrf.mxu0
        %1825 = vmatprep.mubr.bf16.mxu0 0
        %1826 = vmatmul.mubr.bf16.gmra.mxu0 %v1683
        %v1827 = vpop.f32.mrf.mxu0
        %v1828 = vadd.f32 0.0, %v1827
        %v1829 = vpop.f32.mrf.mxu0
        %v1830 = vpop.f32.mrf.mxu0
        %v1831 = vadd.f32 0.0, %v1830
        %v1832 = vpop.f32.mrf.mxu0
        %1833 = vmatprep.mubr.bf16.mxu0 0
        %1834 = vmatmul.mubr.bf16.gmra.mxu0 %v1686
        %v1835 = vpop.f32.mrf.mxu0
        %v1836 = vadd.f32 0.0, %v1835
        %v1837 = vpop.f32.mrf.mxu0
        %v1838 = vpop.f32.mrf.mxu0
        %v1839 = vadd.f32 0.0, %v1838
        %v1840 = vpop.f32.mrf.mxu0
        %1841 = vmatprep.mubr.bf16.mxu0 0
        %1842 = vmatmul.mubr.bf16.gmra.mxu0 %v1689
        %v1843 = vpop.f32.mrf.mxu0
        %v1844 = vadd.f32 0.0, %v1843
        %v1845 = vpop.f32.mrf.mxu0
        %v1846 = vpop.f32.mrf.mxu0
        %v1847 = vadd.f32 0.0, %v1846
        %v1848 = vpop.f32.mrf.mxu0
        %1849 = vmatprep.mubr.bf16.mxu0 0
        %1850 = vmatmul.mubr.bf16.gmra.mxu0 %v1692
        %v1851 = vpop.f32.mrf.mxu0
        %v1852 = vadd.f32 0.0, %v1851
        %v1853 = vpop.f32.mrf.mxu0
        %v1854 = vpop.f32.mrf.mxu0
        %v1855 = vadd.f32 0.0, %v1854
        %v1856 = vpop.f32.mrf.mxu0
        %1857 = vdwg.mxu0
        %v1858 = vadd.f32 %v1564, %v1732
        %v1859 = vadd.f32 %v1565, %v1735
        %v1860 = vadd.f32 %v1566, %v1740
        %v1861 = vadd.f32 %v1567, %v1743
        %v1862 = vadd.f32 %v1568, %v1748
        %v1863 = vadd.f32 %v1569, %v1751
        %v1864 = vadd.f32 %v1570, %v1756
        %v1865 = vadd.f32 %v1571, %v1759
        %v1866 = vadd.f32 %v1572, %v1764
        %v1867 = vadd.f32 %v1573, %v1767
        %v1868 = vadd.f32 %v1574, %v1772
        %v1869 = vadd.f32 %v1575, %v1775
        %v1870 = vadd.f32 %v1576, %v1780
        %v1871 = vadd.f32 %v1577, %v1783
        %v1872 = vadd.f32 %v1578, %v1788
        %v1873 = vadd.f32 %v1579, %v1791
        %v1874 = vadd.f32 %v1580, %v1796
        %v1875 = vadd.f32 %v1581, %v1799
        %v1876 = vadd.f32 %v1582, %v1804
        %v1877 = vadd.f32 %v1583, %v1807
        %v1878 = vadd.f32 %v1584, %v1812
        %v1879 = vadd.f32 %v1585, %v1815
        %v1880 = vadd.f32 %v1586, %v1820
        %v1881 = vadd.f32 %v1587, %v1823
        %v1882 = vadd.f32 %v1588, %v1828
        %v1883 = vadd.f32 %v1589, %v1831
        %v1884 = vadd.f32 %v1590, %v1836
        %v1885 = vadd.f32 %v1591, %v1839
        %v1886 = vadd.f32 %v1592, %v1844
        %v1887 = vadd.f32 %v1593, %v1847
        %v1888 = vadd.f32 %v1594, %v1852
        %v1889 = vadd.f32 %v1595, %v1855
        %v1890 = vld [vmem:[%s745 + $0x8] sm:$0xff]
        %v1891 = vld [vmem:[%s745 + $0x10] sm:$0xff]
        %v1892 = vld [vmem:[%s745 + $0x28] sm:$0xff]
        %v1893 = vld [vmem:[%s745 + $0x30] sm:$0xff]
        %v1894 = vld [vmem:[%s745 + $0x48] sm:$0xff]
        %v1895 = vld [vmem:[%s745 + $0x50] sm:$0xff]
        %v1896 = vld [vmem:[%s745 + $0x68] sm:$0xff]
        %v1897 = vld [vmem:[%s745 + $0x70] sm:$0xff]
        %v1898 = vld [vmem:[%s745 + $0x88] sm:$0xff]
        %v1899 = vld [vmem:[%s745 + $0x90] sm:$0xff]
        %v1900 = vld [vmem:[%s745 + $0xa8] sm:$0xff]
        %v1901 = vld [vmem:[%s745 + $0xb0] sm:$0xff]
        %v1902 = vld [vmem:[%s745 + $0xc8] sm:$0xff]
        %v1903 = vld [vmem:[%s745 + $0xd0] sm:$0xff]
        %v1904 = vld [vmem:[%s745 + $0xe8] sm:$0xff]
        %v1905 = vld [vmem:[%s745 + $0xf0] sm:$0xff]
        %v1906 = vld [vmem:[%s745 + $0x108] sm:$0xff]
        %v1907 = vld [vmem:[%s745 + $0x110] sm:$0xff]
        %v1908 = vld [vmem:[%s745 + $0x128] sm:$0xff]
        %v1909 = vld [vmem:[%s745 + $0x130] sm:$0xff]
        %v1910 = vld [vmem:[%s745 + $0x148] sm:$0xff]
        %v1911 = vld [vmem:[%s745 + $0x150] sm:$0xff]
        %v1912 = vld [vmem:[%s745 + $0x168] sm:$0xff]
        %v1913 = vld [vmem:[%s745 + $0x170] sm:$0xff]
        %v1914 = vld [vmem:[%s745 + $0x188] sm:$0xff]
        %v1915 = vld [vmem:[%s745 + $0x190] sm:$0xff]
        %v1916 = vld [vmem:[%s745 + $0x1a8] sm:$0xff]
        %v1917 = vld [vmem:[%s745 + $0x1b0] sm:$0xff]
        %v1918 = vld [vmem:[%s745 + $0x1c8] sm:$0xff]
        %v1919 = vld [vmem:[%s745 + $0x1d0] sm:$0xff]
        %v1920 = vld [vmem:[%s745 + $0x1e8] sm:$0xff]
        %v1921 = vld [vmem:[%s745 + $0x1f0] sm:$0xff]
        %v1922 = vpack.c.bf16 %v1891, %v1890
        %v1923 = vpack.c.bf16 %v1893, %v1892
        %v1924 = vpack.c.bf16 %v1895, %v1894
        %v1925 = vpack.c.bf16 %v1897, %v1896
        %v1926 = vpack.c.bf16 %v1899, %v1898
        %v1927 = vpack.c.bf16 %v1901, %v1900
        %v1928 = vpack.c.bf16 %v1903, %v1902
        %v1929 = vpack.c.bf16 %v1905, %v1904
        %v1930 = vpack.c.bf16 %v1907, %v1906
        %v1931 = vpack.c.bf16 %v1909, %v1908
        %v1932 = vpack.c.bf16 %v1911, %v1910
        %v1933 = vpack.c.bf16 %v1913, %v1912
        %v1934 = vpack.c.bf16 %v1915, %v1914
        %v1935 = vpack.c.bf16 %v1917, %v1916
        %v1936 = vpack.c.bf16 %v1919, %v1918
        %v1937 = vpack.c.bf16 %v1921, %v1920
        %s1938 = scalar_lea.vmem %s3, 16
        %v1939 = vld [vmem:[%s1938] sm:$0xf]
        %v1941 = vsel %vm671, %v1922, 0
        %v1944 = vsel %vm671, %v1923, 0
        %v1947 = vsel %vm671, %v1924, 0
        %v1950 = vsel %vm671, %v1925, 0
        %v1953 = vsel %vm671, %v1926, 0
        %v1956 = vsel %vm671, %v1927, 0
        %v1959 = vsel %vm671, %v1928, 0
        %v1962 = vsel %vm671, %v1929, 0
        %v1965 = vsel %vm671, %v1930, 0
        %v1968 = vsel %vm671, %v1931, 0
        %v1971 = vsel %vm671, %v1932, 0
        %v1974 = vsel %vm671, %v1933, 0
        %v1977 = vsel %vm671, %v1934, 0
        %v1980 = vsel %vm671, %v1935, 0
        %v1983 = vsel %vm671, %v1936, 0
        %v1986 = vsel %vm671, %v1937, 0
        %v1989 = vsel %vm925, %v1939, 0
        %1991 = vmatprep.subr.bf16.mxu0 0
        %1992 = vmatpush1.bf16.msra.mxu0 0
        %1993 = vmatprep.subr.bf16.mxu0 0
        %1994 = vmatpush1.bf16.msra.mxu0 0
        %1995 = vmatprep.subr.bf16.mxu0 0
        %1996 = vmatpush1.bf16.msra.mxu0 0
        %1997 = vmatprep.subr.bf16.mxu0 0
        %1998 = vmatpush1.bf16.msra.mxu0 0
        %1999 = vmatprep.subr.bf16.mxu0 0
        %2000 = vmatpush1.bf16.msra.mxu0 0
        %2001 = vmatprep.subr.bf16.mxu0 0
        %2002 = vmatpush1.bf16.msra.mxu0 0
        %2003 = vmatprep.subr.bf16.mxu0 0
        %2004 = vmatpush1.bf16.msra.mxu0 0
        %2005 = vmatprep.subr.bf16.mxu0 0
        %2006 = vmatpush1.bf16.msra.mxu0 %v1989
        %2007 = vmatprep.subr.bf16.mxu0 0
        %2008 = vmatpush2.bf16.msra.mxu0 0
        %2009 = vmatprep.subr.bf16.mxu0 0
        %2010 = vmatpush2.bf16.msra.mxu0 0
        %2011 = vmatprep.subr.bf16.mxu0 0
        %2012 = vmatpush2.bf16.msra.mxu0 0
        %2013 = vmatprep.subr.bf16.mxu0 0
        %2014 = vmatpush2.bf16.msra.mxu0 0
        %2015 = vmatprep.subr.bf16.mxu0 0
        %2016 = vmatpush2.bf16.msra.mxu0 0
        %2017 = vmatprep.subr.bf16.mxu0 0
        %2018 = vmatpush2.bf16.msra.mxu0 0
        %2019 = vmatprep.subr.bf16.mxu0 0
        %2020 = vmatpush2.bf16.msra.mxu0 0
        %2021 = vmatprep.subr.bf16.mxu0 0
        %2022 = vmatpush2.bf16.msra.mxu0 0
        %2023 = vmatprep.mubr.bf16.mxu0 0
        %2024 = vmatmul.mubr.bf16.gmra.mxu0 %v1941
        %v2025 = vpop.f32.mrf.mxu0
        %v2026 = vadd.f32 0.0, %v2025
        %v2027 = vpop.f32.mrf.mxu0
        %v2028 = vpop.f32.mrf.mxu0
        %v2029 = vadd.f32 0.0, %v2028
        %v2030 = vpop.f32.mrf.mxu0
        %2031 = vmatprep.mubr.bf16.mxu0 0
        %2032 = vmatmul.mubr.bf16.gmra.mxu0 %v1944
        %v2033 = vpop.f32.mrf.mxu0
        %v2034 = vadd.f32 0.0, %v2033
        %v2035 = vpop.f32.mrf.mxu0
        %v2036 = vpop.f32.mrf.mxu0
        %v2037 = vadd.f32 0.0, %v2036
        %v2038 = vpop.f32.mrf.mxu0
        %2039 = vmatprep.mubr.bf16.mxu0 0
        %2040 = vmatmul.mubr.bf16.gmra.mxu0 %v1947
        %v2041 = vpop.f32.mrf.mxu0
        %v2042 = vadd.f32 0.0, %v2041
        %v2043 = vpop.f32.mrf.mxu0
        %v2044 = vpop.f32.mrf.mxu0
        %v2045 = vadd.f32 0.0, %v2044
        %v2046 = vpop.f32.mrf.mxu0
        %2047 = vmatprep.mubr.bf16.mxu0 0
        %2048 = vmatmul.mubr.bf16.gmra.mxu0 %v1950
        %v2049 = vpop.f32.mrf.mxu0
        %v2050 = vadd.f32 0.0, %v2049
        %v2051 = vpop.f32.mrf.mxu0
        %v2052 = vpop.f32.mrf.mxu0
        %v2053 = vadd.f32 0.0, %v2052
        %v2054 = vpop.f32.mrf.mxu0
        %2055 = vmatprep.mubr.bf16.mxu0 0
        %2056 = vmatmul.mubr.bf16.gmra.mxu0 %v1953
        %v2057 = vpop.f32.mrf.mxu0
        %v2058 = vadd.f32 0.0, %v2057
        %v2059 = vpop.f32.mrf.mxu0
        %v2060 = vpop.f32.mrf.mxu0
        %v2061 = vadd.f32 0.0, %v2060
        %v2062 = vpop.f32.mrf.mxu0
        %2063 = vmatprep.mubr.bf16.mxu0 0
        %2064 = vmatmul.mubr.bf16.gmra.mxu0 %v1956
        %v2065 = vpop.f32.mrf.mxu0
        %v2066 = vadd.f32 0.0, %v2065
        %v2067 = vpop.f32.mrf.mxu0
        %v2068 = vpop.f32.mrf.mxu0
        %v2069 = vadd.f32 0.0, %v2068
        %v2070 = vpop.f32.mrf.mxu0
        %2071 = vmatprep.mubr.bf16.mxu0 0
        %2072 = vmatmul.mubr.bf16.gmra.mxu0 %v1959
        %v2073 = vpop.f32.mrf.mxu0
        %v2074 = vadd.f32 0.0, %v2073
        %v2075 = vpop.f32.mrf.mxu0
        %v2076 = vpop.f32.mrf.mxu0
        %v2077 = vadd.f32 0.0, %v2076
        %v2078 = vpop.f32.mrf.mxu0
        %2079 = vmatprep.mubr.bf16.mxu0 0
        %2080 = vmatmul.mubr.bf16.gmra.mxu0 %v1962
        %v2081 = vpop.f32.mrf.mxu0
        %v2082 = vadd.f32 0.0, %v2081
        %v2083 = vpop.f32.mrf.mxu0
        %v2084 = vpop.f32.mrf.mxu0
        %v2085 = vadd.f32 0.0, %v2084
        %v2086 = vpop.f32.mrf.mxu0
        %2087 = vmatprep.mubr.bf16.mxu0 0
        %2088 = vmatmul.mubr.bf16.gmra.mxu0 %v1965
        %v2089 = vpop.f32.mrf.mxu0
        %v2090 = vadd.f32 0.0, %v2089
        %v2091 = vpop.f32.mrf.mxu0
        %v2092 = vpop.f32.mrf.mxu0
        %v2093 = vadd.f32 0.0, %v2092
        %v2094 = vpop.f32.mrf.mxu0
        %2095 = vmatprep.mubr.bf16.mxu0 0
        %2096 = vmatmul.mubr.bf16.gmra.mxu0 %v1968
        %v2097 = vpop.f32.mrf.mxu0
        %v2098 = vadd.f32 0.0, %v2097
        %v2099 = vpop.f32.mrf.mxu0
        %v2100 = vpop.f32.mrf.mxu0
        %v2101 = vadd.f32 0.0, %v2100
        %v2102 = vpop.f32.mrf.mxu0
        %2103 = vmatprep.mubr.bf16.mxu0 0
        %2104 = vmatmul.mubr.bf16.gmra.mxu0 %v1971
        %v2105 = vpop.f32.mrf.mxu0
        %v2106 = vadd.f32 0.0, %v2105
        %v2107 = vpop.f32.mrf.mxu0
        %v2108 = vpop.f32.mrf.mxu0
        %v2109 = vadd.f32 0.0, %v2108
        %v2110 = vpop.f32.mrf.mxu0
        %2111 = vmatprep.mubr.bf16.mxu0 0
        %2112 = vmatmul.mubr.bf16.gmra.mxu0 %v1974
        %v2113 = vpop.f32.mrf.mxu0
        %v2114 = vadd.f32 0.0, %v2113
        %v2115 = vpop.f32.mrf.mxu0
        %v2116 = vpop.f32.mrf.mxu0
        %v2117 = vadd.f32 0.0, %v2116
        %v2118 = vpop.f32.mrf.mxu0
        %2119 = vmatprep.mubr.bf16.mxu0 0
        %2120 = vmatmul.mubr.bf16.gmra.mxu0 %v1977
        %v2121 = vpop.f32.mrf.mxu0
        %v2122 = vadd.f32 0.0, %v2121
        %v2123 = vpop.f32.mrf.mxu0
        %v2124 = vpop.f32.mrf.mxu0
        %v2125 = vadd.f32 0.0, %v2124
        %v2126 = vpop.f32.mrf.mxu0
        %2127 = vmatprep.mubr.bf16.mxu0 0
        %2128 = vmatmul.mubr.bf16.gmra.mxu0 %v1980
        %v2129 = vpop.f32.mrf.mxu0
        %v2130 = vadd.f32 0.0, %v2129
        %v2131 = vpop.f32.mrf.mxu0
        %v2132 = vpop.f32.mrf.mxu0
        %v2133 = vadd.f32 0.0, %v2132
        %v2134 = vpop.f32.mrf.mxu0
        %2135 = vmatprep.mubr.bf16.mxu0 0
        %2136 = vmatmul.mubr.bf16.gmra.mxu0 %v1983
        %v2137 = vpop.f32.mrf.mxu0
        %v2138 = vadd.f32 0.0, %v2137
        %v2139 = vpop.f32.mrf.mxu0
        %v2140 = vpop.f32.mrf.mxu0
        %v2141 = vadd.f32 0.0, %v2140
        %v2142 = vpop.f32.mrf.mxu0
        %2143 = vmatprep.mubr.bf16.mxu0 0
        %2144 = vmatmul.mubr.bf16.gmra.mxu0 %v1986
        %v2145 = vpop.f32.mrf.mxu0
        %v2146 = vadd.f32 0.0, %v2145
        %v2147 = vpop.f32.mrf.mxu0
        %v2148 = vpop.f32.mrf.mxu0
        %v2149 = vadd.f32 0.0, %v2148
        %v2150 = vpop.f32.mrf.mxu0
        %2151 = vdwg.mxu0
        %v2152 = vadd.f32 %v1858, %v2026
        %v2153 = vadd.f32 %v1859, %v2029
        %v2154 = vadd.f32 %v1860, %v2034
        %v2155 = vadd.f32 %v1861, %v2037
        %v2156 = vadd.f32 %v1862, %v2042
        %v2157 = vadd.f32 %v1863, %v2045
        %v2158 = vadd.f32 %v1864, %v2050
        %v2159 = vadd.f32 %v1865, %v2053
        %v2160 = vadd.f32 %v1866, %v2058
        %v2161 = vadd.f32 %v1867, %v2061
        %v2162 = vadd.f32 %v1868, %v2066
        %v2163 = vadd.f32 %v1869, %v2069
        %v2164 = vadd.f32 %v1870, %v2074
        %v2165 = vadd.f32 %v1871, %v2077
        %v2166 = vadd.f32 %v1872, %v2082
        %v2167 = vadd.f32 %v1873, %v2085
        %v2168 = vadd.f32 %v1874, %v2090
        %v2169 = vadd.f32 %v1875, %v2093
        %v2170 = vadd.f32 %v1876, %v2098
        %v2171 = vadd.f32 %v1877, %v2101
        %v2172 = vadd.f32 %v1878, %v2106
        %v2173 = vadd.f32 %v1879, %v2109
        %v2174 = vadd.f32 %v1880, %v2114
        %v2175 = vadd.f32 %v1881, %v2117
        %v2176 = vadd.f32 %v1882, %v2122
        %v2177 = vadd.f32 %v1883, %v2125
        %v2178 = vadd.f32 %v1884, %v2130
        %v2179 = vadd.f32 %v1885, %v2133
        %v2180 = vadd.f32 %v1886, %v2138
        %v2181 = vadd.f32 %v1887, %v2141
        %v2182 = vadd.f32 %v1888, %v2146
        %v2183 = vadd.f32 %v1889, %v2149
        %v2184 = vld [vmem:[%s745 + $0x9] sm:$0xff]
        %v2185 = vld [vmem:[%s745 + $0x11] sm:$0xff]
        %v2186 = vld [vmem:[%s745 + $0x29] sm:$0xff]
        %v2187 = vld [vmem:[%s745 + $0x31] sm:$0xff]
        %v2188 = vld [vmem:[%s745 + $0x49] sm:$0xff]
        %v2189 = vld [vmem:[%s745 + $0x51] sm:$0xff]
        %v2190 = vld [vmem:[%s745 + $0x69] sm:$0xff]
        %v2191 = vld [vmem:[%s745 + $0x71] sm:$0xff]
        %v2192 = vld [vmem:[%s745 + $0x89] sm:$0xff]
        %v2193 = vld [vmem:[%s745 + $0x91] sm:$0xff]
        %v2194 = vld [vmem:[%s745 + $0xa9] sm:$0xff]
        %v2195 = vld [vmem:[%s745 + $0xb1] sm:$0xff]
        %v2196 = vld [vmem:[%s745 + $0xc9] sm:$0xff]
        %v2197 = vld [vmem:[%s745 + $0xd1] sm:$0xff]
        %v2198 = vld [vmem:[%s745 + $0xe9] sm:$0xff]
        %v2199 = vld [vmem:[%s745 + $0xf1] sm:$0xff]
        %v2200 = vld [vmem:[%s745 + $0x109] sm:$0xff]
        %v2201 = vld [vmem:[%s745 + $0x111] sm:$0xff]
        %v2202 = vld [vmem:[%s745 + $0x129] sm:$0xff]
        %v2203 = vld [vmem:[%s745 + $0x131] sm:$0xff]
        %v2204 = vld [vmem:[%s745 + $0x149] sm:$0xff]
        %v2205 = vld [vmem:[%s745 + $0x151] sm:$0xff]
        %v2206 = vld [vmem:[%s745 + $0x169] sm:$0xff]
        %v2207 = vld [vmem:[%s745 + $0x171] sm:$0xff]
        %v2208 = vld [vmem:[%s745 + $0x189] sm:$0xff]
        %v2209 = vld [vmem:[%s745 + $0x191] sm:$0xff]
        %v2210 = vld [vmem:[%s745 + $0x1a9] sm:$0xff]
        %v2211 = vld [vmem:[%s745 + $0x1b1] sm:$0xff]
        %v2212 = vld [vmem:[%s745 + $0x1c9] sm:$0xff]
        %v2213 = vld [vmem:[%s745 + $0x1d1] sm:$0xff]
        %v2214 = vld [vmem:[%s745 + $0x1e9] sm:$0xff]
        %v2215 = vld [vmem:[%s745 + $0x1f1] sm:$0xff]
        %v2216 = vpack.c.bf16 %v2185, %v2184
        %v2217 = vpack.c.bf16 %v2187, %v2186
        %v2218 = vpack.c.bf16 %v2189, %v2188
        %v2219 = vpack.c.bf16 %v2191, %v2190
        %v2220 = vpack.c.bf16 %v2193, %v2192
        %v2221 = vpack.c.bf16 %v2195, %v2194
        %v2222 = vpack.c.bf16 %v2197, %v2196
        %v2223 = vpack.c.bf16 %v2199, %v2198
        %v2224 = vpack.c.bf16 %v2201, %v2200
        %v2225 = vpack.c.bf16 %v2203, %v2202
        %v2226 = vpack.c.bf16 %v2205, %v2204
        %v2227 = vpack.c.bf16 %v2207, %v2206
        %v2228 = vpack.c.bf16 %v2209, %v2208
        %v2229 = vpack.c.bf16 %v2211, %v2210
        %v2230 = vpack.c.bf16 %v2213, %v2212
        %v2231 = vpack.c.bf16 %v2215, %v2214
        %s2232 = scalar_lea.vmem %s3, 20
        %v2233 = vld [vmem:[%s2232] sm:$0xf]
        %v2235 = vsel %vm671, %v2216, 0
        %v2238 = vsel %vm671, %v2217, 0
        %v2241 = vsel %vm671, %v2218, 0
        %v2244 = vsel %vm671, %v2219, 0
        %v2247 = vsel %vm671, %v2220, 0
        %v2250 = vsel %vm671, %v2221, 0
        %v2253 = vsel %vm671, %v2222, 0
        %v2256 = vsel %vm671, %v2223, 0
        %v2259 = vsel %vm671, %v2224, 0
        %v2262 = vsel %vm671, %v2225, 0
        %v2265 = vsel %vm671, %v2226, 0
        %v2268 = vsel %vm671, %v2227, 0
        %v2271 = vsel %vm671, %v2228, 0
        %v2274 = vsel %vm671, %v2229, 0
        %v2277 = vsel %vm671, %v2230, 0
        %v2280 = vsel %vm671, %v2231, 0
        %v2283 = vsel %vm925, %v2233, 0
        %2285 = vmatprep.subr.bf16.mxu0 0
        %2286 = vmatpush1.bf16.msra.mxu0 0
        %2287 = vmatprep.subr.bf16.mxu0 0
        %2288 = vmatpush1.bf16.msra.mxu0 0
        %2289 = vmatprep.subr.bf16.mxu0 0
        %2290 = vmatpush1.bf16.msra.mxu0 0
        %2291 = vmatprep.subr.bf16.mxu0 0
        %2292 = vmatpush1.bf16.msra.mxu0 0
        %2293 = vmatprep.subr.bf16.mxu0 0
        %2294 = vmatpush1.bf16.msra.mxu0 0
        %2295 = vmatprep.subr.bf16.mxu0 0
        %2296 = vmatpush1.bf16.msra.mxu0 0
        %2297 = vmatprep.subr.bf16.mxu0 0
        %2298 = vmatpush1.bf16.msra.mxu0 0
        %2299 = vmatprep.subr.bf16.mxu0 0
        %2300 = vmatpush1.bf16.msra.mxu0 %v2283
        %2301 = vmatprep.subr.bf16.mxu0 0
        %2302 = vmatpush2.bf16.msra.mxu0 0
        %2303 = vmatprep.subr.bf16.mxu0 0
        %2304 = vmatpush2.bf16.msra.mxu0 0
        %2305 = vmatprep.subr.bf16.mxu0 0
        %2306 = vmatpush2.bf16.msra.mxu0 0
        %2307 = vmatprep.subr.bf16.mxu0 0
        %2308 = vmatpush2.bf16.msra.mxu0 0
        %2309 = vmatprep.subr.bf16.mxu0 0
        %2310 = vmatpush2.bf16.msra.mxu0 0
        %2311 = vmatprep.subr.bf16.mxu0 0
        %2312 = vmatpush2.bf16.msra.mxu0 0
        %2313 = vmatprep.subr.bf16.mxu0 0
        %2314 = vmatpush2.bf16.msra.mxu0 0
        %2315 = vmatprep.subr.bf16.mxu0 0
        %2316 = vmatpush2.bf16.msra.mxu0 0
        %2317 = vmatprep.mubr.bf16.mxu0 0
        %2318 = vmatmul.mubr.bf16.gmra.mxu0 %v2235
        %v2319 = vpop.f32.mrf.mxu0
        %v2320 = vadd.f32 0.0, %v2319
        %v2321 = vpop.f32.mrf.mxu0
        %v2322 = vpop.f32.mrf.mxu0
        %v2323 = vadd.f32 0.0, %v2322
        %v2324 = vpop.f32.mrf.mxu0
        %2325 = vmatprep.mubr.bf16.mxu0 0
        %2326 = vmatmul.mubr.bf16.gmra.mxu0 %v2238
        %v2327 = vpop.f32.mrf.mxu0
        %v2328 = vadd.f32 0.0, %v2327
        %v2329 = vpop.f32.mrf.mxu0
        %v2330 = vpop.f32.mrf.mxu0
        %v2331 = vadd.f32 0.0, %v2330
        %v2332 = vpop.f32.mrf.mxu0
        %2333 = vmatprep.mubr.bf16.mxu0 0
        %2334 = vmatmul.mubr.bf16.gmra.mxu0 %v2241
        %v2335 = vpop.f32.mrf.mxu0
        %v2336 = vadd.f32 0.0, %v2335
        %v2337 = vpop.f32.mrf.mxu0
        %v2338 = vpop.f32.mrf.mxu0
        %v2339 = vadd.f32 0.0, %v2338
        %v2340 = vpop.f32.mrf.mxu0
        %2341 = vmatprep.mubr.bf16.mxu0 0
        %2342 = vmatmul.mubr.bf16.gmra.mxu0 %v2244
        %v2343 = vpop.f32.mrf.mxu0
        %v2344 = vadd.f32 0.0, %v2343
        %v2345 = vpop.f32.mrf.mxu0
        %v2346 = vpop.f32.mrf.mxu0
        %v2347 = vadd.f32 0.0, %v2346
        %v2348 = vpop.f32.mrf.mxu0
        %2349 = vmatprep.mubr.bf16.mxu0 0
        %2350 = vmatmul.mubr.bf16.gmra.mxu0 %v2247
        %v2351 = vpop.f32.mrf.mxu0
        %v2352 = vadd.f32 0.0, %v2351
        %v2353 = vpop.f32.mrf.mxu0
        %v2354 = vpop.f32.mrf.mxu0
        %v2355 = vadd.f32 0.0, %v2354
        %v2356 = vpop.f32.mrf.mxu0
        %2357 = vmatprep.mubr.bf16.mxu0 0
        %2358 = vmatmul.mubr.bf16.gmra.mxu0 %v2250
        %v2359 = vpop.f32.mrf.mxu0
        %v2360 = vadd.f32 0.0, %v2359
        %v2361 = vpop.f32.mrf.mxu0
        %v2362 = vpop.f32.mrf.mxu0
        %v2363 = vadd.f32 0.0, %v2362
        %v2364 = vpop.f32.mrf.mxu0
        %2365 = vmatprep.mubr.bf16.mxu0 0
        %2366 = vmatmul.mubr.bf16.gmra.mxu0 %v2253
        %v2367 = vpop.f32.mrf.mxu0
        %v2368 = vadd.f32 0.0, %v2367
        %v2369 = vpop.f32.mrf.mxu0
        %v2370 = vpop.f32.mrf.mxu0
        %v2371 = vadd.f32 0.0, %v2370
        %v2372 = vpop.f32.mrf.mxu0
        %2373 = vmatprep.mubr.bf16.mxu0 0
        %2374 = vmatmul.mubr.bf16.gmra.mxu0 %v2256
        %v2375 = vpop.f32.mrf.mxu0
        %v2376 = vadd.f32 0.0, %v2375
        %v2377 = vpop.f32.mrf.mxu0
        %v2378 = vpop.f32.mrf.mxu0
        %v2379 = vadd.f32 0.0, %v2378
        %v2380 = vpop.f32.mrf.mxu0
        %2381 = vmatprep.mubr.bf16.mxu0 0
        %2382 = vmatmul.mubr.bf16.gmra.mxu0 %v2259
        %v2383 = vpop.f32.mrf.mxu0
        %v2384 = vadd.f32 0.0, %v2383
        %v2385 = vpop.f32.mrf.mxu0
        %v2386 = vpop.f32.mrf.mxu0
        %v2387 = vadd.f32 0.0, %v2386
        %v2388 = vpop.f32.mrf.mxu0
        %2389 = vmatprep.mubr.bf16.mxu0 0
        %2390 = vmatmul.mubr.bf16.gmra.mxu0 %v2262
        %v2391 = vpop.f32.mrf.mxu0
        %v2392 = vadd.f32 0.0, %v2391
        %v2393 = vpop.f32.mrf.mxu0
        %v2394 = vpop.f32.mrf.mxu0
        %v2395 = vadd.f32 0.0, %v2394
        %v2396 = vpop.f32.mrf.mxu0
        %2397 = vmatprep.mubr.bf16.mxu0 0
        %2398 = vmatmul.mubr.bf16.gmra.mxu0 %v2265
        %v2399 = vpop.f32.mrf.mxu0
        %v2400 = vadd.f32 0.0, %v2399
        %v2401 = vpop.f32.mrf.mxu0
        %v2402 = vpop.f32.mrf.mxu0
        %v2403 = vadd.f32 0.0, %v2402
        %v2404 = vpop.f32.mrf.mxu0
        %2405 = vmatprep.mubr.bf16.mxu0 0
        %2406 = vmatmul.mubr.bf16.gmra.mxu0 %v2268
        %v2407 = vpop.f32.mrf.mxu0
        %v2408 = vadd.f32 0.0, %v2407
        %v2409 = vpop.f32.mrf.mxu0
        %v2410 = vpop.f32.mrf.mxu0
        %v2411 = vadd.f32 0.0, %v2410
        %v2412 = vpop.f32.mrf.mxu0
        %2413 = vmatprep.mubr.bf16.mxu0 0
        %2414 = vmatmul.mubr.bf16.gmra.mxu0 %v2271
        %v2415 = vpop.f32.mrf.mxu0
        %v2416 = vadd.f32 0.0, %v2415
        %v2417 = vpop.f32.mrf.mxu0
        %v2418 = vpop.f32.mrf.mxu0
        %v2419 = vadd.f32 0.0, %v2418
        %v2420 = vpop.f32.mrf.mxu0
        %2421 = vmatprep.mubr.bf16.mxu0 0
        %2422 = vmatmul.mubr.bf16.gmra.mxu0 %v2274
        %v2423 = vpop.f32.mrf.mxu0
        %v2424 = vadd.f32 0.0, %v2423
        %v2425 = vpop.f32.mrf.mxu0
        %v2426 = vpop.f32.mrf.mxu0
        %v2427 = vadd.f32 0.0, %v2426
        %v2428 = vpop.f32.mrf.mxu0
        %2429 = vmatprep.mubr.bf16.mxu0 0
        %2430 = vmatmul.mubr.bf16.gmra.mxu0 %v2277
        %v2431 = vpop.f32.mrf.mxu0
        %v2432 = vadd.f32 0.0, %v2431
        %v2433 = vpop.f32.mrf.mxu0
        %v2434 = vpop.f32.mrf.mxu0
        %v2435 = vadd.f32 0.0, %v2434
        %v2436 = vpop.f32.mrf.mxu0
        %2437 = vmatprep.mubr.bf16.mxu0 0
        %2438 = vmatmul.mubr.bf16.gmra.mxu0 %v2280
        %v2439 = vpop.f32.mrf.mxu0
        %v2440 = vadd.f32 0.0, %v2439
        %v2441 = vpop.f32.mrf.mxu0
        %v2442 = vpop.f32.mrf.mxu0
        %v2443 = vadd.f32 0.0, %v2442
        %v2444 = vpop.f32.mrf.mxu0
        %2445 = vdwg.mxu0
        %v2446 = vadd.f32 %v2152, %v2320
        %v2447 = vadd.f32 %v2153, %v2323
        %v2448 = vadd.f32 %v2154, %v2328
        %v2449 = vadd.f32 %v2155, %v2331
        %v2450 = vadd.f32 %v2156, %v2336
        %v2451 = vadd.f32 %v2157, %v2339
        %v2452 = vadd.f32 %v2158, %v2344
        %v2453 = vadd.f32 %v2159, %v2347
        %v2454 = vadd.f32 %v2160, %v2352
        %v2455 = vadd.f32 %v2161, %v2355
        %v2456 = vadd.f32 %v2162, %v2360
        %v2457 = vadd.f32 %v2163, %v2363
        %v2458 = vadd.f32 %v2164, %v2368
        %v2459 = vadd.f32 %v2165, %v2371
        %v2460 = vadd.f32 %v2166, %v2376
        %v2461 = vadd.f32 %v2167, %v2379
        %v2462 = vadd.f32 %v2168, %v2384
        %v2463 = vadd.f32 %v2169, %v2387
        %v2464 = vadd.f32 %v2170, %v2392
        %v2465 = vadd.f32 %v2171, %v2395
        %v2466 = vadd.f32 %v2172, %v2400
        %v2467 = vadd.f32 %v2173, %v2403
        %v2468 = vadd.f32 %v2174, %v2408
        %v2469 = vadd.f32 %v2175, %v2411
        %v2470 = vadd.f32 %v2176, %v2416
        %v2471 = vadd.f32 %v2177, %v2419
        %v2472 = vadd.f32 %v2178, %v2424
        %v2473 = vadd.f32 %v2179, %v2427
        %v2474 = vadd.f32 %v2180, %v2432
        %v2475 = vadd.f32 %v2181, %v2435
        %v2476 = vadd.f32 %v2182, %v2440
        %v2477 = vadd.f32 %v2183, %v2443
        %s2478 = scalar_lea.vmem [#allocation2], 64
        %v2479 = vld [vmem:[%s2478 + $0x7] sm:$0xff]
        %v2480 = vld [vmem:[%s2478 + $0xf] sm:$0xff]
        %v2481 = vld [vmem:[%s2478 + $0x27] sm:$0xff]
        %v2482 = vld [vmem:[%s2478 + $0x2f] sm:$0xff]
        %v2483 = vld [vmem:[%s2478 + $0x47] sm:$0xff]
        %v2484 = vld [vmem:[%s2478 + $0x4f] sm:$0xff]
        %v2485 = vld [vmem:[%s2478 + $0x67] sm:$0xff]
        %v2486 = vld [vmem:[%s2478 + $0x6f] sm:$0xff]
        %v2487 = vld [vmem:[%s2478 + $0x87] sm:$0xff]
        %v2488 = vld [vmem:[%s2478 + $0x8f] sm:$0xff]
        %v2489 = vld [vmem:[%s2478 + $0xa7] sm:$0xff]
        %v2490 = vld [vmem:[%s2478 + $0xaf] sm:$0xff]
        %v2491 = vld [vmem:[%s2478 + $0xc7] sm:$0xff]
        %v2492 = vld [vmem:[%s2478 + $0xcf] sm:$0xff]
        %v2493 = vld [vmem:[%s2478 + $0xe7] sm:$0xff]
        %v2494 = vld [vmem:[%s2478 + $0xef] sm:$0xff]
        %v2495 = vld [vmem:[%s2478 + $0x107] sm:$0xff]
        %v2496 = vld [vmem:[%s2478 + $0x10f] sm:$0xff]
        %v2497 = vld [vmem:[%s2478 + $0x127] sm:$0xff]
        %v2498 = vld [vmem:[%s2478 + $0x12f] sm:$0xff]
        %v2499 = vld [vmem:[%s2478 + $0x147] sm:$0xff]
        %v2500 = vld [vmem:[%s2478 + $0x14f] sm:$0xff]
        %v2501 = vld [vmem:[%s2478 + $0x167] sm:$0xff]
        %v2502 = vld [vmem:[%s2478 + $0x16f] sm:$0xff]
        %v2503 = vld [vmem:[%s2478 + $0x187] sm:$0xff]
        %v2504 = vld [vmem:[%s2478 + $0x18f] sm:$0xff]
        %v2505 = vld [vmem:[%s2478 + $0x1a7] sm:$0xff]
        %v2506 = vld [vmem:[%s2478 + $0x1af] sm:$0xff]
        %v2507 = vld [vmem:[%s2478 + $0x1c7] sm:$0xff]
        %v2508 = vld [vmem:[%s2478 + $0x1cf] sm:$0xff]
        %v2509 = vld [vmem:[%s2478 + $0x1e7] sm:$0xff]
        %v2510 = vld [vmem:[%s2478 + $0x1ef] sm:$0xff]
        %v2511 = vpack.c.bf16 %v2480, %v2479
        %v2512 = vpack.c.bf16 %v2482, %v2481
        %v2513 = vpack.c.bf16 %v2484, %v2483
        %v2514 = vpack.c.bf16 %v2486, %v2485
        %v2515 = vpack.c.bf16 %v2488, %v2487
        %v2516 = vpack.c.bf16 %v2490, %v2489
        %v2517 = vpack.c.bf16 %v2492, %v2491
        %v2518 = vpack.c.bf16 %v2494, %v2493
        %v2519 = vpack.c.bf16 %v2496, %v2495
        %v2520 = vpack.c.bf16 %v2498, %v2497
        %v2521 = vpack.c.bf16 %v2500, %v2499
        %v2522 = vpack.c.bf16 %v2502, %v2501
        %v2523 = vpack.c.bf16 %v2504, %v2503
        %v2524 = vpack.c.bf16 %v2506, %v2505
        %v2525 = vpack.c.bf16 %v2508, %v2507
        %v2526 = vpack.c.bf16 %v2510, %v2509
        %s2527 = scalar_lea.vmem %s3, 24
        %v2528 = vld [vmem:[%s2527] sm:$0xf]
        %v2530 = vsel %vm671, %v2511, 0
        %v2533 = vsel %vm671, %v2512, 0
        %v2536 = vsel %vm671, %v2513, 0
        %v2539 = vsel %vm671, %v2514, 0
        %v2542 = vsel %vm671, %v2515, 0
        %v2545 = vsel %vm671, %v2516, 0
        %v2548 = vsel %vm671, %v2517, 0
        %v2551 = vsel %vm671, %v2518, 0
        %v2554 = vsel %vm671, %v2519, 0
        %v2557 = vsel %vm671, %v2520, 0
        %v2560 = vsel %vm671, %v2521, 0
        %v2563 = vsel %vm671, %v2522, 0
        %v2566 = vsel %vm671, %v2523, 0
        %v2569 = vsel %vm671, %v2524, 0
        %v2572 = vsel %vm671, %v2525, 0
        %v2575 = vsel %vm671, %v2526, 0
        %v2578 = vsel %vm925, %v2528, 0
        %2580 = vmatprep.subr.bf16.mxu0 0
        %2581 = vmatpush1.bf16.msra.mxu0 0
        %2582 = vmatprep.subr.bf16.mxu0 0
        %2583 = vmatpush1.bf16.msra.mxu0 0
        %2584 = vmatprep.subr.bf16.mxu0 0
        %2585 = vmatpush1.bf16.msra.mxu0 0
        %2586 = vmatprep.subr.bf16.mxu0 0
        %2587 = vmatpush1.bf16.msra.mxu0 0
        %2588 = vmatprep.subr.bf16.mxu0 0
        %2589 = vmatpush1.bf16.msra.mxu0 0
        %2590 = vmatprep.subr.bf16.mxu0 0
        %2591 = vmatpush1.bf16.msra.mxu0 0
        %2592 = vmatprep.subr.bf16.mxu0 0
        %2593 = vmatpush1.bf16.msra.mxu0 0
        %2594 = vmatprep.subr.bf16.mxu0 0
        %2595 = vmatpush1.bf16.msra.mxu0 %v2578
        %2596 = vmatprep.subr.bf16.mxu0 0
        %2597 = vmatpush2.bf16.msra.mxu0 0
        %2598 = vmatprep.subr.bf16.mxu0 0
        %2599 = vmatpush2.bf16.msra.mxu0 0
        %2600 = vmatprep.subr.bf16.mxu0 0
        %2601 = vmatpush2.bf16.msra.mxu0 0
        %2602 = vmatprep.subr.bf16.mxu0 0
        %2603 = vmatpush2.bf16.msra.mxu0 0
        %2604 = vmatprep.subr.bf16.mxu0 0
        %2605 = vmatpush2.bf16.msra.mxu0 0
        %2606 = vmatprep.subr.bf16.mxu0 0
        %2607 = vmatpush2.bf16.msra.mxu0 0
        %2608 = vmatprep.subr.bf16.mxu0 0
        %2609 = vmatpush2.bf16.msra.mxu0 0
        %2610 = vmatprep.subr.bf16.mxu0 0
        %2611 = vmatpush2.bf16.msra.mxu0 0
        %2612 = vmatprep.mubr.bf16.mxu0 0
        %2613 = vmatmul.mubr.bf16.gmra.mxu0 %v2530
        %v2614 = vpop.f32.mrf.mxu0
        %v2615 = vadd.f32 0.0, %v2614
        %v2616 = vpop.f32.mrf.mxu0
        %v2617 = vpop.f32.mrf.mxu0
        %v2618 = vadd.f32 0.0, %v2617
        %v2619 = vpop.f32.mrf.mxu0
        %2620 = vmatprep.mubr.bf16.mxu0 0
        %2621 = vmatmul.mubr.bf16.gmra.mxu0 %v2533
        %v2622 = vpop.f32.mrf.mxu0
        %v2623 = vadd.f32 0.0, %v2622
        %v2624 = vpop.f32.mrf.mxu0
        %v2625 = vpop.f32.mrf.mxu0
        %v2626 = vadd.f32 0.0, %v2625
        %v2627 = vpop.f32.mrf.mxu0
        %2628 = vmatprep.mubr.bf16.mxu0 0
        %2629 = vmatmul.mubr.bf16.gmra.mxu0 %v2536
        %v2630 = vpop.f32.mrf.mxu0
        %v2631 = vadd.f32 0.0, %v2630
        %v2632 = vpop.f32.mrf.mxu0
        %v2633 = vpop.f32.mrf.mxu0
        %v2634 = vadd.f32 0.0, %v2633
        %v2635 = vpop.f32.mrf.mxu0
        %2636 = vmatprep.mubr.bf16.mxu0 0
        %2637 = vmatmul.mubr.bf16.gmra.mxu0 %v2539
        %v2638 = vpop.f32.mrf.mxu0
        %v2639 = vadd.f32 0.0, %v2638
        %v2640 = vpop.f32.mrf.mxu0
        %v2641 = vpop.f32.mrf.mxu0
        %v2642 = vadd.f32 0.0, %v2641
        %v2643 = vpop.f32.mrf.mxu0
        %2644 = vmatprep.mubr.bf16.mxu0 0
        %2645 = vmatmul.mubr.bf16.gmra.mxu0 %v2542
        %v2646 = vpop.f32.mrf.mxu0
        %v2647 = vadd.f32 0.0, %v2646
        %v2648 = vpop.f32.mrf.mxu0
        %v2649 = vpop.f32.mrf.mxu0
        %v2650 = vadd.f32 0.0, %v2649
        %v2651 = vpop.f32.mrf.mxu0
        %2652 = vmatprep.mubr.bf16.mxu0 0
        %2653 = vmatmul.mubr.bf16.gmra.mxu0 %v2545
        %v2654 = vpop.f32.mrf.mxu0
        %v2655 = vadd.f32 0.0, %v2654
        %v2656 = vpop.f32.mrf.mxu0
        %v2657 = vpop.f32.mrf.mxu0
        %v2658 = vadd.f32 0.0, %v2657
        %v2659 = vpop.f32.mrf.mxu0
        %2660 = vmatprep.mubr.bf16.mxu0 0
        %2661 = vmatmul.mubr.bf16.gmra.mxu0 %v2548
        %v2662 = vpop.f32.mrf.mxu0
        %v2663 = vadd.f32 0.0, %v2662
        %v2664 = vpop.f32.mrf.mxu0
        %v2665 = vpop.f32.mrf.mxu0
        %v2666 = vadd.f32 0.0, %v2665
        %v2667 = vpop.f32.mrf.mxu0
        %2668 = vmatprep.mubr.bf16.mxu0 0
        %2669 = vmatmul.mubr.bf16.gmra.mxu0 %v2551
        %v2670 = vpop.f32.mrf.mxu0
        %v2671 = vadd.f32 0.0, %v2670
        %v2672 = vpop.f32.mrf.mxu0
        %v2673 = vpop.f32.mrf.mxu0
        %v2674 = vadd.f32 0.0, %v2673
        %v2675 = vpop.f32.mrf.mxu0
        %2676 = vmatprep.mubr.bf16.mxu0 0
        %2677 = vmatmul.mubr.bf16.gmra.mxu0 %v2554
        %v2678 = vpop.f32.mrf.mxu0
        %v2679 = vadd.f32 0.0, %v2678
        %v2680 = vpop.f32.mrf.mxu0
        %v2681 = vpop.f32.mrf.mxu0
        %v2682 = vadd.f32 0.0, %v2681
        %v2683 = vpop.f32.mrf.mxu0
        %2684 = vmatprep.mubr.bf16.mxu0 0
        %2685 = vmatmul.mubr.bf16.gmra.mxu0 %v2557
        %v2686 = vpop.f32.mrf.mxu0
        %v2687 = vadd.f32 0.0, %v2686
        %v2688 = vpop.f32.mrf.mxu0
        %v2689 = vpop.f32.mrf.mxu0
        %v2690 = vadd.f32 0.0, %v2689
        %v2691 = vpop.f32.mrf.mxu0
        %2692 = vmatprep.mubr.bf16.mxu0 0
        %2693 = vmatmul.mubr.bf16.gmra.mxu0 %v2560
        %v2694 = vpop.f32.mrf.mxu0
        %v2695 = vadd.f32 0.0, %v2694
        %v2696 = vpop.f32.mrf.mxu0
        %v2697 = vpop.f32.mrf.mxu0
        %v2698 = vadd.f32 0.0, %v2697
        %v2699 = vpop.f32.mrf.mxu0
        %2700 = vmatprep.mubr.bf16.mxu0 0
        %2701 = vmatmul.mubr.bf16.gmra.mxu0 %v2563
        %v2702 = vpop.f32.mrf.mxu0
        %v2703 = vadd.f32 0.0, %v2702
        %v2704 = vpop.f32.mrf.mxu0
        %v2705 = vpop.f32.mrf.mxu0
        %v2706 = vadd.f32 0.0, %v2705
        %v2707 = vpop.f32.mrf.mxu0
        %2708 = vmatprep.mubr.bf16.mxu0 0
        %2709 = vmatmul.mubr.bf16.gmra.mxu0 %v2566
        %v2710 = vpop.f32.mrf.mxu0
        %v2711 = vadd.f32 0.0, %v2710
        %v2712 = vpop.f32.mrf.mxu0
        %v2713 = vpop.f32.mrf.mxu0
        %v2714 = vadd.f32 0.0, %v2713
        %v2715 = vpop.f32.mrf.mxu0
        %2716 = vmatprep.mubr.bf16.mxu0 0
        %2717 = vmatmul.mubr.bf16.gmra.mxu0 %v2569
        %v2718 = vpop.f32.mrf.mxu0
        %v2719 = vadd.f32 0.0, %v2718
        %v2720 = vpop.f32.mrf.mxu0
        %v2721 = vpop.f32.mrf.mxu0
        %v2722 = vadd.f32 0.0, %v2721
        %v2723 = vpop.f32.mrf.mxu0
        %2724 = vmatprep.mubr.bf16.mxu0 0
        %2725 = vmatmul.mubr.bf16.gmra.mxu0 %v2572
        %v2726 = vpop.f32.mrf.mxu0
        %v2727 = vadd.f32 0.0, %v2726
        %v2728 = vpop.f32.mrf.mxu0
        %v2729 = vpop.f32.mrf.mxu0
        %v2730 = vadd.f32 0.0, %v2729
        %v2731 = vpop.f32.mrf.mxu0
        %2732 = vmatprep.mubr.bf16.mxu0 0
        %2733 = vmatmul.mubr.bf16.gmra.mxu0 %v2575
        %v2734 = vpop.f32.mrf.mxu0
        %v2735 = vadd.f32 0.0, %v2734
        %v2736 = vpop.f32.mrf.mxu0
        %v2737 = vpop.f32.mrf.mxu0
        %v2738 = vadd.f32 0.0, %v2737
        %v2739 = vpop.f32.mrf.mxu0
        %2740 = vdwg.mxu0
        %v2741 = vadd.f32 %v2446, %v2615
        %v2742 = vadd.f32 %v2447, %v2618
        %v2743 = vadd.f32 %v2448, %v2623
        %v2744 = vadd.f32 %v2449, %v2626
        %v2745 = vadd.f32 %v2450, %v2631
        %v2746 = vadd.f32 %v2451, %v2634
        %v2747 = vadd.f32 %v2452, %v2639
        %v2748 = vadd.f32 %v2453, %v2642
        %v2749 = vadd.f32 %v2454, %v2647
        %v2750 = vadd.f32 %v2455, %v2650
        %v2751 = vadd.f32 %v2456, %v2655
        %v2752 = vadd.f32 %v2457, %v2658
        %v2753 = vadd.f32 %v2458, %v2663
        %v2754 = vadd.f32 %v2459, %v2666
        %v2755 = vadd.f32 %v2460, %v2671
        %v2756 = vadd.f32 %v2461, %v2674
        %v2757 = vadd.f32 %v2462, %v2679
        %v2758 = vadd.f32 %v2463, %v2682
        %v2759 = vadd.f32 %v2464, %v2687
        %v2760 = vadd.f32 %v2465, %v2690
        %v2761 = vadd.f32 %v2466, %v2695
        %v2762 = vadd.f32 %v2467, %v2698
        %v2763 = vadd.f32 %v2468, %v2703
        %v2764 = vadd.f32 %v2469, %v2706
        %v2765 = vadd.f32 %v2470, %v2711
        %v2766 = vadd.f32 %v2471, %v2714
        %v2767 = vadd.f32 %v2472, %v2719
        %v2768 = vadd.f32 %v2473, %v2722
        %v2769 = vadd.f32 %v2474, %v2727
        %v2770 = vadd.f32 %v2475, %v2730
        %v2771 = vadd.f32 %v2476, %v2735
        %v2772 = vadd.f32 %v2477, %v2738
        %v2773 = vld [vmem:[%s2478 + $0x8] sm:$0xff]
        %v2774 = vld [vmem:[%s2478 + $0x10] sm:$0xff]
        %v2775 = vld [vmem:[%s2478 + $0x28] sm:$0xff]
        %v2776 = vld [vmem:[%s2478 + $0x30] sm:$0xff]
        %v2777 = vld [vmem:[%s2478 + $0x48] sm:$0xff]
        %v2778 = vld [vmem:[%s2478 + $0x50] sm:$0xff]
        %v2779 = vld [vmem:[%s2478 + $0x68] sm:$0xff]
        %v2780 = vld [vmem:[%s2478 + $0x70] sm:$0xff]
        %v2781 = vld [vmem:[%s2478 + $0x88] sm:$0xff]
        %v2782 = vld [vmem:[%s2478 + $0x90] sm:$0xff]
        %v2783 = vld [vmem:[%s2478 + $0xa8] sm:$0xff]
        %v2784 = vld [vmem:[%s2478 + $0xb0] sm:$0xff]
        %v2785 = vld [vmem:[%s2478 + $0xc8] sm:$0xff]
        %v2786 = vld [vmem:[%s2478 + $0xd0] sm:$0xff]
        %v2787 = vld [vmem:[%s2478 + $0xe8] sm:$0xff]
        %v2788 = vld [vmem:[%s2478 + $0xf0] sm:$0xff]
        %v2789 = vld [vmem:[%s2478 + $0x108] sm:$0xff]
        %v2790 = vld [vmem:[%s2478 + $0x110] sm:$0xff]
        %v2791 = vld [vmem:[%s2478 + $0x128] sm:$0xff]
        %v2792 = vld [vmem:[%s2478 + $0x130] sm:$0xff]
        %v2793 = vld [vmem:[%s2478 + $0x148] sm:$0xff]
        %v2794 = vld [vmem:[%s2478 + $0x150] sm:$0xff]
        %v2795 = vld [vmem:[%s2478 + $0x168] sm:$0xff]
        %v2796 = vld [vmem:[%s2478 + $0x170] sm:$0xff]
        %v2797 = vld [vmem:[%s2478 + $0x188] sm:$0xff]
        %v2798 = vld [vmem:[%s2478 + $0x190] sm:$0xff]
        %v2799 = vld [vmem:[%s2478 + $0x1a8] sm:$0xff]
        %v2800 = vld [vmem:[%s2478 + $0x1b0] sm:$0xff]
        %v2801 = vld [vmem:[%s2478 + $0x1c8] sm:$0xff]
        %v2802 = vld [vmem:[%s2478 + $0x1d0] sm:$0xff]
        %v2803 = vld [vmem:[%s2478 + $0x1e8] sm:$0xff]
        %v2804 = vld [vmem:[%s2478 + $0x1f0] sm:$0xff]
        %v2805 = vpack.c.bf16 %v2774, %v2773
        %v2806 = vpack.c.bf16 %v2776, %v2775
        %v2807 = vpack.c.bf16 %v2778, %v2777
        %v2808 = vpack.c.bf16 %v2780, %v2779
        %v2809 = vpack.c.bf16 %v2782, %v2781
        %v2810 = vpack.c.bf16 %v2784, %v2783
        %v2811 = vpack.c.bf16 %v2786, %v2785
        %v2812 = vpack.c.bf16 %v2788, %v2787
        %v2813 = vpack.c.bf16 %v2790, %v2789
        %v2814 = vpack.c.bf16 %v2792, %v2791
        %v2815 = vpack.c.bf16 %v2794, %v2793
        %v2816 = vpack.c.bf16 %v2796, %v2795
        %v2817 = vpack.c.bf16 %v2798, %v2797
        %v2818 = vpack.c.bf16 %v2800, %v2799
        %v2819 = vpack.c.bf16 %v2802, %v2801
        %v2820 = vpack.c.bf16 %v2804, %v2803
        %s2821 = scalar_lea.vmem %s3, 28
        %v2822 = vld [vmem:[%s2821] sm:$0xf]
        %v2824 = vsel %vm671, %v2805, 0
        %v2827 = vsel %vm671, %v2806, 0
        %v2830 = vsel %vm671, %v2807, 0
        %v2833 = vsel %vm671, %v2808, 0
        %v2836 = vsel %vm671, %v2809, 0
        %v2839 = vsel %vm671, %v2810, 0
        %v2842 = vsel %vm671, %v2811, 0
        %v2845 = vsel %vm671, %v2812, 0
        %v2848 = vsel %vm671, %v2813, 0
        %v2851 = vsel %vm671, %v2814, 0
        %v2854 = vsel %vm671, %v2815, 0
        %v2857 = vsel %vm671, %v2816, 0
        %v2860 = vsel %vm671, %v2817, 0
        %v2863 = vsel %vm671, %v2818, 0
        %v2866 = vsel %vm671, %v2819, 0
        %v2869 = vsel %vm671, %v2820, 0
        %v2872 = vsel %vm925, %v2822, 0
        %2874 = vmatprep.subr.bf16.mxu0 0
        %2875 = vmatpush1.bf16.msra.mxu0 0
        %2876 = vmatprep.subr.bf16.mxu0 0
        %2877 = vmatpush1.bf16.msra.mxu0 0
        %2878 = vmatprep.subr.bf16.mxu0 0
        %2879 = vmatpush1.bf16.msra.mxu0 0
        %2880 = vmatprep.subr.bf16.mxu0 0
        %2881 = vmatpush1.bf16.msra.mxu0 0
        %2882 = vmatprep.subr.bf16.mxu0 0
        %2883 = vmatpush1.bf16.msra.mxu0 0
        %2884 = vmatprep.subr.bf16.mxu0 0
        %2885 = vmatpush1.bf16.msra.mxu0 0
        %2886 = vmatprep.subr.bf16.mxu0 0
        %2887 = vmatpush1.bf16.msra.mxu0 0
        %2888 = vmatprep.subr.bf16.mxu0 0
        %2889 = vmatpush1.bf16.msra.mxu0 %v2872
        %2890 = vmatprep.subr.bf16.mxu0 0
        %2891 = vmatpush2.bf16.msra.mxu0 0
        %2892 = vmatprep.subr.bf16.mxu0 0
        %2893 = vmatpush2.bf16.msra.mxu0 0
        %2894 = vmatprep.subr.bf16.mxu0 0
        %2895 = vmatpush2.bf16.msra.mxu0 0
        %2896 = vmatprep.subr.bf16.mxu0 0
        %2897 = vmatpush2.bf16.msra.mxu0 0
        %2898 = vmatprep.subr.bf16.mxu0 0
        %2899 = vmatpush2.bf16.msra.mxu0 0
        %2900 = vmatprep.subr.bf16.mxu0 0
        %2901 = vmatpush2.bf16.msra.mxu0 0
        %2902 = vmatprep.subr.bf16.mxu0 0
        %2903 = vmatpush2.bf16.msra.mxu0 0
        %2904 = vmatprep.subr.bf16.mxu0 0
        %2905 = vmatpush2.bf16.msra.mxu0 0
        %2906 = vmatprep.mubr.bf16.mxu0 0
        %2907 = vmatmul.mubr.bf16.gmra.mxu0 %v2824
        %v2908 = vpop.f32.mrf.mxu0
        %v2909 = vadd.f32 0.0, %v2908
        %v2910 = vpop.f32.mrf.mxu0
        %v2911 = vpop.f32.mrf.mxu0
        %v2912 = vadd.f32 0.0, %v2911
        %v2913 = vpop.f32.mrf.mxu0
        %2914 = vmatprep.mubr.bf16.mxu0 0
        %2915 = vmatmul.mubr.bf16.gmra.mxu0 %v2827
        %v2916 = vpop.f32.mrf.mxu0
        %v2917 = vadd.f32 0.0, %v2916
        %v2918 = vpop.f32.mrf.mxu0
        %v2919 = vpop.f32.mrf.mxu0
        %v2920 = vadd.f32 0.0, %v2919
        %v2921 = vpop.f32.mrf.mxu0
        %2922 = vmatprep.mubr.bf16.mxu0 0
        %2923 = vmatmul.mubr.bf16.gmra.mxu0 %v2830
        %v2924 = vpop.f32.mrf.mxu0
        %v2925 = vadd.f32 0.0, %v2924
        %v2926 = vpop.f32.mrf.mxu0
        %v2927 = vpop.f32.mrf.mxu0
        %v2928 = vadd.f32 0.0, %v2927
        %v2929 = vpop.f32.mrf.mxu0
        %2930 = vmatprep.mubr.bf16.mxu0 0
        %2931 = vmatmul.mubr.bf16.gmra.mxu0 %v2833
        %v2932 = vpop.f32.mrf.mxu0
        %v2933 = vadd.f32 0.0, %v2932
        %v2934 = vpop.f32.mrf.mxu0
        %v2935 = vpop.f32.mrf.mxu0
        %v2936 = vadd.f32 0.0, %v2935
        %v2937 = vpop.f32.mrf.mxu0
        %2938 = vmatprep.mubr.bf16.mxu0 0
        %2939 = vmatmul.mubr.bf16.gmra.mxu0 %v2836
        %v2940 = vpop.f32.mrf.mxu0
        %v2941 = vadd.f32 0.0, %v2940
        %v2942 = vpop.f32.mrf.mxu0
        %v2943 = vpop.f32.mrf.mxu0
        %v2944 = vadd.f32 0.0, %v2943
        %v2945 = vpop.f32.mrf.mxu0
        %2946 = vmatprep.mubr.bf16.mxu0 0
        %2947 = vmatmul.mubr.bf16.gmra.mxu0 %v2839
        %v2948 = vpop.f32.mrf.mxu0
        %v2949 = vadd.f32 0.0, %v2948
        %v2950 = vpop.f32.mrf.mxu0
        %v2951 = vpop.f32.mrf.mxu0
        %v2952 = vadd.f32 0.0, %v2951
        %v2953 = vpop.f32.mrf.mxu0
        %2954 = vmatprep.mubr.bf16.mxu0 0
        %2955 = vmatmul.mubr.bf16.gmra.mxu0 %v2842
        %v2956 = vpop.f32.mrf.mxu0
        %v2957 = vadd.f32 0.0, %v2956
        %v2958 = vpop.f32.mrf.mxu0
        %v2959 = vpop.f32.mrf.mxu0
        %v2960 = vadd.f32 0.0, %v2959
        %v2961 = vpop.f32.mrf.mxu0
        %2962 = vmatprep.mubr.bf16.mxu0 0
        %2963 = vmatmul.mubr.bf16.gmra.mxu0 %v2845
        %v2964 = vpop.f32.mrf.mxu0
        %v2965 = vadd.f32 0.0, %v2964
        %v2966 = vpop.f32.mrf.mxu0
        %v2967 = vpop.f32.mrf.mxu0
        %v2968 = vadd.f32 0.0, %v2967
        %v2969 = vpop.f32.mrf.mxu0
        %2970 = vmatprep.mubr.bf16.mxu0 0
        %2971 = vmatmul.mubr.bf16.gmra.mxu0 %v2848
        %v2972 = vpop.f32.mrf.mxu0
        %v2973 = vadd.f32 0.0, %v2972
        %v2974 = vpop.f32.mrf.mxu0
        %v2975 = vpop.f32.mrf.mxu0
        %v2976 = vadd.f32 0.0, %v2975
        %v2977 = vpop.f32.mrf.mxu0
        %2978 = vmatprep.mubr.bf16.mxu0 0
        %2979 = vmatmul.mubr.bf16.gmra.mxu0 %v2851
        %v2980 = vpop.f32.mrf.mxu0
        %v2981 = vadd.f32 0.0, %v2980
        %v2982 = vpop.f32.mrf.mxu0
        %v2983 = vpop.f32.mrf.mxu0
        %v2984 = vadd.f32 0.0, %v2983
        %v2985 = vpop.f32.mrf.mxu0
        %2986 = vmatprep.mubr.bf16.mxu0 0
        %2987 = vmatmul.mubr.bf16.gmra.mxu0 %v2854
        %v2988 = vpop.f32.mrf.mxu0
        %v2989 = vadd.f32 0.0, %v2988
        %v2990 = vpop.f32.mrf.mxu0
        %v2991 = vpop.f32.mrf.mxu0
        %v2992 = vadd.f32 0.0, %v2991
        %v2993 = vpop.f32.mrf.mxu0
        %2994 = vmatprep.mubr.bf16.mxu0 0
        %2995 = vmatmul.mubr.bf16.gmra.mxu0 %v2857
        %v2996 = vpop.f32.mrf.mxu0
        %v2997 = vadd.f32 0.0, %v2996
        %v2998 = vpop.f32.mrf.mxu0
        %v2999 = vpop.f32.mrf.mxu0
        %v3000 = vadd.f32 0.0, %v2999
        %v3001 = vpop.f32.mrf.mxu0
        %3002 = vmatprep.mubr.bf16.mxu0 0
        %3003 = vmatmul.mubr.bf16.gmra.mxu0 %v2860
        %v3004 = vpop.f32.mrf.mxu0
        %v3005 = vadd.f32 0.0, %v3004
        %v3006 = vpop.f32.mrf.mxu0
        %v3007 = vpop.f32.mrf.mxu0
        %v3008 = vadd.f32 0.0, %v3007
        %v3009 = vpop.f32.mrf.mxu0
        %3010 = vmatprep.mubr.bf16.mxu0 0
        %3011 = vmatmul.mubr.bf16.gmra.mxu0 %v2863
        %v3012 = vpop.f32.mrf.mxu0
        %v3013 = vadd.f32 0.0, %v3012
        %v3014 = vpop.f32.mrf.mxu0
        %v3015 = vpop.f32.mrf.mxu0
        %v3016 = vadd.f32 0.0, %v3015
        %v3017 = vpop.f32.mrf.mxu0
        %3018 = vmatprep.mubr.bf16.mxu0 0
        %3019 = vmatmul.mubr.bf16.gmra.mxu0 %v2866
        %v3020 = vpop.f32.mrf.mxu0
        %v3021 = vadd.f32 0.0, %v3020
        %v3022 = vpop.f32.mrf.mxu0
        %v3023 = vpop.f32.mrf.mxu0
        %v3024 = vadd.f32 0.0, %v3023
        %v3025 = vpop.f32.mrf.mxu0
        %3026 = vmatprep.mubr.bf16.mxu0 0
        %3027 = vmatmul.mubr.bf16.gmra.mxu0 %v2869
        %v3028 = vpop.f32.mrf.mxu0
        %v3029 = vadd.f32 0.0, %v3028
        %v3030 = vpop.f32.mrf.mxu0
        %v3031 = vpop.f32.mrf.mxu0
        %v3032 = vadd.f32 0.0, %v3031
        %v3033 = vpop.f32.mrf.mxu0
        %3034 = vdwg.mxu0
        %v3035 = vadd.f32 %v2741, %v2909
        %v3036 = vadd.f32 %v2742, %v2912
        %v3037 = vadd.f32 %v2743, %v2917
        %v3038 = vadd.f32 %v2744, %v2920
        %v3039 = vadd.f32 %v2745, %v2925
        %v3040 = vadd.f32 %v2746, %v2928
        %v3041 = vadd.f32 %v2747, %v2933
        %v3042 = vadd.f32 %v2748, %v2936
        %v3043 = vadd.f32 %v2749, %v2941
        %v3044 = vadd.f32 %v2750, %v2944
        %v3045 = vadd.f32 %v2751, %v2949
        %v3046 = vadd.f32 %v2752, %v2952
        %v3047 = vadd.f32 %v2753, %v2957
        %v3048 = vadd.f32 %v2754, %v2960
        %v3049 = vadd.f32 %v2755, %v2965
        %v3050 = vadd.f32 %v2756, %v2968
        %v3051 = vadd.f32 %v2757, %v2973
        %v3052 = vadd.f32 %v2758, %v2976
        %v3053 = vadd.f32 %v2759, %v2981
        %v3054 = vadd.f32 %v2760, %v2984
        %v3055 = vadd.f32 %v2761, %v2989
        %v3056 = vadd.f32 %v2762, %v2992
        %v3057 = vadd.f32 %v2763, %v2997
        %v3058 = vadd.f32 %v2764, %v3000
        %v3059 = vadd.f32 %v2765, %v3005
        %v3060 = vadd.f32 %v2766, %v3008
        %v3061 = vadd.f32 %v2767, %v3013
        %v3062 = vadd.f32 %v2768, %v3016
        %v3063 = vadd.f32 %v2769, %v3021
        %v3064 = vadd.f32 %v2770, %v3024
        %v3065 = vadd.f32 %v2771, %v3029
        %v3066 = vadd.f32 %v2772, %v3032
        %v3067 = vld [vmem:[%s2478 + $0x9] sm:$0xff]
        %v3068 = vld [vmem:[%s2478 + $0x11] sm:$0xff]
        %v3069 = vld [vmem:[%s2478 + $0x29] sm:$0xff]
        %v3070 = vld [vmem:[%s2478 + $0x31] sm:$0xff]
        %v3071 = vld [vmem:[%s2478 + $0x49] sm:$0xff]
        %v3072 = vld [vmem:[%s2478 + $0x51] sm:$0xff]
        %v3073 = vld [vmem:[%s2478 + $0x69] sm:$0xff]
        %v3074 = vld [vmem:[%s2478 + $0x71] sm:$0xff]
        %v3075 = vld [vmem:[%s2478 + $0x89] sm:$0xff]
        %v3076 = vld [vmem:[%s2478 + $0x91] sm:$0xff]
        %v3077 = vld [vmem:[%s2478 + $0xa9] sm:$0xff]
        %v3078 = vld [vmem:[%s2478 + $0xb1] sm:$0xff]
        %v3079 = vld [vmem:[%s2478 + $0xc9] sm:$0xff]
        %v3080 = vld [vmem:[%s2478 + $0xd1] sm:$0xff]
        %v3081 = vld [vmem:[%s2478 + $0xe9] sm:$0xff]
        %v3082 = vld [vmem:[%s2478 + $0xf1] sm:$0xff]
        %v3083 = vld [vmem:[%s2478 + $0x109] sm:$0xff]
        %v3084 = vld [vmem:[%s2478 + $0x111] sm:$0xff]
        %v3085 = vld [vmem:[%s2478 + $0x129] sm:$0xff]
        %v3086 = vld [vmem:[%s2478 + $0x131] sm:$0xff]
        %v3087 = vld [vmem:[%s2478 + $0x149] sm:$0xff]
        %v3088 = vld [vmem:[%s2478 + $0x151] sm:$0xff]
        %v3089 = vld [vmem:[%s2478 + $0x169] sm:$0xff]
        %v3090 = vld [vmem:[%s2478 + $0x171] sm:$0xff]
        %v3091 = vld [vmem:[%s2478 + $0x189] sm:$0xff]
        %v3092 = vld [vmem:[%s2478 + $0x191] sm:$0xff]
        %v3093 = vld [vmem:[%s2478 + $0x1a9] sm:$0xff]
        %v3094 = vld [vmem:[%s2478 + $0x1b1] sm:$0xff]
        %v3095 = vld [vmem:[%s2478 + $0x1c9] sm:$0xff]
        %v3096 = vld [vmem:[%s2478 + $0x1d1] sm:$0xff]
        %v3097 = vld [vmem:[%s2478 + $0x1e9] sm:$0xff]
        %v3098 = vld [vmem:[%s2478 + $0x1f1] sm:$0xff]
        %v3099 = vpack.c.bf16 %v3068, %v3067
        %v3100 = vpack.c.bf16 %v3070, %v3069
        %v3101 = vpack.c.bf16 %v3072, %v3071
        %v3102 = vpack.c.bf16 %v3074, %v3073
        %v3103 = vpack.c.bf16 %v3076, %v3075
        %v3104 = vpack.c.bf16 %v3078, %v3077
        %v3105 = vpack.c.bf16 %v3080, %v3079
        %v3106 = vpack.c.bf16 %v3082, %v3081
        %v3107 = vpack.c.bf16 %v3084, %v3083
        %v3108 = vpack.c.bf16 %v3086, %v3085
        %v3109 = vpack.c.bf16 %v3088, %v3087
        %v3110 = vpack.c.bf16 %v3090, %v3089
        %v3111 = vpack.c.bf16 %v3092, %v3091
        %v3112 = vpack.c.bf16 %v3094, %v3093
        %v3113 = vpack.c.bf16 %v3096, %v3095
        %v3114 = vpack.c.bf16 %v3098, %v3097
        %s3115 = scalar_lea.vmem %s3, 32
        %v3116 = vld [vmem:[%s3115] sm:$0xf]
        %v3118 = vsel %vm671, %v3099, 0
        %v3121 = vsel %vm671, %v3100, 0
        %v3124 = vsel %vm671, %v3101, 0
        %v3127 = vsel %vm671, %v3102, 0
        %v3130 = vsel %vm671, %v3103, 0
        %v3133 = vsel %vm671, %v3104, 0
        %v3136 = vsel %vm671, %v3105, 0
        %v3139 = vsel %vm671, %v3106, 0
        %v3142 = vsel %vm671, %v3107, 0
        %v3145 = vsel %vm671, %v3108, 0
        %v3148 = vsel %vm671, %v3109, 0
        %v3151 = vsel %vm671, %v3110, 0
        %v3154 = vsel %vm671, %v3111, 0
        %v3157 = vsel %vm671, %v3112, 0
        %v3160 = vsel %vm671, %v3113, 0
        %v3163 = vsel %vm671, %v3114, 0
        %v3166 = vsel %vm925, %v3116, 0
        %3168 = vmatprep.subr.bf16.mxu0 0
        %3169 = vmatpush1.bf16.msra.mxu0 0
        %3170 = vmatprep.subr.bf16.mxu0 0
        %3171 = vmatpush1.bf16.msra.mxu0 0
        %3172 = vmatprep.subr.bf16.mxu0 0
        %3173 = vmatpush1.bf16.msra.mxu0 0
        %3174 = vmatprep.subr.bf16.mxu0 0
        %3175 = vmatpush1.bf16.msra.mxu0 0
        %3176 = vmatprep.subr.bf16.mxu0 0
        %3177 = vmatpush1.bf16.msra.mxu0 0
        %3178 = vmatprep.subr.bf16.mxu0 0
        %3179 = vmatpush1.bf16.msra.mxu0 0
        %3180 = vmatprep.subr.bf16.mxu0 0
        %3181 = vmatpush1.bf16.msra.mxu0 0
        %3182 = vmatprep.subr.bf16.mxu0 0
        %3183 = vmatpush1.bf16.msra.mxu0 %v3166
        %3184 = vmatprep.subr.bf16.mxu0 0
        %3185 = vmatpush2.bf16.msra.mxu0 0
        %3186 = vmatprep.subr.bf16.mxu0 0
        %3187 = vmatpush2.bf16.msra.mxu0 0
        %3188 = vmatprep.subr.bf16.mxu0 0
        %3189 = vmatpush2.bf16.msra.mxu0 0
        %3190 = vmatprep.subr.bf16.mxu0 0
        %3191 = vmatpush2.bf16.msra.mxu0 0
        %3192 = vmatprep.subr.bf16.mxu0 0
        %3193 = vmatpush2.bf16.msra.mxu0 0
        %3194 = vmatprep.subr.bf16.mxu0 0
        %3195 = vmatpush2.bf16.msra.mxu0 0
        %3196 = vmatprep.subr.bf16.mxu0 0
        %3197 = vmatpush2.bf16.msra.mxu0 0
        %3198 = vmatprep.subr.bf16.mxu0 0
        %3199 = vmatpush2.bf16.msra.mxu0 0
        %3200 = vmatprep.mubr.bf16.mxu0 0
        %3201 = vmatmul.mubr.bf16.gmra.mxu0 %v3118
        %v3202 = vpop.f32.mrf.mxu0
        %v3203 = vadd.f32 0.0, %v3202
        %v3204 = vpop.f32.mrf.mxu0
        %v3205 = vpop.f32.mrf.mxu0
        %v3206 = vadd.f32 0.0, %v3205
        %v3207 = vpop.f32.mrf.mxu0
        %3208 = vmatprep.mubr.bf16.mxu0 0
        %3209 = vmatmul.mubr.bf16.gmra.mxu0 %v3121
        %v3210 = vpop.f32.mrf.mxu0
        %v3211 = vadd.f32 0.0, %v3210
        %v3212 = vpop.f32.mrf.mxu0
        %v3213 = vpop.f32.mrf.mxu0
        %v3214 = vadd.f32 0.0, %v3213
        %v3215 = vpop.f32.mrf.mxu0
        %3216 = vmatprep.mubr.bf16.mxu0 0
        %3217 = vmatmul.mubr.bf16.gmra.mxu0 %v3124
        %v3218 = vpop.f32.mrf.mxu0
        %v3219 = vadd.f32 0.0, %v3218
        %v3220 = vpop.f32.mrf.mxu0
        %v3221 = vpop.f32.mrf.mxu0
        %v3222 = vadd.f32 0.0, %v3221
        %v3223 = vpop.f32.mrf.mxu0
        %3224 = vmatprep.mubr.bf16.mxu0 0
        %3225 = vmatmul.mubr.bf16.gmra.mxu0 %v3127
        %v3226 = vpop.f32.mrf.mxu0
        %v3227 = vadd.f32 0.0, %v3226
        %v3228 = vpop.f32.mrf.mxu0
        %v3229 = vpop.f32.mrf.mxu0
        %v3230 = vadd.f32 0.0, %v3229
        %v3231 = vpop.f32.mrf.mxu0
        %3232 = vmatprep.mubr.bf16.mxu0 0
        %3233 = vmatmul.mubr.bf16.gmra.mxu0 %v3130
        %v3234 = vpop.f32.mrf.mxu0
        %v3235 = vadd.f32 0.0, %v3234
        %v3236 = vpop.f32.mrf.mxu0
        %v3237 = vpop.f32.mrf.mxu0
        %v3238 = vadd.f32 0.0, %v3237
        %v3239 = vpop.f32.mrf.mxu0
        %3240 = vmatprep.mubr.bf16.mxu0 0
        %3241 = vmatmul.mubr.bf16.gmra.mxu0 %v3133
        %v3242 = vpop.f32.mrf.mxu0
        %v3243 = vadd.f32 0.0, %v3242
        %v3244 = vpop.f32.mrf.mxu0
        %v3245 = vpop.f32.mrf.mxu0
        %v3246 = vadd.f32 0.0, %v3245
        %v3247 = vpop.f32.mrf.mxu0
        %3248 = vmatprep.mubr.bf16.mxu0 0
        %3249 = vmatmul.mubr.bf16.gmra.mxu0 %v3136
        %v3250 = vpop.f32.mrf.mxu0
        %v3251 = vadd.f32 0.0, %v3250
        %v3252 = vpop.f32.mrf.mxu0
        %v3253 = vpop.f32.mrf.mxu0
        %v3254 = vadd.f32 0.0, %v3253
        %v3255 = vpop.f32.mrf.mxu0
        %3256 = vmatprep.mubr.bf16.mxu0 0
        %3257 = vmatmul.mubr.bf16.gmra.mxu0 %v3139
        %v3258 = vpop.f32.mrf.mxu0
        %v3259 = vadd.f32 0.0, %v3258
        %v3260 = vpop.f32.mrf.mxu0
        %v3261 = vpop.f32.mrf.mxu0
        %v3262 = vadd.f32 0.0, %v3261
        %v3263 = vpop.f32.mrf.mxu0
        %3264 = vmatprep.mubr.bf16.mxu0 0
        %3265 = vmatmul.mubr.bf16.gmra.mxu0 %v3142
        %v3266 = vpop.f32.mrf.mxu0
        %v3267 = vadd.f32 0.0, %v3266
        %v3268 = vpop.f32.mrf.mxu0
        %v3269 = vpop.f32.mrf.mxu0
        %v3270 = vadd.f32 0.0, %v3269
        %v3271 = vpop.f32.mrf.mxu0
        %3272 = vmatprep.mubr.bf16.mxu0 0
        %3273 = vmatmul.mubr.bf16.gmra.mxu0 %v3145
        %v3274 = vpop.f32.mrf.mxu0
        %v3275 = vadd.f32 0.0, %v3274
        %v3276 = vpop.f32.mrf.mxu0
        %v3277 = vpop.f32.mrf.mxu0
        %v3278 = vadd.f32 0.0, %v3277
        %v3279 = vpop.f32.mrf.mxu0
        %3280 = vmatprep.mubr.bf16.mxu0 0
        %3281 = vmatmul.mubr.bf16.gmra.mxu0 %v3148
        %v3282 = vpop.f32.mrf.mxu0
        %v3283 = vadd.f32 0.0, %v3282
        %v3284 = vpop.f32.mrf.mxu0
        %v3285 = vpop.f32.mrf.mxu0
        %v3286 = vadd.f32 0.0, %v3285
        %v3287 = vpop.f32.mrf.mxu0
        %3288 = vmatprep.mubr.bf16.mxu0 0
        %3289 = vmatmul.mubr.bf16.gmra.mxu0 %v3151
        %v3290 = vpop.f32.mrf.mxu0
        %v3291 = vadd.f32 0.0, %v3290
        %v3292 = vpop.f32.mrf.mxu0
        %v3293 = vpop.f32.mrf.mxu0
        %v3294 = vadd.f32 0.0, %v3293
        %v3295 = vpop.f32.mrf.mxu0
        %3296 = vmatprep.mubr.bf16.mxu0 0
        %3297 = vmatmul.mubr.bf16.gmra.mxu0 %v3154
        %v3298 = vpop.f32.mrf.mxu0
        %v3299 = vadd.f32 0.0, %v3298
        %v3300 = vpop.f32.mrf.mxu0
        %v3301 = vpop.f32.mrf.mxu0
        %v3302 = vadd.f32 0.0, %v3301
        %v3303 = vpop.f32.mrf.mxu0
        %3304 = vmatprep.mubr.bf16.mxu0 0
        %3305 = vmatmul.mubr.bf16.gmra.mxu0 %v3157
        %v3306 = vpop.f32.mrf.mxu0
        %v3307 = vadd.f32 0.0, %v3306
        %v3308 = vpop.f32.mrf.mxu0
        %v3309 = vpop.f32.mrf.mxu0
        %v3310 = vadd.f32 0.0, %v3309
        %v3311 = vpop.f32.mrf.mxu0
        %3312 = vmatprep.mubr.bf16.mxu0 0
        %3313 = vmatmul.mubr.bf16.gmra.mxu0 %v3160
        %v3314 = vpop.f32.mrf.mxu0
        %v3315 = vadd.f32 0.0, %v3314
        %v3316 = vpop.f32.mrf.mxu0
        %v3317 = vpop.f32.mrf.mxu0
        %v3318 = vadd.f32 0.0, %v3317
        %v3319 = vpop.f32.mrf.mxu0
        %3320 = vmatprep.mubr.bf16.mxu0 0
        %3321 = vmatmul.mubr.bf16.gmra.mxu0 %v3163
        %v3322 = vpop.f32.mrf.mxu0
        %v3323 = vadd.f32 0.0, %v3322
        %v3324 = vpop.f32.mrf.mxu0
        %v3325 = vpop.f32.mrf.mxu0
        %v3326 = vadd.f32 0.0, %v3325
        %v3327 = vpop.f32.mrf.mxu0
        %3328 = vdwg.mxu0
        %v3329 = vadd.f32 %v3035, %v3203
        %v3330 = vadd.f32 %v3036, %v3206
        %v3331 = vadd.f32 %v3037, %v3211
        %v3332 = vadd.f32 %v3038, %v3214
        %v3333 = vadd.f32 %v3039, %v3219
        %v3334 = vadd.f32 %v3040, %v3222
        %v3335 = vadd.f32 %v3041, %v3227
        %v3336 = vadd.f32 %v3042, %v3230
        %v3337 = vadd.f32 %v3043, %v3235
        %v3338 = vadd.f32 %v3044, %v3238
        %v3339 = vadd.f32 %v3045, %v3243
        %v3340 = vadd.f32 %v3046, %v3246
        %v3341 = vadd.f32 %v3047, %v3251
        %v3342 = vadd.f32 %v3048, %v3254
        %v3343 = vadd.f32 %v3049, %v3259
        %v3344 = vadd.f32 %v3050, %v3262
        %v3345 = vadd.f32 %v3051, %v3267
        %v3346 = vadd.f32 %v3052, %v3270
        %v3347 = vadd.f32 %v3053, %v3275
        %v3348 = vadd.f32 %v3054, %v3278
        %v3349 = vadd.f32 %v3055, %v3283
        %v3350 = vadd.f32 %v3056, %v3286
        %v3351 = vadd.f32 %v3057, %v3291
        %v3352 = vadd.f32 %v3058, %v3294
        %v3353 = vadd.f32 %v3059, %v3299
        %v3354 = vadd.f32 %v3060, %v3302
        %v3355 = vadd.f32 %v3061, %v3307
        %v3356 = vadd.f32 %v3062, %v3310
        %v3357 = vadd.f32 %v3063, %v3315
        %v3358 = vadd.f32 %v3064, %v3318
        %v3359 = vadd.f32 %v3065, %v3323
        %v3360 = vadd.f32 %v3066, %v3326
        %v3361 = vld [vmem:[%s4] sm:$0x1]
        %v3363 = vlaneseq
        %v3364 = vshrl.u32 %v3363, 7
        %v3365 = vsub.s32 0, %v3364
        %v3366 = vrot.slane %v3361, %v3365
        %v3368 = vadd.f32 %v3329, %v3366
        %v3369 = vadd.f32 %v3330, %v3366
        %v3370 = vadd.f32 %v3331, %v3366
        %v3371 = vadd.f32 %v3332, %v3366
        %v3372 = vadd.f32 %v3333, %v3366
        %v3373 = vadd.f32 %v3334, %v3366
        %v3374 = vadd.f32 %v3335, %v3366
        %v3375 = vadd.f32 %v3336, %v3366
        %v3376 = vadd.f32 %v3337, %v3366
        %v3377 = vadd.f32 %v3338, %v3366
        %v3378 = vadd.f32 %v3339, %v3366
        %v3379 = vadd.f32 %v3340, %v3366
        %v3380 = vadd.f32 %v3341, %v3366
        %v3381 = vadd.f32 %v3342, %v3366
        %v3382 = vadd.f32 %v3343, %v3366
        %v3383 = vadd.f32 %v3344, %v3366
        %v3384 = vadd.f32 %v3345, %v3366
        %v3385 = vadd.f32 %v3346, %v3366
        %v3386 = vadd.f32 %v3347, %v3366
        %v3387 = vadd.f32 %v3348, %v3366
        %v3388 = vadd.f32 %v3349, %v3366
        %v3389 = vadd.f32 %v3350, %v3366
        %v3390 = vadd.f32 %v3351, %v3366
        %v3391 = vadd.f32 %v3352, %v3366
        %v3392 = vadd.f32 %v3353, %v3366
        %v3393 = vadd.f32 %v3354, %v3366
        %v3394 = vadd.f32 %v3355, %v3366
        %v3395 = vadd.f32 %v3356, %v3366
        %v3396 = vadd.f32 %v3357, %v3366
        %v3397 = vadd.f32 %v3358, %v3366
        %v3398 = vadd.f32 %v3359, %v3366
        %v3399 = vadd.f32 %v3360, %v3366
        %v3400 = vmax.f32 %v3368, 0.0
        %v3401 = vmax.f32 %v3369, 0.0
        %v3402 = vmax.f32 %v3370, 0.0
        %v3403 = vmax.f32 %v3371, 0.0
        %v3404 = vmax.f32 %v3372, 0.0
        %v3405 = vmax.f32 %v3373, 0.0
        %v3406 = vmax.f32 %v3374, 0.0
        %v3407 = vmax.f32 %v3375, 0.0
        %v3408 = vmax.f32 %v3376, 0.0
        %v3409 = vmax.f32 %v3377, 0.0
        %v3410 = vmax.f32 %v3378, 0.0
        %v3411 = vmax.f32 %v3379, 0.0
        %v3412 = vmax.f32 %v3380, 0.0
        %v3413 = vmax.f32 %v3381, 0.0
        %v3414 = vmax.f32 %v3382, 0.0
        %v3415 = vmax.f32 %v3383, 0.0
        %v3416 = vmax.f32 %v3384, 0.0
        %v3417 = vmax.f32 %v3385, 0.0
        %v3418 = vmax.f32 %v3386, 0.0
        %v3419 = vmax.f32 %v3387, 0.0
        %v3420 = vmax.f32 %v3388, 0.0
        %v3421 = vmax.f32 %v3389, 0.0
        %v3422 = vmax.f32 %v3390, 0.0
        %v3423 = vmax.f32 %v3391, 0.0
        %v3424 = vmax.f32 %v3392, 0.0
        %v3425 = vmax.f32 %v3393, 0.0
        %v3426 = vmax.f32 %v3394, 0.0
        %v3427 = vmax.f32 %v3395, 0.0
        %v3428 = vmax.f32 %v3396, 0.0
        %v3429 = vmax.f32 %v3397, 0.0
        %v3430 = vmax.f32 %v3398, 0.0
        %v3431 = vmax.f32 %v3399, 0.0
        %v3432 = vpack.c.bf16 %v3401, %v3400
        %v3433 = vpack.c.bf16 %v3403, %v3402
        %v3434 = vpack.c.bf16 %v3405, %v3404
        %v3435 = vpack.c.bf16 %v3407, %v3406
        %v3436 = vpack.c.bf16 %v3409, %v3408
        %v3437 = vpack.c.bf16 %v3411, %v3410
        %v3438 = vpack.c.bf16 %v3413, %v3412
        %v3439 = vpack.c.bf16 %v3415, %v3414
        %v3440 = vpack.c.bf16 %v3417, %v3416
        %v3441 = vpack.c.bf16 %v3419, %v3418
        %v3442 = vpack.c.bf16 %v3421, %v3420
        %v3443 = vpack.c.bf16 %v3423, %v3422
        %v3444 = vpack.c.bf16 %v3425, %v3424
        %v3445 = vpack.c.bf16 %v3427, %v3426
        %v3446 = vpack.c.bf16 %v3429, %v3428
        %v3447 = vpack.c.bf16 %v3431, %v3430
        %v3448 = vld [vmem:[%s5] sm:$0xf]
        %v3449 = vld [vmem:[%s6] sm:$0x3]
        %v3451 = vsel %vm474, %v3449, 0
        %3453 = vmatprep.subr.bf16.mxu0 0
        %3454 = vmatpush1.bf16.msra.mxu0 0
        %3455 = vmatprep.subr.bf16.mxu0 0
        %3456 = vmatpush1.bf16.msra.mxu0 0
        %3457 = vmatprep.subr.bf16.mxu0 0
        %3458 = vmatpush1.bf16.msra.mxu0 0
        %3459 = vmatprep.subr.bf16.mxu0 0
        %3460 = vmatpush1.bf16.msra.mxu0 0
        %3461 = vmatprep.subr.bf16.mxu0 0
        %3462 = vmatpush1.bf16.msra.mxu0 0
        %3463 = vmatprep.subr.bf16.mxu0 0
        %3464 = vmatpush1.bf16.msra.mxu0 0
        %3465 = vmatprep.subr.bf16.mxu0 0
        %3466 = vmatpush1.bf16.msra.mxu0 0
        %3467 = vmatprep.subr.bf16.mxu0 0
        %3468 = vmatpush1.bf16.msra.mxu0 %v3451
        %3469 = vmatprep.subr.bf16.mxu0 0
        %3470 = vmatpush2.bf16.msra.mxu0 0
        %3471 = vmatprep.subr.bf16.mxu0 0
        %3472 = vmatpush2.bf16.msra.mxu0 0
        %3473 = vmatprep.subr.bf16.mxu0 0
        %3474 = vmatpush2.bf16.msra.mxu0 0
        %3475 = vmatprep.subr.bf16.mxu0 0
        %3476 = vmatpush2.bf16.msra.mxu0 0
        %3477 = vmatprep.subr.bf16.mxu0 0
        %3478 = vmatpush2.bf16.msra.mxu0 0
        %3479 = vmatprep.subr.bf16.mxu0 0
        %3480 = vmatpush2.bf16.msra.mxu0 0
        %3481 = vmatprep.subr.bf16.mxu0 0
        %3482 = vmatpush2.bf16.msra.mxu0 0
        %3483 = vmatprep.subr.bf16.mxu0 0
        %3484 = vmatpush2.bf16.msra.mxu0 0
        %3485 = vmatprep.mubr.bf16.mxu0 0
        %3486 = vmatmul.mubr.bf16.gmra.mxu0 %v427
        %v3487 = vpop.f32.mrf.mxu0
        %v3488 = vadd.f32 0.0, %v3487
        %v3489 = vpop.f32.mrf.mxu0
        %v3490 = vpop.f32.mrf.mxu0
        %v3491 = vadd.f32 0.0, %v3490
        %v3492 = vpop.f32.mrf.mxu0
        %3493 = vmatprep.mubr.bf16.mxu0 0
        %3494 = vmatmul.mubr.bf16.gmra.mxu0 %v430
        %v3495 = vpop.f32.mrf.mxu0
        %v3496 = vadd.f32 0.0, %v3495
        %v3497 = vpop.f32.mrf.mxu0
        %v3498 = vpop.f32.mrf.mxu0
        %v3499 = vadd.f32 0.0, %v3498
        %v3500 = vpop.f32.mrf.mxu0
        %3501 = vmatprep.mubr.bf16.mxu0 0
        %3502 = vmatmul.mubr.bf16.gmra.mxu0 %v433
        %v3503 = vpop.f32.mrf.mxu0
        %v3504 = vadd.f32 0.0, %v3503
        %v3505 = vpop.f32.mrf.mxu0
        %v3506 = vpop.f32.mrf.mxu0
        %v3507 = vadd.f32 0.0, %v3506
        %v3508 = vpop.f32.mrf.mxu0
        %3509 = vmatprep.mubr.bf16.mxu0 0
        %3510 = vmatmul.mubr.bf16.gmra.mxu0 %v436
        %v3511 = vpop.f32.mrf.mxu0
        %v3512 = vadd.f32 0.0, %v3511
        %v3513 = vpop.f32.mrf.mxu0
        %v3514 = vpop.f32.mrf.mxu0
        %v3515 = vadd.f32 0.0, %v3514
        %v3516 = vpop.f32.mrf.mxu0
        %3517 = vmatprep.mubr.bf16.mxu0 0
        %3518 = vmatmul.mubr.bf16.gmra.mxu0 %v439
        %v3519 = vpop.f32.mrf.mxu0
        %v3520 = vadd.f32 0.0, %v3519
        %v3521 = vpop.f32.mrf.mxu0
        %v3522 = vpop.f32.mrf.mxu0
        %v3523 = vadd.f32 0.0, %v3522
        %v3524 = vpop.f32.mrf.mxu0
        %3525 = vmatprep.mubr.bf16.mxu0 0
        %3526 = vmatmul.mubr.bf16.gmra.mxu0 %v442
        %v3527 = vpop.f32.mrf.mxu0
        %v3528 = vadd.f32 0.0, %v3527
        %v3529 = vpop.f32.mrf.mxu0
        %v3530 = vpop.f32.mrf.mxu0
        %v3531 = vadd.f32 0.0, %v3530
        %v3532 = vpop.f32.mrf.mxu0
        %3533 = vmatprep.mubr.bf16.mxu0 0
        %3534 = vmatmul.mubr.bf16.gmra.mxu0 %v445
        %v3535 = vpop.f32.mrf.mxu0
        %v3536 = vadd.f32 0.0, %v3535
        %v3537 = vpop.f32.mrf.mxu0
        %v3538 = vpop.f32.mrf.mxu0
        %v3539 = vadd.f32 0.0, %v3538
        %v3540 = vpop.f32.mrf.mxu0
        %3541 = vmatprep.mubr.bf16.mxu0 0
        %3542 = vmatmul.mubr.bf16.gmra.mxu0 %v448
        %v3543 = vpop.f32.mrf.mxu0
        %v3544 = vadd.f32 0.0, %v3543
        %v3545 = vpop.f32.mrf.mxu0
        %v3546 = vpop.f32.mrf.mxu0
        %v3547 = vadd.f32 0.0, %v3546
        %v3548 = vpop.f32.mrf.mxu0
        %3549 = vmatprep.mubr.bf16.mxu0 0
        %3550 = vmatmul.mubr.bf16.gmra.mxu0 %v451
        %v3551 = vpop.f32.mrf.mxu0
        %v3552 = vadd.f32 0.0, %v3551
        %v3553 = vpop.f32.mrf.mxu0
        %v3554 = vpop.f32.mrf.mxu0
        %v3555 = vadd.f32 0.0, %v3554
        %v3556 = vpop.f32.mrf.mxu0
        %3557 = vmatprep.mubr.bf16.mxu0 0
        %3558 = vmatmul.mubr.bf16.gmra.mxu0 %v454
        %v3559 = vpop.f32.mrf.mxu0
        %v3560 = vadd.f32 0.0, %v3559
        %v3561 = vpop.f32.mrf.mxu0
        %v3562 = vpop.f32.mrf.mxu0
        %v3563 = vadd.f32 0.0, %v3562
        %v3564 = vpop.f32.mrf.mxu0
        %3565 = vmatprep.mubr.bf16.mxu0 0
        %3566 = vmatmul.mubr.bf16.gmra.mxu0 %v457
        %v3567 = vpop.f32.mrf.mxu0
        %v3568 = vadd.f32 0.0, %v3567
        %v3569 = vpop.f32.mrf.mxu0
        %v3570 = vpop.f32.mrf.mxu0
        %v3571 = vadd.f32 0.0, %v3570
        %v3572 = vpop.f32.mrf.mxu0
        %3573 = vmatprep.mubr.bf16.mxu0 0
        %3574 = vmatmul.mubr.bf16.gmra.mxu0 %v460
        %v3575 = vpop.f32.mrf.mxu0
        %v3576 = vadd.f32 0.0, %v3575
        %v3577 = vpop.f32.mrf.mxu0
        %v3578 = vpop.f32.mrf.mxu0
        %v3579 = vadd.f32 0.0, %v3578
        %v3580 = vpop.f32.mrf.mxu0
        %3581 = vmatprep.mubr.bf16.mxu0 0
        %3582 = vmatmul.mubr.bf16.gmra.mxu0 %v463
        %v3583 = vpop.f32.mrf.mxu0
        %v3584 = vadd.f32 0.0, %v3583
        %v3585 = vpop.f32.mrf.mxu0
        %v3586 = vpop.f32.mrf.mxu0
        %v3587 = vadd.f32 0.0, %v3586
        %v3588 = vpop.f32.mrf.mxu0
        %3589 = vmatprep.mubr.bf16.mxu0 0
        %3590 = vmatmul.mubr.bf16.gmra.mxu0 %v466
        %v3591 = vpop.f32.mrf.mxu0
        %v3592 = vadd.f32 0.0, %v3591
        %v3593 = vpop.f32.mrf.mxu0
        %v3594 = vpop.f32.mrf.mxu0
        %v3595 = vadd.f32 0.0, %v3594
        %v3596 = vpop.f32.mrf.mxu0
        %3597 = vmatprep.mubr.bf16.mxu0 0
        %3598 = vmatmul.mubr.bf16.gmra.mxu0 %v469
        %v3599 = vpop.f32.mrf.mxu0
        %v3600 = vadd.f32 0.0, %v3599
        %v3601 = vpop.f32.mrf.mxu0
        %v3602 = vpop.f32.mrf.mxu0
        %v3603 = vadd.f32 0.0, %v3602
        %v3604 = vpop.f32.mrf.mxu0
        %3605 = vmatprep.mubr.bf16.mxu0 0
        %3606 = vmatmul.mubr.bf16.gmra.mxu0 %v472
        %v3607 = vpop.f32.mrf.mxu0
        %v3608 = vadd.f32 0.0, %v3607
        %v3609 = vpop.f32.mrf.mxu0
        %v3610 = vpop.f32.mrf.mxu0
        %v3611 = vadd.f32 0.0, %v3610
        %v3612 = vpop.f32.mrf.mxu0
        %3613 = vdwg.mxu0
        %v3615 = vsel %vm671, %v3432, 0
        %v3618 = vsel %vm671, %v3433, 0
        %v3621 = vsel %vm671, %v3434, 0
        %v3624 = vsel %vm671, %v3435, 0
        %v3627 = vsel %vm671, %v3436, 0
        %v3630 = vsel %vm671, %v3437, 0
        %v3633 = vsel %vm671, %v3438, 0
        %v3636 = vsel %vm671, %v3439, 0
        %v3639 = vsel %vm671, %v3440, 0
        %v3642 = vsel %vm671, %v3441, 0
        %v3645 = vsel %vm671, %v3442, 0
        %v3648 = vsel %vm671, %v3443, 0
        %v3651 = vsel %vm671, %v3444, 0
        %v3654 = vsel %vm671, %v3445, 0
        %v3657 = vsel %vm671, %v3446, 0
        %v3660 = vsel %vm671, %v3447, 0
        %v3663 = vsel %vm925, %v3448, 0
        %3665 = vmatprep.subr.bf16.mxu0 0
        %3666 = vmatpush1.bf16.msra.mxu0 0
        %3667 = vmatprep.subr.bf16.mxu0 0
        %3668 = vmatpush1.bf16.msra.mxu0 0
        %3669 = vmatprep.subr.bf16.mxu0 0
        %3670 = vmatpush1.bf16.msra.mxu0 0
        %3671 = vmatprep.subr.bf16.mxu0 0
        %3672 = vmatpush1.bf16.msra.mxu0 0
        %3673 = vmatprep.subr.bf16.mxu0 0
        %3674 = vmatpush1.bf16.msra.mxu0 0
        %3675 = vmatprep.subr.bf16.mxu0 0
        %3676 = vmatpush1.bf16.msra.mxu0 0
        %3677 = vmatprep.subr.bf16.mxu0 0
        %3678 = vmatpush1.bf16.msra.mxu0 0
        %3679 = vmatprep.subr.bf16.mxu0 0
        %3680 = vmatpush1.bf16.msra.mxu0 %v3663
        %3681 = vmatprep.subr.bf16.mxu0 0
        %3682 = vmatpush2.bf16.msra.mxu0 0
        %3683 = vmatprep.subr.bf16.mxu0 0
        %3684 = vmatpush2.bf16.msra.mxu0 0
        %3685 = vmatprep.subr.bf16.mxu0 0
        %3686 = vmatpush2.bf16.msra.mxu0 0
        %3687 = vmatprep.subr.bf16.mxu0 0
        %3688 = vmatpush2.bf16.msra.mxu0 0
        %3689 = vmatprep.subr.bf16.mxu0 0
        %3690 = vmatpush2.bf16.msra.mxu0 0
        %3691 = vmatprep.subr.bf16.mxu0 0
        %3692 = vmatpush2.bf16.msra.mxu0 0
        %3693 = vmatprep.subr.bf16.mxu0 0
        %3694 = vmatpush2.bf16.msra.mxu0 0
        %3695 = vmatprep.subr.bf16.mxu0 0
        %3696 = vmatpush2.bf16.msra.mxu0 0
        %3697 = vmatprep.mubr.bf16.mxu0 0
        %3698 = vmatmul.mubr.bf16.gmra.mxu0 %v3615
        %v3699 = vpop.f32.mrf.mxu0
        %v3700 = vadd.f32 %v3488, %v3699
        %v3701 = vpop.f32.mrf.mxu0
        %v3702 = vpop.f32.mrf.mxu0
        %v3703 = vadd.f32 %v3491, %v3702
        %v3704 = vpop.f32.mrf.mxu0
        %3705 = vmatprep.mubr.bf16.mxu0 0
        %3706 = vmatmul.mubr.bf16.gmra.mxu0 %v3618
        %v3707 = vpop.f32.mrf.mxu0
        %v3708 = vadd.f32 %v3496, %v3707
        %v3709 = vpop.f32.mrf.mxu0
        %v3710 = vpop.f32.mrf.mxu0
        %v3711 = vadd.f32 %v3499, %v3710
        %v3712 = vpop.f32.mrf.mxu0
        %3713 = vmatprep.mubr.bf16.mxu0 0
        %3714 = vmatmul.mubr.bf16.gmra.mxu0 %v3621
        %v3715 = vpop.f32.mrf.mxu0
        %v3716 = vadd.f32 %v3504, %v3715
        %v3717 = vpop.f32.mrf.mxu0
        %v3718 = vpop.f32.mrf.mxu0
        %v3719 = vadd.f32 %v3507, %v3718
        %v3720 = vpop.f32.mrf.mxu0
        %3721 = vmatprep.mubr.bf16.mxu0 0
        %3722 = vmatmul.mubr.bf16.gmra.mxu0 %v3624
        %v3723 = vpop.f32.mrf.mxu0
        %v3724 = vadd.f32 %v3512, %v3723
        %v3725 = vpop.f32.mrf.mxu0
        %v3726 = vpop.f32.mrf.mxu0
        %v3727 = vadd.f32 %v3515, %v3726
        %v3728 = vpop.f32.mrf.mxu0
        %3729 = vmatprep.mubr.bf16.mxu0 0
        %3730 = vmatmul.mubr.bf16.gmra.mxu0 %v3627
        %v3731 = vpop.f32.mrf.mxu0
        %v3732 = vadd.f32 %v3520, %v3731
        %v3733 = vpop.f32.mrf.mxu0
        %v3734 = vpop.f32.mrf.mxu0
        %v3735 = vadd.f32 %v3523, %v3734
        %v3736 = vpop.f32.mrf.mxu0
        %3737 = vmatprep.mubr.bf16.mxu0 0
        %3738 = vmatmul.mubr.bf16.gmra.mxu0 %v3630
        %v3739 = vpop.f32.mrf.mxu0
        %v3740 = vadd.f32 %v3528, %v3739
        %v3741 = vpop.f32.mrf.mxu0
        %v3742 = vpop.f32.mrf.mxu0
        %v3743 = vadd.f32 %v3531, %v3742
        %v3744 = vpop.f32.mrf.mxu0
        %3745 = vmatprep.mubr.bf16.mxu0 0
        %3746 = vmatmul.mubr.bf16.gmra.mxu0 %v3633
        %v3747 = vpop.f32.mrf.mxu0
        %v3748 = vadd.f32 %v3536, %v3747
        %v3749 = vpop.f32.mrf.mxu0
        %v3750 = vpop.f32.mrf.mxu0
        %v3751 = vadd.f32 %v3539, %v3750
        %v3752 = vpop.f32.mrf.mxu0
        %3753 = vmatprep.mubr.bf16.mxu0 0
        %3754 = vmatmul.mubr.bf16.gmra.mxu0 %v3636
        %v3755 = vpop.f32.mrf.mxu0
        %v3756 = vadd.f32 %v3544, %v3755
        %v3757 = vpop.f32.mrf.mxu0
        %v3758 = vpop.f32.mrf.mxu0
        %v3759 = vadd.f32 %v3547, %v3758
        %v3760 = vpop.f32.mrf.mxu0
        %3761 = vmatprep.mubr.bf16.mxu0 0
        %3762 = vmatmul.mubr.bf16.gmra.mxu0 %v3639
        %v3763 = vpop.f32.mrf.mxu0
        %v3764 = vadd.f32 %v3552, %v3763
        %v3765 = vpop.f32.mrf.mxu0
        %v3766 = vpop.f32.mrf.mxu0
        %v3767 = vadd.f32 %v3555, %v3766
        %v3768 = vpop.f32.mrf.mxu0
        %3769 = vmatprep.mubr.bf16.mxu0 0
        %3770 = vmatmul.mubr.bf16.gmra.mxu0 %v3642
        %v3771 = vpop.f32.mrf.mxu0
        %v3772 = vadd.f32 %v3560, %v3771
        %v3773 = vpop.f32.mrf.mxu0
        %v3774 = vpop.f32.mrf.mxu0
        %v3775 = vadd.f32 %v3563, %v3774
        %v3776 = vpop.f32.mrf.mxu0
        %3777 = vmatprep.mubr.bf16.mxu0 0
        %3778 = vmatmul.mubr.bf16.gmra.mxu0 %v3645
        %v3779 = vpop.f32.mrf.mxu0
        %v3780 = vadd.f32 %v3568, %v3779
        %v3781 = vpop.f32.mrf.mxu0
        %v3782 = vpop.f32.mrf.mxu0
        %v3783 = vadd.f32 %v3571, %v3782
        %v3784 = vpop.f32.mrf.mxu0
        %3785 = vmatprep.mubr.bf16.mxu0 0
        %3786 = vmatmul.mubr.bf16.gmra.mxu0 %v3648
        %v3787 = vpop.f32.mrf.mxu0
        %v3788 = vadd.f32 %v3576, %v3787
        %v3789 = vpop.f32.mrf.mxu0
        %v3790 = vpop.f32.mrf.mxu0
        %v3791 = vadd.f32 %v3579, %v3790
        %v3792 = vpop.f32.mrf.mxu0
        %3793 = vmatprep.mubr.bf16.mxu0 0
        %3794 = vmatmul.mubr.bf16.gmra.mxu0 %v3651
        %v3795 = vpop.f32.mrf.mxu0
        %v3796 = vadd.f32 %v3584, %v3795
        %v3797 = vpop.f32.mrf.mxu0
        %v3798 = vpop.f32.mrf.mxu0
        %v3799 = vadd.f32 %v3587, %v3798
        %v3800 = vpop.f32.mrf.mxu0
        %3801 = vmatprep.mubr.bf16.mxu0 0
        %3802 = vmatmul.mubr.bf16.gmra.mxu0 %v3654
        %v3803 = vpop.f32.mrf.mxu0
        %v3804 = vadd.f32 %v3592, %v3803
        %v3805 = vpop.f32.mrf.mxu0
        %v3806 = vpop.f32.mrf.mxu0
        %v3807 = vadd.f32 %v3595, %v3806
        %v3808 = vpop.f32.mrf.mxu0
        %3809 = vmatprep.mubr.bf16.mxu0 0
        %3810 = vmatmul.mubr.bf16.gmra.mxu0 %v3657
        %v3811 = vpop.f32.mrf.mxu0
        %v3812 = vadd.f32 %v3600, %v3811
        %v3813 = vpop.f32.mrf.mxu0
        %v3814 = vpop.f32.mrf.mxu0
        %v3815 = vadd.f32 %v3603, %v3814
        %v3816 = vpop.f32.mrf.mxu0
        %3817 = vmatprep.mubr.bf16.mxu0 0
        %3818 = vmatmul.mubr.bf16.gmra.mxu0 %v3660
        %v3819 = vpop.f32.mrf.mxu0
        %v3820 = vadd.f32 %v3608, %v3819
        %v3821 = vpop.f32.mrf.mxu0
        %v3822 = vpop.f32.mrf.mxu0
        %v3823 = vadd.f32 %v3611, %v3822
        %v3824 = vpop.f32.mrf.mxu0
        %3825 = vdwg.mxu0
        %v3826 = vld [vmem:[%s7] sm:$0x1]
        %v3828 = vlaneseq
        %v3829 = vshrl.u32 %v3828, 7
        %v3830 = vsub.s32 0, %v3829
        %v3831 = vrot.slane %v3826, %v3830
        %v3833 = vadd.f32 %v3700, %v3831
        %v3834 = vadd.f32 %v3703, %v3831
        %v3835 = vadd.f32 %v3708, %v3831
        %v3836 = vadd.f32 %v3711, %v3831
        %v3837 = vadd.f32 %v3716, %v3831
        %v3838 = vadd.f32 %v3719, %v3831
        %v3839 = vadd.f32 %v3724, %v3831
        %v3840 = vadd.f32 %v3727, %v3831
        %v3841 = vadd.f32 %v3732, %v3831
        %v3842 = vadd.f32 %v3735, %v3831
        %v3843 = vadd.f32 %v3740, %v3831
        %v3844 = vadd.f32 %v3743, %v3831
        %v3845 = vadd.f32 %v3748, %v3831
        %v3846 = vadd.f32 %v3751, %v3831
        %v3847 = vadd.f32 %v3756, %v3831
        %v3848 = vadd.f32 %v3759, %v3831
        %v3849 = vadd.f32 %v3764, %v3831
        %v3850 = vadd.f32 %v3767, %v3831
        %v3851 = vadd.f32 %v3772, %v3831
        %v3852 = vadd.f32 %v3775, %v3831
        %v3853 = vadd.f32 %v3780, %v3831
        %v3854 = vadd.f32 %v3783, %v3831
        %v3855 = vadd.f32 %v3788, %v3831
        %v3856 = vadd.f32 %v3791, %v3831
        %v3857 = vadd.f32 %v3796, %v3831
        %v3858 = vadd.f32 %v3799, %v3831
        %v3859 = vadd.f32 %v3804, %v3831
        %v3860 = vadd.f32 %v3807, %v3831
        %v3861 = vadd.f32 %v3812, %v3831
        %v3862 = vadd.f32 %v3815, %v3831
        %v3863 = vadd.f32 %v3820, %v3831
        %v3864 = vadd.f32 %v3823, %v3831
        %v3865 = vmax.f32 %v3833, 0.0
        %v3866 = vmax.f32 %v3834, 0.0
        %v3867 = vmax.f32 %v3835, 0.0
        %v3868 = vmax.f32 %v3836, 0.0
        %v3869 = vmax.f32 %v3837, 0.0
        %v3870 = vmax.f32 %v3838, 0.0
        %v3871 = vmax.f32 %v3839, 0.0
        %v3872 = vmax.f32 %v3840, 0.0
        %v3873 = vmax.f32 %v3841, 0.0
        %v3874 = vmax.f32 %v3842, 0.0
        %v3875 = vmax.f32 %v3843, 0.0
        %v3876 = vmax.f32 %v3844, 0.0
        %v3877 = vmax.f32 %v3845, 0.0
        %v3878 = vmax.f32 %v3846, 0.0
        %v3879 = vmax.f32 %v3847, 0.0
        %v3880 = vmax.f32 %v3848, 0.0
        %v3881 = vmax.f32 %v3849, 0.0
        %v3882 = vmax.f32 %v3850, 0.0
        %v3883 = vmax.f32 %v3851, 0.0
        %v3884 = vmax.f32 %v3852, 0.0
        %v3885 = vmax.f32 %v3853, 0.0
        %v3886 = vmax.f32 %v3854, 0.0
        %v3887 = vmax.f32 %v3855, 0.0
        %v3888 = vmax.f32 %v3856, 0.0
        %v3889 = vmax.f32 %v3857, 0.0
        %v3890 = vmax.f32 %v3858, 0.0
        %v3891 = vmax.f32 %v3859, 0.0
        %v3892 = vmax.f32 %v3860, 0.0
        %v3893 = vmax.f32 %v3861, 0.0
        %v3894 = vmax.f32 %v3862, 0.0
        %v3895 = vmax.f32 %v3863, 0.0
        %v3896 = vmax.f32 %v3864, 0.0
        %3897 = vst [vmem:[%s298] sm:$0xff] %v3865
        %3898 = vst [vmem:[%s298 + $0x8] sm:$0xff] %v3866
        %3899 = vst [vmem:[%s298 + $0x10] sm:$0xff] %v3867
        %3900 = vst [vmem:[%s298 + $0x18] sm:$0xff] %v3868
        %3901 = vst [vmem:[%s298 + $0x20] sm:$0xff] %v3869
        %3902 = vst [vmem:[%s298 + $0x28] sm:$0xff] %v3870
        %3903 = vst [vmem:[%s298 + $0x30] sm:$0xff] %v3871
        %3904 = vst [vmem:[%s298 + $0x38] sm:$0xff] %v3872
        %3905 = vst [vmem:[%s298 + $0x40] sm:$0xff] %v3873
        %3906 = vst [vmem:[%s298 + $0x48] sm:$0xff] %v3874
        %3907 = vst [vmem:[%s298 + $0x50] sm:$0xff] %v3875
        %3908 = vst [vmem:[%s298 + $0x58] sm:$0xff] %v3876
        %3909 = vst [vmem:[%s298 + $0x60] sm:$0xff] %v3877
        %3910 = vst [vmem:[%s298 + $0x68] sm:$0xff] %v3878
        %3911 = vst [vmem:[%s298 + $0x70] sm:$0xff] %v3879
        %3912 = vst [vmem:[%s298 + $0x78] sm:$0xff] %v3880
        %3913 = vst [vmem:[%s298 + $0x80] sm:$0xff] %v3881
        %3914 = vst [vmem:[%s298 + $0x88] sm:$0xff] %v3882
        %3915 = vst [vmem:[%s298 + $0x90] sm:$0xff] %v3883
        %3916 = vst [vmem:[%s298 + $0x98] sm:$0xff] %v3884
        %3917 = vst [vmem:[%s298 + $0xa0] sm:$0xff] %v3885
        %3918 = vst [vmem:[%s298 + $0xa8] sm:$0xff] %v3886
        %3919 = vst [vmem:[%s298 + $0xb0] sm:$0xff] %v3887
        %3920 = vst [vmem:[%s298 + $0xb8] sm:$0xff] %v3888
        %3921 = vst [vmem:[%s298 + $0xc0] sm:$0xff] %v3889
        %3922 = vst [vmem:[%s298 + $0xc8] sm:$0xff] %v3890
        %3923 = vst [vmem:[%s298 + $0xd0] sm:$0xff] %v3891
        %3924 = vst [vmem:[%s298 + $0xd8] sm:$0xff] %v3892
        %3925 = vst [vmem:[%s298 + $0xe0] sm:$0xff] %v3893
        %3926 = vst [vmem:[%s298 + $0xe8] sm:$0xff] %v3894
        %3927 = vst [vmem:[%s298 + $0xf0] sm:$0xff] %v3895
        %3928 = vst [vmem:[%s298 + $0xf8] sm:$0xff] %v3896
        %s3929 = sand.u32 %s203, 1
        %s3930 = scalar_lea.sflag [#allocation4], %s3929
        %s3931 = sand.u32 %s203, 1
        %s3932 = smul.addr %s3931, 256
        %s3933 = scalar_lea.vmem [#allocation3], %s3932
        // Predicated region
        $region53: #{tpu_custom_call.1} parent=51 // pred_check
          %p3934 = pneg %p213
        $region54: #{tpu_custom_call.1} parent=51 // pred_check_branch
          %3936 = sbr.rel (%p3934) target = $region56
        $region55: #{tpu_custom_call.1} parent=51 // pred_region
          %s3938 = ssub.s32 4096, 4096
          %3939 = vsyncadd %s3930, %s3938
          %s3940 = smul.addr %s22, 32
          %s3941 = smul.addr %s3940, 128
          %s3942 = scalar_lea.hbm %s8, %s3941
          %s3943 = sshll.u32 %s3933, 4
          %s3944 = int_to_ptr.vmem [resolvable:$true] %s3943
          %3949 = dma.vmem_to_hbm [thread:$0]  %s3944, 4096, %s3942, %s3930, 128, 128, 8
        $region56: #{tpu_custom_call.1} parent=51 // pred_fallthru
          _
      $region52: #{tpu_custom_call.1} parent=5 // pred_fallthru
        _
      %p3950 = scmp.le.s32.totalorder 2, %s17
      // Predicated region
      $region57: #{tpu_custom_call.1} parent=5 // pred_check
        %p3951 = pneg %p3950
      $region58: #{tpu_custom_call.1} parent=5 // pred_check_branch
        %3953 = sbr.rel (%p3951) target = $region60
      $region59: #{tpu_custom_call.1} parent=5 // pred_region
        %s3954 = ssub.s32 %s17, 2
        // Predicated region
        $region61: #{tpu_custom_call.1} parent=59 // pred_check
          %p3955 = pneg %p219
        $region62: #{tpu_custom_call.1} parent=59 // pred_check_branch
          %3957 = sbr.rel (%p3955) target = $region64
        $region63: #{tpu_custom_call.1} parent=59 // pred_region
          %s3958 = sand.u32 %s204, 1
          %s3959 = scalar_lea.sflag [#allocation4], %s3958
          %s3960 = sand.u32 %s204, 1
          %s3961 = smul.addr %s3960, 256
          %s3962 = scalar_lea.vmem [#allocation3], %s3961
          %3963 = dma.done %s3959, 4096
        $region64: #{tpu_custom_call.1} parent=59 // pred_fallthru
          _
      $region60: #{tpu_custom_call.1} parent=5 // pred_fallthru
        _
    $region6: #{tpu_custom_call.1} parent=1 // loop_footer
      %s21 = sadd.s32 1, %s17
    $region7: #{tpu_custom_call.1} parent=1 // loop_footer_branch
      %16 = sbr.rel target = $region3
    $region8: #{tpu_custom_call.1} parent=1 // loop_exit
      _
    %3964 = vsyncpa [#allocation4], 1
    %s3965 = scalar_lea.sflag [#allocation4], 1
    %3966 = vsyncpa %s3965, 1

</llo_original>
